<compile_context>
chip_gen: v7x
topology: tpu7x:2x2x1
jax: 0.10.0
libtpu: 0.0.40
codegen_flags: <defaults>
</compile_context>

<pallas_src>
import functools
import math

import jax
import jax.numpy as jnp
from jax.experimental import pallas as pl
from jax.experimental.pallas import tpu as pltpu

LANE = 128


def _tile(dim, pref):
    """Largest tile size <= pref that evenly divides dim."""
    t = min(dim, pref)
    while dim % t:
        t -= 1
    return t


# ----------------------------------------------------------------------------
# fused RMSNorm + matmul:  y = (rmsnorm(x) * gamma) @ w
# ----------------------------------------------------------------------------
def _rmsnorm_matmul_kernel(x_ref, g_ref, w_ref, o_ref, *, eps):
    x = x_ref[...].astype(jnp.float32)                         # [tm, H]
    var = jnp.mean(x * x, axis=-1, keepdims=True)
    h = (x * jax.lax.rsqrt(var + eps) * g_ref[...]).astype(jnp.bfloat16)
    o_ref[...] = jnp.dot(h, w_ref[...],
                         preferred_element_type=jnp.float32).astype(o_ref.dtype)


def rmsnorm_matmul(x, gamma, w, *, eps):
    """x: [T, H] bf16, gamma: [1, H] f32, w: [H, N] bf16 -> [T, N] bf16."""
    T, H = x.shape
    N = w.shape[1]
    tm = _tile(T, 256)
    tn = _tile(N, 256)          # 256-multiples feed the v6e/v7x 256x256 MXU
    return pl.pallas_call(
        functools.partial(_rmsnorm_matmul_kernel, eps=eps),
        out_shape=jax.ShapeDtypeStruct((T, N), jnp.bfloat16),
        grid=(T // tm, N // tn),
        in_specs=[
            pl.BlockSpec((tm, H), lambda i, j: (i, 0)),
            pl.BlockSpec((1, H), lambda i, j: (0, 0)),
            pl.BlockSpec((H, tn), lambda i, j: (0, j)),
        ],
        out_specs=pl.BlockSpec((tm, tn), lambda i, j: (i, j)),
        compiler_params=pltpu.CompilerParams(
            dimension_semantics=("parallel", "parallel")),
    )(x, gamma, w)


# ----------------------------------------------------------------------------
# tiled matmul with fused residual add:  y = x @ w + res
# ----------------------------------------------------------------------------
def _matmul_residual_kernel(x_ref, w_ref, r_ref, o_ref, acc_ref):
    k = pl.program_id(2)

    @pl.when(k == 0)
    def _():
        acc_ref[...] = jnp.zeros_like(acc_ref)

    acc_ref[...] += jnp.dot(x_ref[...], w_ref[...],
                            preferred_element_type=jnp.float32)

    @pl.when(k == pl.num_programs(2) - 1)
    def _():
        o_ref[...] = (acc_ref[...] + r_ref[...].astype(jnp.float32)
                      ).astype(o_ref.dtype)


def matmul_residual(x, w, res):
    """x: [T, K] bf16, w: [K, N] bf16, res: [T, N] bf16 -> x@w + res (bf16)."""
    T, K = x.shape
    N = w.shape[1]
    tm = _tile(T, 256)
    tn = _tile(N, 256)
    tk = _tile(K, 512)
    return pl.pallas_call(
        _matmul_residual_kernel,
        out_shape=jax.ShapeDtypeStruct((T, N), jnp.bfloat16),
        grid=(T // tm, N // tn, K // tk),
        in_specs=[
            pl.BlockSpec((tm, tk), lambda i, j, k: (i, k)),
            pl.BlockSpec((tk, tn), lambda i, j, k: (k, j)),
            pl.BlockSpec((tm, tn), lambda i, j, k: (i, j)),
        ],
        out_specs=pl.BlockSpec((tm, tn), lambda i, j, k: (i, j)),
        scratch_shapes=[pltpu.VMEM((tm, tn), jnp.float32)],
        compiler_params=pltpu.CompilerParams(
            dimension_semantics=("parallel", "parallel", "arbitrary")),
    )(x, w, res)


# ----------------------------------------------------------------------------
# fused MLP block:  out = x + (silu(rmsnorm(x)@w1) * (rmsnorm(x)@w3)) @ w2
# Tiled over the intermediate dim I; the [T, I] activation never hits HBM.
# ----------------------------------------------------------------------------
def _mlp_kernel(x_ref, g_ref, w1_ref, w3_ref, w2_ref, o_ref, acc_ref, *, eps):
    it = pl.program_id(1)

    @pl.when(it == 0)
    def _():
        acc_ref[...] = jnp.zeros_like(acc_ref)

    x = x_ref[...].astype(jnp.float32)                         # [tm, H]
    var = jnp.mean(x * x, axis=-1, keepdims=True)
    h = (x * jax.lax.rsqrt(var + eps) * g_ref[...]).astype(jnp.bfloat16)

    gate = jnp.dot(h, w1_ref[...], preferred_element_type=jnp.float32)
    up = jnp.dot(h, w3_ref[...], preferred_element_type=jnp.float32)
    act = (gate * jax.nn.sigmoid(gate) * up).astype(jnp.bfloat16)   # SiLU * up
    acc_ref[...] += jnp.dot(act, w2_ref[...],
                            preferred_element_type=jnp.float32)

    @pl.when(it == pl.num_programs(1) - 1)
    def _():
        o_ref[...] = (acc_ref[...] + x).astype(o_ref.dtype)    # + residual


def fused_mlp(x, gamma, w1, w3, w2, *, eps):
    """x: [T, H] bf16 -> bf16 [T, H] with residual included."""
    T, H = x.shape
    I = w1.shape[1]
    tm = _tile(T, 256)
    # 128 here so the accumulation path is exercised at toy sizes; use >=512
    # for real InternLM2 shapes (and halve it on v7x's 64 MiB VMEM).
    ti = _tile(I, 128)
    return pl.pallas_call(
        functools.partial(_mlp_kernel, eps=eps),
        out_shape=jax.ShapeDtypeStruct((T, H), jnp.bfloat16),
        grid=(T // tm, I // ti),
        in_specs=[
            pl.BlockSpec((tm, H), lambda m, i: (m, 0)),
            pl.BlockSpec((1, H), lambda m, i: (0, 0)),
            pl.BlockSpec((H, ti), lambda m, i: (0, i)),
            pl.BlockSpec((H, ti), lambda m, i: (0, i)),
            pl.BlockSpec((ti, H), lambda m, i: (i, 0)),
        ],
        out_specs=pl.BlockSpec((tm, H), lambda m, i: (m, 0)),
        scratch_shapes=[pltpu.VMEM((tm, H), jnp.float32)],
        compiler_params=pltpu.CompilerParams(
            dimension_semantics=("parallel", "arbitrary")),
    )(x, gamma, w1, w3, w2)


# ----------------------------------------------------------------------------
# attention: RoPE + GQA causal softmax, one grid step per batch, consuming the
# packed qkv activation directly (no HBM transposes), lane-dense output.
# ----------------------------------------------------------------------------
def _attention_kernel(qkv_ref, cos_ref, sin_ref, o_ref, *,
                      num_heads, num_kv_heads, head_dim, scale):
    S = qkv_ref.shape[1]
    group = num_heads // num_kv_heads
    half = head_dim // 2
    cos = cos_ref[...]                                         # [S, HD] f32
    sin = sin_ref[...]

    def rope(v):                                               # [S, HD] f32
        v1 = v[:, :half]
        v2 = v[:, half:]
        # TODO(synk): pltpu.roll + a sign vector would push this onto the XLU;
        # concatenate is kept for robust lowering at head_dim=32.
        return v * cos + jnp.concatenate([-v2, v1], axis=-1) * sin

    qkv = qkv_ref[0].astype(jnp.float32)                       # [S, QKV]
    q_base = 0
    k_base = num_heads * head_dim
    v_base = (num_heads + num_kv_heads) * head_dim

    row = jax.lax.broadcasted_iota(jnp.int32, (S, S), 0)
    col = jax.lax.broadcasted_iota(jnp.int32, (S, S), 1)
    causal = col <= row

    outs = []
    for g in range(num_kv_heads):                # RoPE K once per KV head
        k = rope(qkv[:, k_base + g * head_dim:k_base + (g + 1) * head_dim])
        v = qkv[:, v_base + g * head_dim:v_base + (g + 1) * head_dim]
        k = k.astype(jnp.bfloat16)
        v = v.astype(jnp.bfloat16)
        for hq in range(group):
            h = g * group + hq                   # GQA: h // group == g
            q = rope(qkv[:, q_base + h * head_dim:q_base + (h + 1) * head_dim])
            s = jnp.dot(q.astype(jnp.bfloat16), k.T,
                        preferred_element_type=jnp.float32) * scale
            s = jnp.where(causal, s, jnp.float32(-1e30))
            m = jnp.max(s, axis=-1, keepdims=True)
            p = jnp.exp(s - m)
            denom = jnp.sum(p, axis=-1, keepdims=True)
            o = jnp.dot(p.astype(jnp.bfloat16), v,
                        preferred_element_type=jnp.float32)
            outs.append(o * pl.reciprocal(denom, approx=True))
    # single lane-dense [S, NH*HD] store
    o_ref[0] = jnp.concatenate(outs, axis=-1).astype(o_ref.dtype)


def attention(qkv, cos, sin, *, num_heads, num_kv_heads, head_dim):
    """qkv: [B, S, (NH + 2*NKV)*HD] bf16 -> [B, S, NH*HD] bf16."""
    B, S, QKV = qkv.shape
    out_dim = num_heads * head_dim
    scale = 1.0 / math.sqrt(head_dim)
    # TODO(synk): flash-style KV tiling (online softmax + causal block skip)
    # is needed once S*S exceeds VMEM; at toy prefill sizes the [S, S] score
    # matrix is tiny, so a single block per batch suffices.
    return pl.pallas_call(
        functools.partial(_attention_kernel, num_heads=num_heads,
                          num_kv_heads=num_kv_heads, head_dim=head_dim,
                          scale=scale),
        out_shape=jax.ShapeDtypeStruct((B, S, out_dim), jnp.bfloat16),
        grid=(B,),
        in_specs=[
            pl.BlockSpec((1, S, QKV), lambda b: (b, 0, 0)),
            pl.BlockSpec((S, head_dim), lambda b: (0, 0)),
            pl.BlockSpec((S, head_dim), lambda b: (0, 0)),
        ],
        out_specs=pl.BlockSpec((1, S, out_dim), lambda b: (b, 0, 0)),
        compiler_params=pltpu.CompilerParams(
            dimension_semantics=("parallel",)),
    )(qkv, cos, sin)


# ----------------------------------------------------------------------------
# standalone RMSNorm (final norm) and lane-padded v_head projection
# ----------------------------------------------------------------------------
def _rmsnorm_kernel(x_ref, g_ref, o_ref, *, eps):
    x = x_ref[...].astype(jnp.float32)
    var = jnp.mean(x * x, axis=-1, keepdims=True)
    o_ref[...] = (x * jax.lax.rsqrt(var + eps) * g_ref[...]).astype(o_ref.dtype)


def rmsnorm(x, gamma, *, eps):
    T, H = x.shape
    tm = _tile(T, 512)
    return pl.pallas_call(
        functools.partial(_rmsnorm_kernel, eps=eps),
        out_shape=jax.ShapeDtypeStruct((T, H), jnp.bfloat16),
        grid=(T // tm,),
        in_specs=[
            pl.BlockSpec((tm, H), lambda i: (i, 0)),
            pl.BlockSpec((1, H), lambda i: (0, 0)),
        ],
        out_specs=pl.BlockSpec((tm, H), lambda i: (i, 0)),
        compiler_params=pltpu.CompilerParams(
            dimension_semantics=("parallel",)),
    )(x, gamma)


def _vhead_kernel(x_ref, w_ref, o_ref):
    o_ref[...] = jnp.dot(x_ref[...], w_ref[...],
                         preferred_element_type=jnp.float32)


def vhead_logits(hidden, v_head):
    """hidden: [T, H] bf16, v_head: [H, 1] bf16 -> [T, 1] f32."""
    T, H = hidden.shape
    # Pad the single output column to a full 128-lane slab so stores are
    # unmasked lane-dense vst's; slice column 0 afterwards.
    w_pad = jnp.zeros((H, LANE), jnp.bfloat16).at[:, :1].set(v_head)
    tm = _tile(T, 512)
    out = pl.pallas_call(
        _vhead_kernel,
        out_shape=jax.ShapeDtypeStruct((T, LANE), jnp.float32),
        grid=(T // tm,),
        in_specs=[
            pl.BlockSpec((tm, H), lambda i: (i, 0)),
            pl.BlockSpec((H, LANE), lambda i: (0, 0)),
        ],
        out_specs=pl.BlockSpec((tm, LANE), lambda i: (i, 0)),
        compiler_params=pltpu.CompilerParams(
            dimension_semantics=("parallel",)),
    )(hidden, w_pad)
    return out[:, :1]


# ----------------------------------------------------------------------------
# Model config, deterministic parameter init, forward pass
# ----------------------------------------------------------------------------
CONFIG = dict(
    vocab_size=256,
    hidden_size=128,
    num_attention_heads=4,
    num_key_value_heads=2,
    intermediate_size=256,
    num_hidden_layers=2,
    rms_norm_eps=1e-6,
    rope_theta=10000.0,
)


def init_params(key, cfg):
    H = cfg["hidden_size"]
    I = cfg["intermediate_size"]
    NH = cfg["num_attention_heads"]
    NKV = cfg["num_key_value_heads"]
    HD = H // NH
    std = 0.02

    def nrm(k, shape):
        return (jax.random.normal(k, shape, dtype=jnp.float32) * std
                ).astype(jnp.bfloat16)

    keys = jax.random.split(key, 2 + 5 * cfg["num_hidden_layers"])
    params = {
        "tok_embeddings": nrm(keys[0], (cfg["vocab_size"], H)),
        "norm": jnp.ones((1, H), jnp.float32),
        "v_head": nrm(keys[1], (H, 1)),     # rowwise Linear(H, 1, bias=False)
        "layers": [],
    }
    for li in range(cfg["num_hidden_layers"]):
        kk = keys[2 + 5 * li: 2 + 5 * (li + 1)]
        params["layers"].append({
            "attention_norm": jnp.ones((1, H), jnp.float32),
            "ffn_norm": jnp.ones((1, H), jnp.float32),
            # packed output layout: [q (NH*HD) | k (NKV*HD) | v (NKV*HD)]
            "wqkv": nrm(kk[0], (H, (NH + 2 * NKV) * HD)),
            "wo": nrm(kk[1], (NH * HD, H)),
            "w1": nrm(kk[2], (H, I)),
            "w3": nrm(kk[3], (H, I)),
            "w2": nrm(kk[4], (I, H)),
        })
    return params


def rope_tables(positions, head_dim, theta):
    inv_freq = 1.0 / (theta ** (jnp.arange(0, head_dim, 2, dtype=jnp.float32)
                                / head_dim))
    freqs = positions.astype(jnp.float32)[:, None] * inv_freq[None, :]
    emb = jnp.concatenate([freqs, freqs], axis=-1)             # [S, HD]
    return jnp.cos(emb), jnp.sin(emb)


def internlm2_forward(params, input_ids, position_ids, cfg):
    """InternLM2ForRewardModel.forward -> hidden_states [B, S, H] (bf16)."""
    H = cfg["hidden_size"]
    NH = cfg["num_attention_heads"]
    NKV = cfg["num_key_value_heads"]
    HD = H // NH
    eps = cfg["rms_norm_eps"]

    B, S = input_ids.shape
    T = B * S

    # Embedding gather kept as glue (scalar-indexed gather).
    x = jnp.take(params["tok_embeddings"], input_ids, axis=0
                 ).reshape(T, H).astype(jnp.bfloat16)

    # All batch rows share positions in this prefill setup; use row 0.
    cos, sin = rope_tables(position_ids[0], HD, cfg["rope_theta"])

    for layer in params["layers"]:
        # --- attention block: rmsnorm+wqkv -> RoPE+causal attn -> wo+residual
        qkv = rmsnorm_matmul(x, layer["attention_norm"], layer["wqkv"], eps=eps)
        attn = attention(qkv.reshape(B, S, -1), cos, sin,
                         num_heads=NH, num_kv_heads=NKV, head_dim=HD)
        x = matmul_residual(attn.reshape(T, NH * HD), layer["wo"], x)

        # --- MLP block: rmsnorm + w1/w3 + SiLU gate + w2 + residual, fused
        x = fused_mlp(x, layer["ffn_norm"], layer["w1"], layer["w3"],
                      layer["w2"], eps=eps)

    hidden = rmsnorm(x, params["norm"], eps=eps)
    return hidden.reshape(B, S, H)


def get_logits(params, hidden_states):
    """InternLM2ForRewardModel.get_logits: v_head(hidden) -> [B, S, 1]."""
    B, S, H = hidden_states.shape
    logits = vhead_logits(hidden_states.reshape(B * S, H), params["v_head"])
    return logits.reshape(B, S, 1)


# ----------------------------------------------------------------------------
if __name__ == "__main__":
    cfg = CONFIG
    key = jax.random.PRNGKey(0)
    pkey, ikey = jax.random.split(key)

    params = init_params(pkey, cfg)

    B, S = 2, 16
    input_ids = jax.random.randint(ikey, (B, S), 0, cfg["vocab_size"],
                                   dtype=jnp.int32)
    position_ids = jnp.broadcast_to(jnp.arange(S, dtype=jnp.int32)[None, :],
                                    (B, S))
    # TODO(synk): past_key_values / attn_metadata (paged KV-cache decode path)
    # is not modeled; this implements the prefill forward only.

    fwd = jax.jit(functools.partial(internlm2_forward, cfg=cfg))
    hidden_states = fwd(params, input_ids, position_ids)
    logits = jax.jit(get_logits)(params, hidden_states)

    jax.block_until_ready(hidden_states)
    jax.block_until_ready(logits)

    assert hidden_states.shape == (B, S, cfg["hidden_size"])
    assert logits.shape == (B, S, 1)
    assert bool(jnp.all(jnp.isfinite(hidden_states.astype(jnp.float32))))
    assert bool(jnp.all(jnp.isfinite(logits)))
    print("KERNEL_OK")
</pallas_src>

<mosaic_0001>
module attributes {stable_mosaic.version = 11 : i64} {
  func.func @_rmsnorm_matmul_kernel(%arg0: i32, %arg1: i32, %arg2: memref<32x128xbf16, #tpu.memory_space<vmem>>, %arg3: memref<1x128xf32, #tpu.memory_space<vmem>>, %arg4: memref<128x256xbf16, #tpu.memory_space<vmem>>, %arg5: memref<32x256xbf16, #tpu.memory_space<vmem>>) attributes {dimension_semantics = [#tpu.dimension_semantics<parallel>, #tpu.dimension_semantics<parallel>], iteration_bounds = array<i64: 1, 1>, scalar_prefetch = 0 : i64, scratch_operands = 0 : i64, tpu.core_type = #tpu.core_type<tc>, window_params = [{transform_indices = @transform_0, window_bounds = array<i64: 32, 128>}, {pipeline_mode = #tpu.pipeline_mode<synchronous>, transform_indices = @transform_1, window_bounds = array<i64: 1, 128>}, {transform_indices = @transform_2, window_bounds = array<i64: 128, 256>}, {transform_indices = @transform_3, window_bounds = array<i64: 32, 256>}]} {
    %c0 = arith.constant 0 : index
    %c0_0 = arith.constant 0 : index
    %0 = vector.load %arg2[%c0, %c0_0] : memref<32x128xbf16, #tpu.memory_space<vmem>>, vector<32x128xbf16>
    %1 = arith.extf %0 : vector<32x128xbf16> to vector<32x128xf32>
    %2 = arith.mulf %1, %1 : vector<32x128xf32>
    %cst = arith.constant dense<0.000000e+00> : vector<32xf32>
    %3 = vector.multi_reduction <add>, %2, %cst [1] : vector<32x128xf32> to vector<32xf32>
    %4 = vector.shape_cast %3 : vector<32xf32> to vector<32x1xf32>
    %cst_1 = arith.constant 1.280000e+02 : f32
    %5 = vector.broadcast %cst_1 : f32 to vector<32x1xf32>
    %6 = arith.divf %4, %5 : vector<32x1xf32>
    %cst_2 = arith.constant 9.99999997E-7 : f32
    %7 = vector.broadcast %cst_2 : f32 to vector<32x1xf32>
    %8 = arith.addf %6, %7 : vector<32x1xf32>
    %9 = math.rsqrt %8 : vector<32x1xf32>
    %10 = vector.broadcast %9 : vector<32x1xf32> to vector<32x128xf32>
    %11 = arith.mulf %1, %10 : vector<32x128xf32>
    %c0_3 = arith.constant 0 : index
    %c0_4 = arith.constant 0 : index
    %12 = vector.load %arg3[%c0_3, %c0_4] : memref<1x128xf32, #tpu.memory_space<vmem>>, vector<1x128xf32>
    %13 = vector.broadcast %12 : vector<1x128xf32> to vector<32x128xf32>
    %14 = arith.mulf %11, %13 : vector<32x128xf32>
    %15 = arith.truncf %14 : vector<32x128xf32> to vector<32x128xbf16>
    %c0_5 = arith.constant 0 : index
    %c0_6 = arith.constant 0 : index
    %16 = vector.load %arg4[%c0_5, %c0_6] : memref<128x256xbf16, #tpu.memory_space<vmem>>, vector<128x256xbf16>
    %cst_7 = arith.constant dense<0.000000e+00> : vector<32x256xf32>
    %17 = tpu.matmul %15, %16, %cst_7 {dimension_numbers = #tpu.dot_dimension_numbers<[1], [0], [0], [1], [0, 0, 1, 1], [], []>} : vector<32x128xbf16>, vector<128x256xbf16>, vector<32x256xf32> -> vector<32x256xf32>
    %18 = arith.truncf %17 : vector<32x256xf32> to vector<32x256xbf16>
    %c0_8 = arith.constant 0 : index
    %c0_9 = arith.constant 0 : index
    %19 = vector.load %arg5[%c0_8, %c0_9] : memref<32x256xbf16, #tpu.memory_space<vmem>>, vector<32x256xbf16>
    tpu.vector_store %arg5[%c0_8, %c0_9], %18 {strides = array<i32>} : memref<32x256xbf16, #tpu.memory_space<vmem>>, vector<32x256xbf16>,
    return
  }
  func.func @transform_0(%arg0: i32, %arg1: i32) -> (i32, i32) {
    %c0_i32 = arith.constant 0 : i32
    %c0_i32_0 = arith.constant 0 : i32
    return %arg0, %c0_i32 : i32, i32
  }
  func.func @transform_1(%arg0: i32, %arg1: i32) -> (i32, i32) {
    %c0_i32 = arith.constant 0 : i32
    %c0_i32_0 = arith.constant 0 : i32
    %c0_i32_1 = arith.constant 0 : i32
    return %c0_i32, %c0_i32_0 : i32, i32
  }
  func.func @transform_2(%arg0: i32, %arg1: i32) -> (i32, i32) {
    %c0_i32 = arith.constant 0 : i32
    %c0_i32_0 = arith.constant 0 : i32
    return %c0_i32, %arg1 : i32, i32
  }
  func.func @transform_3(%arg0: i32, %arg1: i32) -> (i32, i32) {
    %c0_i32 = arith.constant 0 : i32
    return %arg0, %arg1 : i32, i32
  }
}

module attributes {stable_mosaic.version = 11 : i64} {
  func.func @_attention_kernel(%arg0: i32, %arg1: memref<1x16x256xbf16, #tpu.memory_space<vmem>>, %arg2: memref<16x32xf32, #tpu.memory_space<vmem>>, %arg3: memref<16x32xf32, #tpu.memory_space<vmem>>, %arg4: memref<1x16x128xbf16, #tpu.memory_space<vmem>>) attributes {dimension_semantics = [#tpu.dimension_semantics<parallel>], iteration_bounds = array<i64: 2>, scalar_prefetch = 0 : i64, scratch_operands = 0 : i64, tpu.core_type = #tpu.core_type<tc>, window_params = [{transform_indices = @transform_0, window_bounds = array<i64: 1, 16, 256>}, {pipeline_mode = #tpu.pipeline_mode<synchronous>, transform_indices = @transform_1, window_bounds = array<i64: 16, 32>}, {pipeline_mode = #tpu.pipeline_mode<synchronous>, transform_indices = @transform_2, window_bounds = array<i64: 16, 32>}, {transform_indices = @transform_3, window_bounds = array<i64: 1, 16, 128>}]} {
    %c0 = arith.constant 0 : index
    %c0_0 = arith.constant 0 : index
    %0 = vector.load %arg2[%c0, %c0_0] : memref<16x32xf32, #tpu.memory_space<vmem>>, vector<16x32xf32>
    %c0_1 = arith.constant 0 : index
    %c0_2 = arith.constant 0 : index
    %1 = vector.load %arg3[%c0_1, %c0_2] : memref<16x32xf32, #tpu.memory_space<vmem>>, vector<16x32xf32>
    %c0_3 = arith.constant 0 : index
    %c0_4 = arith.constant 0 : index
    %c0_5 = arith.constant 0 : index
    %2 = vector.load %arg1[%c0_3, %c0_4, %c0_5] : memref<1x16x256xbf16, #tpu.memory_space<vmem>>, vector<1x16x256xbf16>
    %3 = vector.shape_cast %2 : vector<1x16x256xbf16> to vector<16x256xbf16>
    %4 = arith.extf %3 : vector<16x256xbf16> to vector<16x256xf32>
    %5 = tpu.iota {dimensions = array<i32: 0>} : vector<16x16xi32>
    %6 = tpu.iota {dimensions = array<i32: 1>} : vector<16x16xi32>
    %7 = arith.cmpi sle, %6, %5 : vector<16x16xi32>
    %8 = vector.extract_strided_slice %4 {offsets = [0, 128], sizes = [16, 32], strides = [1, 1]} : vector<16x256xf32> to vector<16x32xf32>
    %9 = vector.extract_strided_slice %8 {offsets = [0, 0], sizes = [16, 16], strides = [1, 1]} : vector<16x32xf32> to vector<16x16xf32>
    %10 = vector.extract_strided_slice %8 {offsets = [0, 16], sizes = [16, 16], strides = [1, 1]} : vector<16x32xf32> to vector<16x16xf32>
    %11 = arith.mulf %8, %0 : vector<16x32xf32>
    %cst = arith.constant 0.000000e+00 : f32
    %12 = vector.broadcast %cst : f32 to vector<16x16xf32>
    %13 = arith.subf %12, %10 : vector<16x16xf32>
    %14 = tpu.concatenate %13, %9 in 1 : vector<16x16xf32>, vector<16x16xf32> -> vector<16x32xf32>
    %15 = arith.mulf %14, %1 : vector<16x32xf32>
    %16 = arith.addf %11, %15 : vector<16x32xf32>
    %17 = vector.extract_strided_slice %4 {offsets = [0, 192], sizes = [16, 32], strides = [1, 1]} : vector<16x256xf32> to vector<16x32xf32>
    %18 = arith.truncf %16 : vector<16x32xf32> to vector<16x32xbf16>
    %19 = arith.truncf %17 : vector<16x32xf32> to vector<16x32xbf16>
    %20 = vector.extract_strided_slice %4 {offsets = [0, 0], sizes = [16, 32], strides = [1, 1]} : vector<16x256xf32> to vector<16x32xf32>
    %21 = vector.extract_strided_slice %20 {offsets = [0, 0], sizes = [16, 16], strides = [1, 1]} : vector<16x32xf32> to vector<16x16xf32>
    %22 = vector.extract_strided_slice %20 {offsets = [0, 16], sizes = [16, 16], strides = [1, 1]} : vector<16x32xf32> to vector<16x16xf32>
    %23 = arith.mulf %20, %0 : vector<16x32xf32>
    %cst_6 = arith.constant 0.000000e+00 : f32
    %24 = vector.broadcast %cst_6 : f32 to vector<16x16xf32>
    %25 = arith.subf %24, %22 : vector<16x16xf32>
    %26 = tpu.concatenate %25, %21 in 1 : vector<16x16xf32>, vector<16x16xf32> -> vector<16x32xf32>
    %27 = arith.mulf %26, %1 : vector<16x32xf32>
    %28 = arith.addf %23, %27 : vector<16x32xf32>
    %29 = arith.truncf %28 : vector<16x32xf32> to vector<16x32xbf16>
    %30 = tpu.transpose %18, [1, 0] : vector<16x32xbf16> -> vector<32x16xbf16>
    %cst_7 = arith.constant dense<0.000000e+00> : vector<16x16xf32>
    %31 = tpu.matmul %29, %30, %cst_7 {dimension_numbers = #tpu.dot_dimension_numbers<[1], [0], [0], [1], [0, 0, 1, 1], [], []>} : vector<16x32xbf16>, vector<32x16xbf16>, vector<16x16xf32> -> vector<16x16xf32>
    %cst_8 = arith.constant 0.176776692 : f32
    %32 = vector.broadcast %cst_8 : f32 to vector<16x16xf32>
    %33 = arith.mulf %31, %32 : vector<16x16xf32>
    %cst_9 = arith.constant -1.000000e+30 : f32
    %34 = vector.broadcast %cst_9 : f32 to vector<16x16xf32>
    %35 = arith.select %7, %33, %34 : vector<16x16xi1>, vector<16x16xf32>
    %cst_10 = arith.constant dense<0xFF800000> : vector<16xf32>
    %36 = vector.multi_reduction <maximumf>, %35, %cst_10 [1] : vector<16x16xf32> to vector<16xf32>
    %37 = vector.shape_cast %36 : vector<16xf32> to vector<16x1xf32>
    %38 = vector.broadcast %37 : vector<16x1xf32> to vector<16x16xf32>
    %39 = arith.subf %35, %38 : vector<16x16xf32>
    %40 = math.exp %39 : vector<16x16xf32>
    %cst_11 = arith.constant dense<0.000000e+00> : vector<16xf32>
    %41 = vector.multi_reduction <add>, %40, %cst_11 [1] : vector<16x16xf32> to vector<16xf32>
    %42 = vector.shape_cast %41 : vector<16xf32> to vector<16x1xf32>
    %43 = arith.truncf %40 : vector<16x16xf32> to vector<16x16xbf16>
    %cst_12 = arith.constant dense<0.000000e+00> : vector<16x32xf32>
    %44 = tpu.matmul %43, %19, %cst_12 {dimension_numbers = #tpu.dot_dimension_numbers<[1], [0], [0], [1], [0, 0, 1, 1], [], []>} : vector<16x16xbf16>, vector<16x32xbf16>, vector<16x32xf32> -> vector<16x32xf32>
    %45 = tpu.reciprocal %42 {approx = true} : vector<16x1xf32> -> vector<16x1xf32>
    %46 = vector.broadcast %45 : vector<16x1xf32> to vector<16x32xf32>
    %47 = arith.mulf %44, %46 : vector<16x32xf32>
    %48 = vector.extract_strided_slice %4 {offsets = [0, 32], sizes = [16, 32], strides = [1, 1]} : vector<16x256xf32> to vector<16x32xf32>
    %49 = vector.extract_strided_slice %48 {offsets = [0, 0], sizes = [16, 16], strides = [1, 1]} : vector<16x32xf32> to vector<16x16xf32>
    %50 = vector.extract_strided_slice %48 {offsets = [0, 16], sizes = [16, 16], strides = [1, 1]} : vector<16x32xf32> to vector<16x16xf32>
    %51 = arith.mulf %48, %0 : vector<16x32xf32>
    %cst_13 = arith.constant 0.000000e+00 : f32
    %52 = vector.broadcast %cst_13 : f32 to vector<16x16xf32>
    %53 = arith.subf %52, %50 : vector<16x16xf32>
    %54 = tpu.concatenate %53, %49 in 1 : vector<16x16xf32>, vector<16x16xf32> -> vector<16x32xf32>
    %55 = arith.mulf %54, %1 : vector<16x32xf32>
    %56 = arith.addf %51, %55 : vector<16x32xf32>
    %57 = arith.truncf %56 : vector<16x32xf32> to vector<16x32xbf16>
    %58 = tpu.transpose %18, [1, 0] : vector<16x32xbf16> -> vector<32x16xbf16>
    %cst_14 = arith.constant dense<0.000000e+00> : vector<16x16xf32>
    %59 = tpu.matmul %57, %58, %cst_14 {dimension_numbers = #tpu.dot_dimension_numbers<[1], [0], [0], [1], [0, 0, 1, 1], [], []>} : vector<16x32xbf16>, vector<32x16xbf16>, vector<16x16xf32> -> vector<16x16xf32>
    %cst_15 = arith.constant 0.176776692 : f32
    %60 = vector.broadcast %cst_15 : f32 to vector<16x16xf32>
    %61 = arith.mulf %59, %60 : vector<16x16xf32>
    %cst_16 = arith.constant -1.000000e+30 : f32
    %62 = vector.broadcast %cst_16 : f32 to vector<16x16xf32>
    %63 = arith.select %7, %61, %62 : vector<16x16xi1>, vector<16x16xf32>
    %cst_17 = arith.constant dense<0xFF800000> : vector<16xf32>
    %64 = vector.multi_reduction <maximumf>, %63, %cst_17 [1] : vector<16x16xf32> to vector<16xf32>
    %65 = vector.shape_cast %64 : vector<16xf32> to vector<16x1xf32>
    %66 = vector.broadcast %65 : vector<16x1xf32> to vector<16x16xf32>
    %67 = arith.subf %63, %66 : vector<16x16xf32>
    %68 = math.exp %67 : vector<16x16xf32>
    %cst_18 = arith.constant dense<0.000000e+00> : vector<16xf32>
    %69 = vector.multi_reduction <add>, %68, %cst_18 [1] : vector<16x16xf32> to vector<16xf32>
    %70 = vector.shape_cast %69 : vector<16xf32> to vector<16x1xf32>
    %71 = arith.truncf %68 : vector<16x16xf32> to vector<16x16xbf16>
    %cst_19 = arith.constant dense<0.000000e+00> : vector<16x32xf32>
    %72 = tpu.matmul %71, %19, %cst_19 {dimension_numbers = #tpu.dot_dimension_numbers<[1], [0], [0], [1], [0, 0, 1, 1], [], []>} : vector<16x16xbf16>, vector<16x32xbf16>, vector<16x32xf32> -> vector<16x32xf32>
    %73 = tpu.reciprocal %70 {approx = true} : vector<16x1xf32> -> vector<16x1xf32>
    %74 = vector.broadcast %73 : vector<16x1xf32> to vector<16x32xf32>
    %75 = arith.mulf %72, %74 : vector<16x32xf32>
    %76 = vector.extract_strided_slice %4 {offsets = [0, 160], sizes = [16, 32], strides = [1, 1]} : vector<16x256xf32> to vector<16x32xf32>
    %77 = vector.extract_strided_slice %76 {offsets = [0, 0], sizes = [16, 16], strides = [1, 1]} : vector<16x32xf32> to vector<16x16xf32>
    %78 = vector.extract_strided_slice %76 {offsets = [0, 16], sizes = [16, 16], strides = [1, 1]} : vector<16x32xf32> to vector<16x16xf32>
    %79 = arith.mulf %76, %0 : vector<16x32xf32>
    %cst_20 = arith.constant 0.000000e+00 : f32
    %80 = vector.broadcast %cst_20 : f32 to vector<16x16xf32>
    %81 = arith.subf %80, %78 : vector<16x16xf32>
    %82 = tpu.concatenate %81, %77 in 1 : vector<16x16xf32>, vector<16x16xf32> -> vector<16x32xf32>
    %83 = arith.mulf %82, %1 : vector<16x32xf32>
    %84 = arith.addf %79, %83 : vector<16x32xf32>
    %85 = vector.extract_strided_slice %4 {offsets = [0, 224], sizes = [16, 32], strides = [1, 1]} : vector<16x256xf32> to vector<16x32xf32>
    %86 = arith.truncf %84 : vector<16x32xf32> to vector<16x32xbf16>
    %87 = arith.truncf %85 : vector<16x32xf32> to vector<16x32xbf16>
    %88 = vector.extract_strided_slice %4 {offsets = [0, 64], sizes = [16, 32], strides = [1, 1]} : vector<16x256xf32> to vector<16x32xf32>
    %89 = vector.extract_strided_slice %88 {offsets = [0, 0], sizes = [16, 16], strides = [1, 1]} : vector<16x32xf32> to vector<16x16xf32>
    %90 = vector.extract_strided_slice %88 {offsets = [0, 16], sizes = [16, 16], strides = [1, 1]} : vector<16x32xf32> to vector<16x16xf32>
    %91 = arith.mulf %88, %0 : vector<16x32xf32>
    %cst_21 = arith.constant 0.000000e+00 : f32
    %92 = vector.broadcast %cst_21 : f32 to vector<16x16xf32>
    %93 = arith.subf %92, %90 : vector<16x16xf32>
    %94 = tpu.concatenate %93, %89 in 1 : vector<16x16xf32>, vector<16x16xf32> -> vector<16x32xf32>
    %95 = arith.mulf %94, %1 : vector<16x32xf32>
    %96 = arith.addf %91, %95 : vector<16x32xf32>
    %97 = arith.truncf %96 : vector<16x32xf32> to vector<16x32xbf16>
    %98 = tpu.transpose %86, [1, 0] : vector<16x32xbf16> -> vector<32x16xbf16>
    %cst_22 = arith.constant dense<0.000000e+00> : vector<16x16xf32>
    %99 = tpu.matmul %97, %98, %cst_22 {dimension_numbers = #tpu.dot_dimension_numbers<[1], [0], [0], [1], [0, 0, 1, 1], [], []>} : vector<16x32xbf16>, vector<32x16xbf16>, vector<16x16xf32> -> vector<16x16xf32>
    %cst_23 = arith.constant 0.176776692 : f32
    %100 = vector.broadcast %cst_23 : f32 to vector<16x16xf32>
    %101 = arith.mulf %99, %100 : vector<16x16xf32>
    %cst_24 = arith.constant -1.000000e+30 : f32
    %102 = vector.broadcast %cst_24 : f32 to vector<16x16xf32>
    %103 = arith.select %7, %101, %102 : vector<16x16xi1>, vector<16x16xf32>
    %cst_25 = arith.constant dense<0xFF800000> : vector<16xf32>
    %104 = vector.multi_reduction <maximumf>, %103, %cst_25 [1] : vector<16x16xf32> to vector<16xf32>
    %105 = vector.shape_cast %104 : vector<16xf32> to vector<16x1xf32>
    %106 = vector.broadcast %105 : vector<16x1xf32> to vector<16x16xf32>
    %107 = arith.subf %103, %106 : vector<16x16xf32>
    %108 = math.exp %107 : vector<16x16xf32>
    %cst_26 = arith.constant dense<0.000000e+00> : vector<16xf32>
    %109 = vector.multi_reduction <add>, %108, %cst_26 [1] : vector<16x16xf32> to vector<16xf32>
    %110 = vector.shape_cast %109 : vector<16xf32> to vector<16x1xf32>
    %111 = arith.truncf %108 : vector<16x16xf32> to vector<16x16xbf16>
    %cst_27 = arith.constant dense<0.000000e+00> : vector<16x32xf32>
    %112 = tpu.matmul %111, %87, %cst_27 {dimension_numbers = #tpu.dot_dimension_numbers<[1], [0], [0], [1], [0, 0, 1, 1], [], []>} : vector<16x16xbf16>, vector<16x32xbf16>, vector<16x32xf32> -> vector<16x32xf32>
    %113 = tpu.reciprocal %110 {approx = true} : vector<16x1xf32> -> vector<16x1xf32>
    %114 = vector.broadcast %113 : vector<16x1xf32> to vector<16x32xf32>
    %115 = arith.mulf %112, %114 : vector<16x32xf32>
    %116 = vector.extract_strided_slice %4 {offsets = [0, 96], sizes = [16, 32], strides = [1, 1]} : vector<16x256xf32> to vector<16x32xf32>
    %117 = vector.extract_strided_slice %116 {offsets = [0, 0], sizes = [16, 16], strides = [1, 1]} : vector<16x32xf32> to vector<16x16xf32>
    %118 = vector.extract_strided_slice %116 {offsets = [0, 16], sizes = [16, 16], strides = [1, 1]} : vector<16x32xf32> to vector<16x16xf32>
    %119 = arith.mulf %116, %0 : vector<16x32xf32>
    %cst_28 = arith.constant 0.000000e+00 : f32
    %120 = vector.broadcast %cst_28 : f32 to vector<16x16xf32>
    %121 = arith.subf %120, %118 : vector<16x16xf32>
    %122 = tpu.concatenate %121, %117 in 1 : vector<16x16xf32>, vector<16x16xf32> -> vector<16x32xf32>
    %123 = arith.mulf %122, %1 : vector<16x32xf32>
    %124 = arith.addf %119, %123 : vector<16x32xf32>
    %125 = arith.truncf %124 : vector<16x32xf32> to vector<16x32xbf16>
    %126 = tpu.transpose %86, [1, 0] : vector<16x32xbf16> -> vector<32x16xbf16>
    %cst_29 = arith.constant dense<0.000000e+00> : vector<16x16xf32>
    %127 = tpu.matmul %125, %126, %cst_29 {dimension_numbers = #tpu.dot_dimension_numbers<[1], [0], [0], [1], [0, 0, 1, 1], [], []>} : vector<16x32xbf16>, vector<32x16xbf16>, vector<16x16xf32> -> vector<16x16xf32>
    %cst_30 = arith.constant 0.176776692 : f32
    %128 = vector.broadcast %cst_30 : f32 to vector<16x16xf32>
    %129 = arith.mulf %127, %128 : vector<16x16xf32>
    %cst_31 = arith.constant -1.000000e+30 : f32
    %130 = vector.broadcast %cst_31 : f32 to vector<16x16xf32>
    %131 = arith.select %7, %129, %130 : vector<16x16xi1>, vector<16x16xf32>
    %cst_32 = arith.constant dense<0xFF800000> : vector<16xf32>
    %132 = vector.multi_reduction <maximumf>, %131, %cst_32 [1] : vector<16x16xf32> to vector<16xf32>
    %133 = vector.shape_cast %132 : vector<16xf32> to vector<16x1xf32>
    %134 = vector.broadcast %133 : vector<16x1xf32> to vector<16x16xf32>
    %135 = arith.subf %131, %134 : vector<16x16xf32>
    %136 = math.exp %135 : vector<16x16xf32>
    %cst_33 = arith.constant dense<0.000000e+00> : vector<16xf32>
    %137 = vector.multi_reduction <add>, %136, %cst_33 [1] : vector<16x16xf32> to vector<16xf32>
    %138 = vector.shape_cast %137 : vector<16xf32> to vector<16x1xf32>
    %139 = arith.truncf %136 : vector<16x16xf32> to vector<16x16xbf16>
    %cst_34 = arith.constant dense<0.000000e+00> : vector<16x32xf32>
    %140 = tpu.matmul %139, %87, %cst_34 {dimension_numbers = #tpu.dot_dimension_numbers<[1], [0], [0], [1], [0, 0, 1, 1], [], []>} : vector<16x16xbf16>, vector<16x32xbf16>, vector<16x32xf32> -> vector<16x32xf32>
    %141 = tpu.reciprocal %138 {approx = true} : vector<16x1xf32> -> vector<16x1xf32>
    %142 = vector.broadcast %141 : vector<16x1xf32> to vector<16x32xf32>
    %143 = arith.mulf %140, %142 : vector<16x32xf32>
    %144 = tpu.concatenate %47, %75, %115, %143 in 1 : vector<16x32xf32>, vector<16x32xf32>, vector<16x32xf32>, vector<16x32xf32> -> vector<16x128xf32>
    %145 = arith.truncf %144 : vector<16x128xf32> to vector<16x128xbf16>
    %c0_35 = arith.constant 0 : index
    %c0_36 = arith.constant 0 : index
    %c0_37 = arith.constant 0 : index
    %146 = vector.load %arg4[%c0_35, %c0_36, %c0_37] : memref<1x16x128xbf16, #tpu.memory_space<vmem>>, vector<1x16x128xbf16>
    %147 = vector.shape_cast %146 : vector<1x16x128xbf16> to vector<16x128xbf16>
    %148 = vector.shape_cast %145 : vector<16x128xbf16> to vector<1x16x128xbf16>
    tpu.vector_store %arg4[%c0_35, %c0_36, %c0_37], %148 {strides = array<i32>} : memref<1x16x128xbf16, #tpu.memory_space<vmem>>, vector<1x16x128xbf16>,
    return
  }
  func.func @transform_0(%arg0: i32) -> (i32, i32, i32) {
    %c0_i32 = arith.constant 0 : i32
    %c0_i32_0 = arith.constant 0 : i32
    %c0_i32_1 = arith.constant 0 : i32
    return %arg0, %c0_i32, %c0_i32_0 : i32, i32, i32
  }
  func.func @transform_1(%arg0: i32) -> (i32, i32) {
    %c0_i32 = arith.constant 0 : i32
    %c0_i32_0 = arith.constant 0 : i32
    %c0_i32_1 = arith.constant 0 : i32
    return %c0_i32, %c0_i32_0 : i32, i32
  }
  func.func @transform_2(%arg0: i32) -> (i32, i32) {
    %c0_i32 = arith.constant 0 : i32
    %c0_i32_0 = arith.constant 0 : i32
    %c0_i32_1 = arith.constant 0 : i32
    return %c0_i32, %c0_i32_0 : i32, i32
  }
  func.func @transform_3(%arg0: i32) -> (i32, i32, i32) {
    %c0_i32 = arith.constant 0 : i32
    %c0_i32_0 = arith.constant 0 : i32
    %c0_i32_1 = arith.constant 0 : i32
    return %arg0, %c0_i32, %c0_i32_0 : i32, i32, i32
  }
}

module attributes {stable_mosaic.version = 11 : i64} {
  func.func @_matmul_residual_kernel(%arg0: i32, %arg1: i32, %arg2: i32, %arg3: memref<32x128xbf16, #tpu.memory_space<vmem>>, %arg4: memref<128x128xbf16, #tpu.memory_space<vmem>>, %arg5: memref<32x128xbf16, #tpu.memory_space<vmem>>, %arg6: memref<32x128xbf16, #tpu.memory_space<vmem>>, %arg7: memref<32x128xf32, #tpu.memory_space<vmem>>) attributes {dimension_semantics = [#tpu.dimension_semantics<parallel>, #tpu.dimension_semantics<parallel>, #tpu.dimension_semantics<arbitrary>], iteration_bounds = array<i64: 1, 1, 1>, scalar_prefetch = 0 : i64, scratch_operands = 1 : i64, tpu.core_type = #tpu.core_type<tc>, window_params = [{transform_indices = @transform_0, window_bounds = array<i64: 32, 128>}, {transform_indices = @transform_1, window_bounds = array<i64: 128, 128>}, {transform_indices = @transform_2, window_bounds = array<i64: 32, 128>}, {transform_indices = @transform_3, window_bounds = array<i64: 32, 128>}]} {
    %c0_i32 = arith.constant 0 : i32
    %0 = arith.cmpi eq, %arg2, %c0_i32 : i32
    %1 = arith.extui %0 : i1 to i32
    %c0_i32_0 = arith.constant 0 : i32
    %2 = arith.cmpi ne, %1, %c0_i32_0 : i32
    scf.if %2 {
      %cst_10 = arith.constant 0.000000e+00 : f32
      %12 = vector.broadcast %cst_10 : f32 to vector<32x128xf32>
      %c0_11 = arith.constant 0 : index
      %c0_12 = arith.constant 0 : index
      %13 = vector.load %arg7[%c0_11, %c0_12] : memref<32x128xf32, #tpu.memory_space<vmem>>, vector<32x128xf32>
      tpu.vector_store %arg7[%c0_11, %c0_12], %12 {strides = array<i32>} : memref<32x128xf32, #tpu.memory_space<vmem>>, vector<32x128xf32>,
    } else {
    }
    %c0 = arith.constant 0 : index
    %c0_1 = arith.constant 0 : index
    %3 = vector.load %arg7[%c0, %c0_1] : memref<32x128xf32, #tpu.memory_space<vmem>>, vector<32x128xf32>
    %c0_2 = arith.constant 0 : index
    %c0_3 = arith.constant 0 : index
    %4 = vector.load %arg3[%c0_2, %c0_3] : memref<32x128xbf16, #tpu.memory_space<vmem>>, vector<32x128xbf16>
    %c0_4 = arith.constant 0 : index
    %c0_5 = arith.constant 0 : index
    %5 = vector.load %arg4[%c0_4, %c0_5] : memref<128x128xbf16, #tpu.memory_space<vmem>>, vector<128x128xbf16>
    %cst = arith.constant dense<0.000000e+00> : vector<32x128xf32>
    %6 = tpu.matmul %4, %5, %cst {dimension_numbers = #tpu.dot_dimension_numbers<[1], [0], [0], [1], [0, 0, 1, 1], [], []>} : vector<32x128xbf16>, vector<128x128xbf16>, vector<32x128xf32> -> vector<32x128xf32>
    %7 = arith.addf %3, %6 : vector<32x128xf32>
    %c0_6 = arith.constant 0 : index
    %c0_7 = arith.constant 0 : index
    %8 = vector.load %arg7[%c0_6, %c0_7] : memref<32x128xf32, #tpu.memory_space<vmem>>, vector<32x128xf32>
    tpu.vector_store %arg7[%c0_6, %c0_7], %7 {strides = array<i32>} : memref<32x128xf32, #tpu.memory_space<vmem>>, vector<32x128xf32>,
    %c0_i32_8 = arith.constant 0 : i32
    %9 = arith.cmpi eq, %arg2, %c0_i32_8 : i32
    %10 = arith.extui %9 : i1 to i32
    %c0_i32_9 = arith.constant 0 : i32
    %11 = arith.cmpi ne, %10, %c0_i32_9 : i32
    scf.if %11 {
      %c0_10 = arith.constant 0 : index
      %c0_11 = arith.constant 0 : index
      %12 = vector.load %arg7[%c0_10, %c0_11] : memref<32x128xf32, #tpu.memory_space<vmem>>, vector<32x128xf32>
      %c0_12 = arith.constant 0 : index
      %c0_13 = arith.constant 0 : index
      %13 = vector.load %arg5[%c0_12, %c0_13] : memref<32x128xbf16, #tpu.memory_space<vmem>>, vector<32x128xbf16>
      %14 = arith.extf %13 : vector<32x128xbf16> to vector<32x128xf32>
      %15 = arith.addf %12, %14 : vector<32x128xf32>
      %16 = arith.truncf %15 : vector<32x128xf32> to vector<32x128xbf16>
      %c0_14 = arith.constant 0 : index
      %c0_15 = arith.constant 0 : index
      %17 = vector.load %arg6[%c0_14, %c0_15] : memref<32x128xbf16, #tpu.memory_space<vmem>>, vector<32x128xbf16>
      tpu.vector_store %arg6[%c0_14, %c0_15], %16 {strides = array<i32>} : memref<32x128xbf16, #tpu.memory_space<vmem>>, vector<32x128xbf16>,
    } else {
    }
    return
  }
  func.func @transform_0(%arg0: i32, %arg1: i32, %arg2: i32) -> (i32, i32) {
    %c0_i32 = arith.constant 0 : i32
    return %arg0, %arg2 : i32, i32
  }
  func.func @transform_1(%arg0: i32, %arg1: i32, %arg2: i32) -> (i32, i32) {
    %c0_i32 = arith.constant 0 : i32
    return %arg2, %arg1 : i32, i32
  }
  func.func @transform_2(%arg0: i32, %arg1: i32, %arg2: i32) -> (i32, i32) {
    %c0_i32 = arith.constant 0 : i32
    return %arg0, %arg1 : i32, i32
  }
  func.func @transform_3(%arg0: i32, %arg1: i32, %arg2: i32) -> (i32, i32) {
    %c0_i32 = arith.constant 0 : i32
    return %arg0, %arg1 : i32, i32
  }
}

module attributes {stable_mosaic.version = 11 : i64} {
  func.func @_mlp_kernel(%arg0: i32, %arg1: i32, %arg2: memref<32x128xbf16, #tpu.memory_space<vmem>>, %arg3: memref<1x128xf32, #tpu.memory_space<vmem>>, %arg4: memref<128x128xbf16, #tpu.memory_space<vmem>>, %arg5: memref<128x128xbf16, #tpu.memory_space<vmem>>, %arg6: memref<128x128xbf16, #tpu.memory_space<vmem>>, %arg7: memref<32x128xbf16, #tpu.memory_space<vmem>>, %arg8: memref<32x128xf32, #tpu.memory_space<vmem>>) attributes {dimension_semantics = [#tpu.dimension_semantics<parallel>, #tpu.dimension_semantics<arbitrary>], iteration_bounds = array<i64: 1, 2>, scalar_prefetch = 0 : i64, scratch_operands = 1 : i64, tpu.core_type = #tpu.core_type<tc>, window_params = [{transform_indices = @transform_0, window_bounds = array<i64: 32, 128>}, {pipeline_mode = #tpu.pipeline_mode<synchronous>, transform_indices = @transform_1, window_bounds = array<i64: 1, 128>}, {transform_indices = @transform_2, window_bounds = array<i64: 128, 128>}, {transform_indices = @transform_3, window_bounds = array<i64: 128, 128>}, {transform_indices = @transform_4, window_bounds = array<i64: 128, 128>}, {transform_indices = @transform_5, window_bounds = array<i64: 32, 128>}]} {
    %c0_i32 = arith.constant 0 : i32
    %0 = arith.cmpi eq, %arg1, %c0_i32 : i32
    %1 = arith.extui %0 : i1 to i32
    %c0_i32_0 = arith.constant 0 : i32
    %2 = arith.cmpi ne, %1, %c0_i32_0 : i32
    scf.if %2 {
      %cst_21 = arith.constant 0.000000e+00 : f32
      %39 = vector.broadcast %cst_21 : f32 to vector<32x128xf32>
      %c0_22 = arith.constant 0 : index
      %c0_23 = arith.constant 0 : index
      %40 = vector.load %arg8[%c0_22, %c0_23] : memref<32x128xf32, #tpu.memory_space<vmem>>, vector<32x128xf32>
      tpu.vector_store %arg8[%c0_22, %c0_23], %39 {strides = array<i32>} : memref<32x128xf32, #tpu.memory_space<vmem>>, vector<32x128xf32>,
    } else {
    }
    %c0 = arith.constant 0 : index
    %c0_1 = arith.constant 0 : index
    %3 = vector.load %arg2[%c0, %c0_1] : memref<32x128xbf16, #tpu.memory_space<vmem>>, vector<32x128xbf16>
    %4 = arith.extf %3 : vector<32x128xbf16> to vector<32x128xf32>
    %5 = arith.mulf %4, %4 : vector<32x128xf32>
    %cst = arith.constant dense<0.000000e+00> : vector<32xf32>
    %6 = vector.multi_reduction <add>, %5, %cst [1] : vector<32x128xf32> to vector<32xf32>
    %7 = vector.shape_cast %6 : vector<32xf32> to vector<32x1xf32>
    %cst_2 = arith.constant 1.280000e+02 : f32
    %8 = vector.broadcast %cst_2 : f32 to vector<32x1xf32>
    %9 = arith.divf %7, %8 : vector<32x1xf32>
    %cst_3 = arith.constant 9.99999997E-7 : f32
    %10 = vector.broadcast %cst_3 : f32 to vector<32x1xf32>
    %11 = arith.addf %9, %10 : vector<32x1xf32>
    %12 = math.rsqrt %11 : vector<32x1xf32>
    %13 = vector.broadcast %12 : vector<32x1xf32> to vector<32x128xf32>
    %14 = arith.mulf %4, %13 : vector<32x128xf32>
    %c0_4 = arith.constant 0 : index
    %c0_5 = arith.constant 0 : index
    %15 = vector.load %arg3[%c0_4, %c0_5] : memref<1x128xf32, #tpu.memory_space<vmem>>, vector<1x128xf32>
    %16 = vector.broadcast %15 : vector<1x128xf32> to vector<32x128xf32>
    %17 = arith.mulf %14, %16 : vector<32x128xf32>
    %18 = arith.truncf %17 : vector<32x128xf32> to vector<32x128xbf16>
    %c0_6 = arith.constant 0 : index
    %c0_7 = arith.constant 0 : index
    %19 = vector.load %arg4[%c0_6, %c0_7] : memref<128x128xbf16, #tpu.memory_space<vmem>>, vector<128x128xbf16>
    %cst_8 = arith.constant dense<0.000000e+00> : vector<32x128xf32>
    %20 = tpu.matmul %18, %19, %cst_8 {dimension_numbers = #tpu.dot_dimension_numbers<[1], [0], [0], [1], [0, 0, 1, 1], [], []>} : vector<32x128xbf16>, vector<128x128xbf16>, vector<32x128xf32> -> vector<32x128xf32>
    %c0_9 = arith.constant 0 : index
    %c0_10 = arith.constant 0 : index
    %21 = vector.load %arg5[%c0_9, %c0_10] : memref<128x128xbf16, #tpu.memory_space<vmem>>, vector<128x128xbf16>
    %cst_11 = arith.constant dense<0.000000e+00> : vector<32x128xf32>
    %22 = tpu.matmul %18, %21, %cst_11 {dimension_numbers = #tpu.dot_dimension_numbers<[1], [0], [0], [1], [0, 0, 1, 1], [], []>} : vector<32x128xbf16>, vector<128x128xbf16>, vector<32x128xf32> -> vector<32x128xf32>
    %23 = arith.negf %20 : vector<32x128xf32>
    %24 = math.exp %23 : vector<32x128xf32>
    %cst_12 = arith.constant 1.000000e+00 : f32
    %25 = vector.broadcast %cst_12 : f32 to vector<32x128xf32>
    %26 = arith.addf %25, %24 : vector<32x128xf32>
    %27 = arith.divf %25, %26 : vector<32x128xf32>
    %28 = arith.mulf %20, %27 : vector<32x128xf32>
    %29 = arith.mulf %28, %22 : vector<32x128xf32>
    %30 = arith.truncf %29 : vector<32x128xf32> to vector<32x128xbf16>
    %c0_13 = arith.constant 0 : index
    %c0_14 = arith.constant 0 : index
    %31 = vector.load %arg8[%c0_13, %c0_14] : memref<32x128xf32, #tpu.memory_space<vmem>>, vector<32x128xf32>
    %c0_15 = arith.constant 0 : index
    %c0_16 = arith.constant 0 : index
    %32 = vector.load %arg6[%c0_15, %c0_16] : memref<128x128xbf16, #tpu.memory_space<vmem>>, vector<128x128xbf16>
    %cst_17 = arith.constant dense<0.000000e+00> : vector<32x128xf32>
    %33 = tpu.matmul %30, %32, %cst_17 {dimension_numbers = #tpu.dot_dimension_numbers<[1], [0], [0], [1], [0, 0, 1, 1], [], []>} : vector<32x128xbf16>, vector<128x128xbf16>, vector<32x128xf32> -> vector<32x128xf32>
    %34 = arith.addf %31, %33 : vector<32x128xf32>
    %c0_18 = arith.constant 0 : index
    %c0_19 = arith.constant 0 : index
    %35 = vector.load %arg8[%c0_18, %c0_19] : memref<32x128xf32, #tpu.memory_space<vmem>>, vector<32x128xf32>
    tpu.vector_store %arg8[%c0_18, %c0_19], %34 {strides = array<i32>} : memref<32x128xf32, #tpu.memory_space<vmem>>, vector<32x128xf32>,
    %c1_i32 = arith.constant 1 : i32
    %36 = arith.cmpi eq, %arg1, %c1_i32 : i32
    %37 = arith.extui %36 : i1 to i32
    %c0_i32_20 = arith.constant 0 : i32
    %38 = arith.cmpi ne, %37, %c0_i32_20 : i32
    scf.if %38 {
      %c0_21 = arith.constant 0 : index
      %c0_22 = arith.constant 0 : index
      %39 = vector.load %arg8[%c0_21, %c0_22] : memref<32x128xf32, #tpu.memory_space<vmem>>, vector<32x128xf32>
      %40 = arith.addf %39, %4 : vector<32x128xf32>
      %41 = arith.truncf %40 : vector<32x128xf32> to vector<32x128xbf16>
      %c0_23 = arith.constant 0 : index
      %c0_24 = arith.constant 0 : index
      %42 = vector.load %arg7[%c0_23, %c0_24] : memref<32x128xbf16, #tpu.memory_space<vmem>>, vector<32x128xbf16>
      tpu.vector_store %arg7[%c0_23, %c0_24], %41 {strides = array<i32>} : memref<32x128xbf16, #tpu.memory_space<vmem>>, vector<32x128xbf16>,
    } else {
    }
    return
  }
  func.func @transform_0(%arg0: i32, %arg1: i32) -> (i32, i32) {
    %c0_i32 = arith.constant 0 : i32
    %c0_i32_0 = arith.constant 0 : i32
    return %arg0, %c0_i32 : i32, i32
  }
  func.func @transform_1(%arg0: i32, %arg1: i32) -> (i32, i32) {
    %c0_i32 = arith.constant 0 : i32
    %c0_i32_0 = arith.constant 0 : i32
    %c0_i32_1 = arith.constant 0 : i32
    return %c0_i32, %c0_i32_0 : i32, i32
  }
  func.func @transform_2(%arg0: i32, %arg1: i32) -> (i32, i32) {
    %c0_i32 = arith.constant 0 : i32
    %c0_i32_0 = arith.constant 0 : i32
    return %c0_i32, %arg1 : i32, i32
  }
  func.func @transform_3(%arg0: i32, %arg1: i32) -> (i32, i32) {
    %c0_i32 = arith.constant 0 : i32
    %c0_i32_0 = arith.constant 0 : i32
    return %c0_i32, %arg1 : i32, i32
  }
  func.func @transform_4(%arg0: i32, %arg1: i32) -> (i32, i32) {
    %c0_i32 = arith.constant 0 : i32
    %c0_i32_0 = arith.constant 0 : i32
    return %arg1, %c0_i32 : i32, i32
  }
  func.func @transform_5(%arg0: i32, %arg1: i32) -> (i32, i32) {
    %c0_i32 = arith.constant 0 : i32
    %c0_i32_0 = arith.constant 0 : i32
    return %arg0, %c0_i32 : i32, i32
  }
}

module attributes {stable_mosaic.version = 11 : i64} {
  func.func @_rmsnorm_kernel(%arg0: i32, %arg1: memref<32x128xbf16, #tpu.memory_space<vmem>>, %arg2: memref<1x128xf32, #tpu.memory_space<vmem>>, %arg3: memref<32x128xbf16, #tpu.memory_space<vmem>>) attributes {dimension_semantics = [#tpu.dimension_semantics<parallel>], iteration_bounds = array<i64: 1>, scalar_prefetch = 0 : i64, scratch_operands = 0 : i64, tpu.core_type = #tpu.core_type<tc>, window_params = [{transform_indices = @transform_0, window_bounds = array<i64: 32, 128>}, {pipeline_mode = #tpu.pipeline_mode<synchronous>, transform_indices = @transform_1, window_bounds = array<i64: 1, 128>}, {transform_indices = @transform_2, window_bounds = array<i64: 32, 128>}]} {
    %c0 = arith.constant 0 : index
    %c0_0 = arith.constant 0 : index
    %0 = vector.load %arg1[%c0, %c0_0] : memref<32x128xbf16, #tpu.memory_space<vmem>>, vector<32x128xbf16>
    %1 = arith.extf %0 : vector<32x128xbf16> to vector<32x128xf32>
    %2 = arith.mulf %1, %1 : vector<32x128xf32>
    %cst = arith.constant dense<0.000000e+00> : vector<32xf32>
    %3 = vector.multi_reduction <add>, %2, %cst [1] : vector<32x128xf32> to vector<32xf32>
    %4 = vector.shape_cast %3 : vector<32xf32> to vector<32x1xf32>
    %cst_1 = arith.constant 1.280000e+02 : f32
    %5 = vector.broadcast %cst_1 : f32 to vector<32x1xf32>
    %6 = arith.divf %4, %5 : vector<32x1xf32>
    %cst_2 = arith.constant 9.99999997E-7 : f32
    %7 = vector.broadcast %cst_2 : f32 to vector<32x1xf32>
    %8 = arith.addf %6, %7 : vector<32x1xf32>
    %9 = math.rsqrt %8 : vector<32x1xf32>
    %10 = vector.broadcast %9 : vector<32x1xf32> to vector<32x128xf32>
    %11 = arith.mulf %1, %10 : vector<32x128xf32>
    %c0_3 = arith.constant 0 : index
    %c0_4 = arith.constant 0 : index
    %12 = vector.load %arg2[%c0_3, %c0_4] : memref<1x128xf32, #tpu.memory_space<vmem>>, vector<1x128xf32>
    %13 = vector.broadcast %12 : vector<1x128xf32> to vector<32x128xf32>
    %14 = arith.mulf %11, %13 : vector<32x128xf32>
    %15 = arith.truncf %14 : vector<32x128xf32> to vector<32x128xbf16>
    %c0_5 = arith.constant 0 : index
    %c0_6 = arith.constant 0 : index
    %16 = vector.load %arg3[%c0_5, %c0_6] : memref<32x128xbf16, #tpu.memory_space<vmem>>, vector<32x128xbf16>
    tpu.vector_store %arg3[%c0_5, %c0_6], %15 {strides = array<i32>} : memref<32x128xbf16, #tpu.memory_space<vmem>>, vector<32x128xbf16>,
    return
  }
  func.func @transform_0(%arg0: i32) -> (i32, i32) {
    %c0_i32 = arith.constant 0 : i32
    %c0_i32_0 = arith.constant 0 : i32
    return %arg0, %c0_i32 : i32, i32
  }
  func.func @transform_1(%arg0: i32) -> (i32, i32) {
    %c0_i32 = arith.constant 0 : i32
    %c0_i32_0 = arith.constant 0 : i32
    %c0_i32_1 = arith.constant 0 : i32
    return %c0_i32, %c0_i32_0 : i32, i32
  }
  func.func @transform_2(%arg0: i32) -> (i32, i32) {
    %c0_i32 = arith.constant 0 : i32
    %c0_i32_0 = arith.constant 0 : i32
    return %arg0, %c0_i32 : i32, i32
  }
}

</mosaic_0001>

<llo_original>
// kernel: internlm2_forward.9
$region0: #{internlm2_forward.9}
  #allocation0 [shape = 'u32[]', space=smem, size = 0x4, offset = 0x4, fixed_abs, tag = 'smem constant byte address 0x4 - core index']
  #allocation1 [shape = 'u32[144,128]{1,0:T(1,128)}', space=vmem, size = 0x12000, scoped, tag = 'internal scratch']
  %s0 = inlined_call_operand.vmem [shape: bf16[32,128], index: 0, kind: input, shape index: {}]
  %s1 = inlined_call_operand.vmem [shape: f32[1,128], index: 1, kind: input, shape index: {}]
  %s2 = inlined_call_operand.vmem [shape: bf16[128,256], index: 2, kind: input, shape index: {}]
  %s3 = inlined_call_operand.vmem [shape: bf16[32,256], index: 3, kind: output, shape index: {}]
  %s4 = sld [smem:[#allocation0]]
  $region22: #{internlm2_forward.9} parent=0
    _
  %s6 = ssub.s32 1, %s4
  %s7 = scalar_select 0, %s6, %s4
  // Predicated region
  $region2: #{internlm2_forward.9} parent=0 // pred_check
    _
  $region3: #{internlm2_forward.9} parent=0 // pred_check_branch
    %9 = sbr.rel (0) target = $region5
  $region4: #{internlm2_forward.9} parent=0 // pred_region
    _
  $region5: #{internlm2_forward.9} parent=0 // pred_fallthru
    _
  // Predicated region
  $region6: #{internlm2_forward.9} parent=0 // pred_check
    _
  $region7: #{internlm2_forward.9} parent=0 // pred_check_branch
    %11 = sbr.rel (0) target = $region9
  $region8: #{internlm2_forward.9} parent=0 // pred_region
    _
  $region9: #{internlm2_forward.9} parent=0 // pred_fallthru
    _
  // Predicated region
  $region10: #{internlm2_forward.9} parent=0 // pred_check
    _
  $region11: #{internlm2_forward.9} parent=0 // pred_check_branch
    %13 = sbr.rel (0) target = $region13
  $region12: #{internlm2_forward.9} parent=0 // pred_region
    _
  $region13: #{internlm2_forward.9} parent=0 // pred_fallthru
    _
  %v15 = vld [vmem:[%s0] sm:$0xf]
  %v16 = vld [vmem:[%s0 + $0x4] sm:$0xf]
  %v17 = vld [vmem:[%s0 + $0x8] sm:$0xf]
  %v18 = vld [vmem:[%s0 + $0xc] sm:$0xf]
  %v19 = vunpack.c.l.bf16 %v15
  %v20 = vunpack.c.l.bf16 %v16
  %v21 = vunpack.c.l.bf16 %v17
  %v22 = vunpack.c.l.bf16 %v18
  %v23 = vmul.f32 %v19, %v19
  %v24 = vmul.f32 %v20, %v20
  %v25 = vmul.f32 %v21, %v21
  %v26 = vmul.f32 %v22, %v22
  %27 = vadd.xlane.f32.xlu0 %v23
  %v28 = vpop.xlane.xlu0 %27
  %29 = vadd.xlane.f32.xlu0 %v24
  %v30 = vpop.xlane.xlu0 %29
  %31 = vadd.xlane.f32.xlu0 %v25
  %v32 = vpop.xlane.xlu0 %31
  %33 = vadd.xlane.f32.xlu0 %v26
  %v34 = vpop.xlane.xlu0 %33
  %v35 = vrcp.pop 128.0
  %v36 = vmul.f32 %v28, %v35
  %v37 = vmul.f32 %v30, %v35
  %v38 = vmul.f32 %v32, %v35
  %v39 = vmul.f32 %v34, %v35
  %v40 = vadd.f32 %v36, 1e-06
  %v41 = vadd.f32 %v37, 1e-06
  %v42 = vadd.f32 %v38, 1e-06
  %v43 = vadd.f32 %v39, 1e-06
  %v44 = vrsqrt.pop %v40
  %v45 = vrsqrt.pop %v41
  %v46 = vrsqrt.pop %v42
  %v47 = vrsqrt.pop %v43
  %v48 = vmul.f32 %v19, %v44
  %v49 = vmul.f32 %v20, %v45
  %v50 = vmul.f32 %v21, %v46
  %v51 = vmul.f32 %v22, %v47
  %v52 = vld [vmem:[%s1] sm:$0x1]
  %v54 = vlaneseq
  %v55 = vshrl.u32 %v54, 7
  %v56 = vsub.s32 0, %v55
  %v57 = vrot.slane %v52, %v56
  %v59 = vmul.f32 %v48, %v57
  %v60 = vmul.f32 %v49, %v57
  %v61 = vmul.f32 %v50, %v57
  %v62 = vmul.f32 %v51, %v57
  %v63 = vpack.c.bf16 %v60, %v59
  %v64 = vpack.c.bf16 %v62, %v61
  %v65 = vld [vmem:[%s2] sm:$0xff]
  %v66 = vld [vmem:[%s2 + $0x8] sm:$0xff]
  %v67 = vld [vmem:[%s2 + $0x10] sm:$0xff]
  %v68 = vld [vmem:[%s2 + $0x18] sm:$0xff]
  %v69 = vld [vmem:[%s2 + $0x20] sm:$0xff]
  %v70 = vld [vmem:[%s2 + $0x28] sm:$0xff]
  %v71 = vld [vmem:[%s2 + $0x30] sm:$0xff]
  %v72 = vld [vmem:[%s2 + $0x38] sm:$0xff]
  %v73 = vld [vmem:[%s2 + $0x40] sm:$0xff]
  %v74 = vld [vmem:[%s2 + $0x48] sm:$0xff]
  %v75 = vld [vmem:[%s2 + $0x50] sm:$0xff]
  %v76 = vld [vmem:[%s2 + $0x58] sm:$0xff]
  %v77 = vld [vmem:[%s2 + $0x60] sm:$0xff]
  %v78 = vld [vmem:[%s2 + $0x68] sm:$0xff]
  %v79 = vld [vmem:[%s2 + $0x70] sm:$0xff]
  %v80 = vld [vmem:[%s2 + $0x78] sm:$0xff]
  %v97 = vunpack.c.l.b16 %v65
  %v98 = vunpack.c.h.b16 %v65
  %v99 = vunpack.c.l.b16 %v66
  %v100 = vunpack.c.h.b16 %v66
  %v101 = vunpack.c.l.b16 %v67
  %v102 = vunpack.c.h.b16 %v67
  %v103 = vunpack.c.l.b16 %v68
  %v104 = vunpack.c.h.b16 %v68
  %v105 = vunpack.c.l.b16 %v69
  %v106 = vunpack.c.h.b16 %v69
  %v107 = vunpack.c.l.b16 %v70
  %v108 = vunpack.c.h.b16 %v70
  %v109 = vunpack.c.l.b16 %v71
  %v110 = vunpack.c.h.b16 %v71
  %v111 = vunpack.c.l.b16 %v72
  %v112 = vunpack.c.h.b16 %v72
  %v113 = vunpack.c.l.b16 %v73
  %v114 = vunpack.c.h.b16 %v73
  %v115 = vunpack.c.l.b16 %v74
  %v116 = vunpack.c.h.b16 %v74
  %v117 = vunpack.c.l.b16 %v75
  %v118 = vunpack.c.h.b16 %v75
  %v119 = vunpack.c.l.b16 %v76
  %v120 = vunpack.c.h.b16 %v76
  %v121 = vunpack.c.l.b16 %v77
  %v122 = vunpack.c.h.b16 %v77
  %v123 = vunpack.c.l.b16 %v78
  %v124 = vunpack.c.h.b16 %v78
  %v125 = vunpack.c.l.b16 %v79
  %v126 = vunpack.c.h.b16 %v79
  %v127 = vunpack.c.l.b16 %v80
  %v128 = vunpack.c.h.b16 %v80
  %v129 = vpack.c.b16 %v99, %v97
  %v130 = vpack.c.b16 %v100, %v98
  %v131 = vpack.c.b16 %v103, %v101
  %v132 = vpack.c.b16 %v104, %v102
  %v133 = vpack.c.b16 %v107, %v105
  %v134 = vpack.c.b16 %v108, %v106
  %v135 = vpack.c.b16 %v111, %v109
  %v136 = vpack.c.b16 %v112, %v110
  %v137 = vpack.c.b16 %v115, %v113
  %v138 = vpack.c.b16 %v116, %v114
  %v139 = vpack.c.b16 %v119, %v117
  %v140 = vpack.c.b16 %v120, %v118
  %v141 = vpack.c.b16 %v123, %v121
  %v142 = vpack.c.b16 %v124, %v122
  %v143 = vpack.c.b16 %v127, %v125
  %v144 = vpack.c.b16 %v128, %v126
  %161 = vmatprep.subr.bf16.mxu0 %v130
  %162 = vmatpush1.bf16.msra.mxu0 %v129
  %163 = vmatprep.subr.bf16.mxu0 %v132
  %164 = vmatpush1.bf16.msra.mxu0 %v131
  %165 = vmatprep.subr.bf16.mxu0 %v134
  %166 = vmatpush1.bf16.msra.mxu0 %v133
  %167 = vmatprep.subr.bf16.mxu0 %v136
  %168 = vmatpush1.bf16.msra.mxu0 %v135
  %169 = vmatprep.subr.bf16.mxu0 %v138
  %170 = vmatpush1.bf16.msra.mxu0 %v137
  %171 = vmatprep.subr.bf16.mxu0 %v140
  %172 = vmatpush1.bf16.msra.mxu0 %v139
  %173 = vmatprep.subr.bf16.mxu0 %v142
  %174 = vmatpush1.bf16.msra.mxu0 %v141
  %175 = vmatprep.subr.bf16.mxu0 %v144
  %176 = vmatpush1.bf16.msra.mxu0 %v143
  %177 = vmatprep.subr.bf16.mxu0 0
  %178 = vmatpush1.bf16.msra.mxu0 0
  %179 = vmatprep.subr.bf16.mxu0 0
  %180 = vmatpush1.bf16.msra.mxu0 0
  %181 = vmatprep.subr.bf16.mxu0 0
  %182 = vmatpush1.bf16.msra.mxu0 0
  %183 = vmatprep.subr.bf16.mxu0 0
  %184 = vmatpush1.bf16.msra.mxu0 0
  %185 = vmatprep.subr.bf16.mxu0 0
  %186 = vmatpush1.bf16.msra.mxu0 0
  %187 = vmatprep.subr.bf16.mxu0 0
  %188 = vmatpush1.bf16.msra.mxu0 0
  %189 = vmatprep.subr.bf16.mxu0 0
  %190 = vmatpush1.bf16.msra.mxu0 0
  %191 = vmatprep.subr.bf16.mxu0 0
  %192 = vmatpush1.bf16.msra.mxu0 0
  %193 = vmatprep.mubr.bf16.mxu0 0
  %194 = vmatmul.mubr.bf16.gmra.mrb[0].mxu0 %v63
  %v195 = vpop.f32.mrb[0].mxu0
  %v196 = vadd.f32 0.0, %v195
  %v197 = vpop.f32.mrb[0].mxu0
  %v198 = vadd.f32 0.0, %v197
  %v199 = vpop.f32.mrb[0].mxu0
  %v200 = vadd.f32 0.0, %v199
  %v201 = vpop.f32.mrb[0].mxu0
  %v202 = vadd.f32 0.0, %v201
  %203 = vmatprep.mubr.bf16.mxu0 0
  %204 = vmatmul.mubr.bf16.gmra.mrb[0].mxu0 %v64
  %v205 = vpop.f32.mrb[0].mxu0
  %v206 = vadd.f32 0.0, %v205
  %v207 = vpop.f32.mrb[0].mxu0
  %v208 = vadd.f32 0.0, %v207
  %v209 = vpop.f32.mrb[0].mxu0
  %v210 = vadd.f32 0.0, %v209
  %v211 = vpop.f32.mrb[0].mxu0
  %v212 = vadd.f32 0.0, %v211
  %213 = vdwg.mxu0
  %v214 = vpack.c.bf16 %v200, %v196
  %v215 = vpack.c.bf16 %v202, %v198
  %v216 = vpack.c.bf16 %v210, %v206
  %v217 = vpack.c.bf16 %v212, %v208
  %v222 = vunpack.c.l.b16 %v214
  %v223 = vunpack.c.l.b16 %v215
  %v224 = vunpack.c.h.b16 %v214
  %v225 = vunpack.c.h.b16 %v215
  %v226 = vunpack.c.l.b16 %v216
  %v227 = vunpack.c.l.b16 %v217
  %v228 = vunpack.c.h.b16 %v216
  %v229 = vunpack.c.h.b16 %v217
  %v230 = vpack.c.b16 %v223, %v222
  %v231 = vpack.c.b16 %v225, %v224
  %v232 = vpack.c.b16 %v227, %v226
  %v233 = vpack.c.b16 %v229, %v228
  %238 = vst [vmem:[%s3] sm:$0xff] %v230
  %239 = vst [vmem:[%s3 + $0x8] sm:$0xff] %v231
  %240 = vst [vmem:[%s3 + $0x10] sm:$0xff] %v232
  %241 = vst [vmem:[%s3 + $0x18] sm:$0xff] %v233
  // Predicated region
  $region14: #{internlm2_forward.9} parent=0 // pred_check
    _
  $region15: #{internlm2_forward.9} parent=0 // pred_check_branch
    %243 = sbr.rel (0) target = $region17
  $region16: #{internlm2_forward.9} parent=0 // pred_region
    _
  $region17: #{internlm2_forward.9} parent=0 // pred_fallthru
    _
  // Predicated region
  $region18: #{internlm2_forward.9} parent=0 // pred_check
    _
  $region19: #{internlm2_forward.9} parent=0 // pred_check_branch
    %245 = sbr.rel (0) target = $region21
  $region20: #{internlm2_forward.9} parent=0 // pred_region
    _
  $region21: #{internlm2_forward.9} parent=0 // pred_fallthru
    _

// kernel: internlm2_forward.10
$region0: #{internlm2_forward.10}
  #allocation0 [shape = 'u32[]', space=smem, size = 0x4, offset = 0x4, fixed_abs, tag = 'smem constant byte address 0x4 - core index']
  #allocation1 [shape = 'u32[144,128]{1,0:T(1,128)}', space=vmem, size = 0x12000, scoped, tag = 'internal scratch']
  %s0 = inlined_call_operand.vmem [shape: bf16[2,16,256], index: 0, kind: input, shape index: {}]
  %s1 = inlined_call_operand.vmem [shape: f32[16,32], index: 1, kind: input, shape index: {}]
  %s2 = inlined_call_operand.vmem [shape: f32[16,32], index: 2, kind: input, shape index: {}]
  %s3 = inlined_call_operand.vmem [shape: bf16[2,16,128], index: 3, kind: output, shape index: {}]
  %s4 = sld [smem:[#allocation0]]
  $region45: #{internlm2_forward.10} parent=0
    _
  %s6 = ssub.s32 1, %s4
  %s7 = scalar_select 0, %s6, %s4
  loop: start=0, step=1, limit=4
  $region2: #{internlm2_forward.10} parent=0 // loop_pre_header
    _
  $region3: #{internlm2_forward.10} parent=0 // loop_header
    %s9 = sphi 0, %s13
    %p10 = scmp.ge.s32.totalorder %s9, 4
    %s19 = sphi 0, %s21
    %s22 = sphi 0, %s19
    %s23 = sphi 0, %s22
    %s39 = sphi 0, %s23
    %s43 = sphi 0, %s43
    %s45 = sphi 0, %s43
    %s46 = sphi 0, %s45
    %s60 = sphi 0, %s46
    %s64 = sphi 0, %s64
    %s66 = sphi 0, %s64
    %s67 = sphi 0, %s66
    %s81 = sphi 0, %s67
    %s87 = sphi 0, %s89
    %s90 = sphi 0, %s87
    %s91 = sphi 0, %s90
    %s107 = sphi 0, %s91
  $region4: #{internlm2_forward.10} parent=0 // loop_header_branch
    %12 = sbr.rel (%p10) target = $region8
  $region5: #{internlm2_forward.10} parent=0 // loop_body
    %s14 = ssub.s32 %s9, 1
    %s15 = ssub.s32 %s9, 2
    %s16 = sadd.s32 %s9, 1
    %s17 = ssub.s32 %s9, %s16
    %p18 = scmp.eq.s32.totalorder %s17, 0
    %s20 = sadd.s32 %s19, 1
    %s21 = scalar_select %p18, %s19, %s20
    %p24 = pneg %p18
    %p25 = scmp.eq.s32.totalorder %s9, 1
    %p26 = por %p24, %p25
    %p27 = scmp.ne.s32.totalorder %s19, %s22
    %p28 = scmp.eq.s32.totalorder %s9, 0
    %p29 = por %p27, %p28
    %p30 = scmp.ne.s32.totalorder %s19, %s22
    %p31 = scmp.eq.s32.totalorder %s14, 1
    %p32 = por %p30, %p31
    %p33 = scmp.ne.s32.totalorder %s22, %s23
    %p34 = scmp.eq.s32.totalorder %s14, 0
    %p35 = por %p33, %p34
    %p36 = scmp.ne.s32.totalorder %s22, %s23
    %p37 = scmp.eq.s32.totalorder %s15, 1
    %p38 = por %p36, %p37
    %p40 = scmp.ne.s32.totalorder %s23, %s39
    %p41 = scmp.eq.s32.totalorder %s15, 0
    %p42 = por %p40, %p41
    %s44 = sadd.s32 %s43, 1
    %p47 = scmp.eq.s32.totalorder %s9, 1
    %p48 = scmp.ne.s32.totalorder %s43, %s45
    %p49 = scmp.eq.s32.totalorder %s9, 0
    %p50 = por %p48, %p49
    %p51 = scmp.ne.s32.totalorder %s43, %s45
    %p52 = scmp.eq.s32.totalorder %s14, 1
    %p53 = por %p51, %p52
    %p54 = scmp.ne.s32.totalorder %s45, %s46
    %p55 = scmp.eq.s32.totalorder %s14, 0
    %p56 = por %p54, %p55
    %p57 = scmp.ne.s32.totalorder %s45, %s46
    %p58 = scmp.eq.s32.totalorder %s15, 1
    %p59 = por %p57, %p58
    %p61 = scmp.ne.s32.totalorder %s46, %s60
    %p62 = scmp.eq.s32.totalorder %s15, 0
    %p63 = por %p61, %p62
    %s65 = sadd.s32 %s64, 1
    %p68 = scmp.eq.s32.totalorder %s9, 1
    %p69 = scmp.ne.s32.totalorder %s64, %s66
    %p70 = scmp.eq.s32.totalorder %s9, 0
    %p71 = por %p69, %p70
    %p72 = scmp.ne.s32.totalorder %s64, %s66
    %p73 = scmp.eq.s32.totalorder %s14, 1
    %p74 = por %p72, %p73
    %p75 = scmp.ne.s32.totalorder %s66, %s67
    %p76 = scmp.eq.s32.totalorder %s14, 0
    %p77 = por %p75, %p76
    %p78 = scmp.ne.s32.totalorder %s66, %s67
    %p79 = scmp.eq.s32.totalorder %s15, 1
    %p80 = por %p78, %p79
    %p82 = scmp.ne.s32.totalorder %s67, %s81
    %p83 = scmp.eq.s32.totalorder %s15, 0
    %p84 = por %p82, %p83
    %s85 = ssub.s32 %s9, %s16
    %p86 = scmp.eq.s32.totalorder %s85, 0
    %s88 = sadd.s32 %s87, 1
    %s89 = scalar_select %p86, %s87, %s88
    %p92 = pneg %p86
    %p93 = scmp.eq.s32.totalorder %s9, 1
    %p94 = por %p92, %p93
    %p95 = scmp.ne.s32.totalorder %s87, %s90
    %p96 = scmp.eq.s32.totalorder %s9, 0
    %p97 = por %p95, %p96
    %p98 = scmp.ne.s32.totalorder %s87, %s90
    %p99 = scmp.eq.s32.totalorder %s14, 1
    %p100 = por %p98, %p99
    %p101 = scmp.ne.s32.totalorder %s90, %s91
    %p102 = scmp.eq.s32.totalorder %s14, 0
    %p103 = por %p101, %p102
    %p104 = scmp.ne.s32.totalorder %s90, %s91
    %p105 = scmp.eq.s32.totalorder %s15, 1
    %p106 = por %p104, %p105
    %p108 = scmp.ne.s32.totalorder %s91, %s107
    %p109 = scmp.eq.s32.totalorder %s15, 0
    %p110 = por %p108, %p109
    %p111 = scmp.le.s32.totalorder 1, %s9
    %p112 = scmp.lt.s32.totalorder %s9, 3
    %p113 = pnand %p111, %p112
    %p114 = pneg %p113
    // Predicated region
    $region9: #{internlm2_forward.10} parent=5 // pred_check
      _
    $region10: #{internlm2_forward.10} parent=5 // pred_check_branch
      %116 = sbr.rel (%p113) target = $region12
    $region11: #{internlm2_forward.10} parent=5 // pred_region
      %s117 = ssub.s32 %s9, 1
      // Predicated region
      $region13: #{internlm2_forward.10} parent=11 // pred_check
        %p118 = pneg %p56
      $region14: #{internlm2_forward.10} parent=11 // pred_check_branch
        %120 = sbr.rel (%p118) target = $region16
      $region15: #{internlm2_forward.10} parent=11 // pred_region
        _
      $region16: #{internlm2_forward.10} parent=11 // pred_fallthru
        _
      // Predicated region
      $region17: #{internlm2_forward.10} parent=11 // pred_check
        %p121 = pneg %p77
      $region18: #{internlm2_forward.10} parent=11 // pred_check_branch
        %123 = sbr.rel (%p121) target = $region20
      $region19: #{internlm2_forward.10} parent=11 // pred_region
        _
      $region20: #{internlm2_forward.10} parent=11 // pred_fallthru
        _
    $region12: #{internlm2_forward.10} parent=5 // pred_fallthru
      _
    %p124 = scmp.lt.s32.totalorder %s9, 2
    // Predicated region
    $region21: #{internlm2_forward.10} parent=5 // pred_check
      %p125 = pneg %p124
    $region22: #{internlm2_forward.10} parent=5 // pred_check_branch
      %127 = sbr.rel (%p125) target = $region24
    $region23: #{internlm2_forward.10} parent=5 // pred_region
      // Predicated region
      $region25: #{internlm2_forward.10} parent=23 // pred_check
        %p128 = pneg %p29
      $region26: #{internlm2_forward.10} parent=23 // pred_check_branch
        %130 = sbr.rel (%p128) target = $region28
      $region27: #{internlm2_forward.10} parent=23 // pred_region
        %p131 = scmp.lt.s32.totalorder %s9, 1
        %s132 = scalar_select %p131, %s9, 1
        %s133 = smul.addr %s132, 4
        %s134 = smul.addr %s133, 4
        %s135 = scalar_lea.vmem %s0, %s134
      $region28: #{internlm2_forward.10} parent=23 // pred_fallthru
        _
    $region24: #{internlm2_forward.10} parent=5 // pred_fallthru
      _
    %p136 = scmp.le.s32.totalorder 1, %s9
    %p137 = scmp.lt.s32.totalorder %s9, 3
    %p138 = pnand %p136, %p137
    %p139 = pneg %p138
    // Predicated region
    $region29: #{internlm2_forward.10} parent=5 // pred_check
      _
    $region30: #{internlm2_forward.10} parent=5 // pred_check_branch
      %141 = sbr.rel (%p138) target = $region32
    $region31: #{internlm2_forward.10} parent=5 // pred_region
      %s142 = ssub.s32 %s9, 1
      %p143 = scmp.lt.s32.totalorder %s14, 1
      %s144 = scalar_select %p143, %s14, 1
      %s145 = smul.addr %s144, 4
      %s146 = smul.addr %s145, 4
      %s147 = scalar_lea.vmem %s0, %s146
      %p148 = pneg %p35
      %p149 = pneg %p32
      %p150 = pneg %p56
      %p151 = pneg %p53
      %p152 = pneg %p77
      %p153 = pneg %p74
      %p154 = pneg %p103
      %p155 = pneg %p100
      %p156 = scmp.lt.s32.totalorder %s14, 1
      %s157 = scalar_select %p156, %s14, 1
      %s158 = smul.addr %s157, 2
      %s159 = smul.addr %s158, 4
      %s160 = scalar_lea.vmem %s3, %s159
      %p161 = scmp.lt.s32.totalorder %s14, 1
      %s162 = scalar_select %p161, %s14, 1
      %s163 = smul.addr %s162, 4
      %s164 = smul.addr %s163, 4
      %s165 = scalar_lea.vmem %s0, %s164
      %p166 = scmp.lt.s32.totalorder %s14, 1
      %s167 = scalar_select %p166, %s14, 1
      %s168 = smul.addr %s167, 2
      %s169 = smul.addr %s168, 4
      %s170 = scalar_lea.vmem %s3, %s169
      %v172 = vld [vmem:[%s1] sm:$0xff]
      %v173 = vld [vmem:[%s1 + $0x8] sm:$0xff]
      %v174 = vld [vmem:[%s2] sm:$0xff]
      %v175 = vld [vmem:[%s2 + $0x8] sm:$0xff]
      %v176 = vld [vmem:[%s165] sm:$0xff]
      %v177 = vld [vmem:[%s165 + $0x8] sm:$0xff]
      %v178 = vunpack.c.l.bf16 %v176
      %v179 = vunpack.c.h.bf16 %v176
      %v180 = vunpack.c.l.bf16 %v177
      %v181 = vunpack.c.h.bf16 %v177
      %v182 = vlaneseq
      %v183 = vshrl.u32 %v182, 7
      %v184 = vadd.s32 %v183, 8
      %v185 = vlaneseq
      %v186 = vand.u32 %v185, 127
      %vm187 = vcmp.le.s32.totalorder %v186, %v183
      %vm188 = vcmp.le.s32.totalorder %v186, %v184
      %v189 = vmul.f32 %v179, %v172
      %v190 = vmul.f32 %v181, %v173
      %v191 = vsub.f32 0.0, %v179
      %v192 = vsub.f32 0.0, %v181
      %195 = vrot.lane.b32.xlu0 %v191, 112
      %v196 = vpop.permute.xlu0 %195
      %197 = vrot.lane.b32.xlu0 %v192, 112
      %v198 = vpop.permute.xlu0 %197
      %203 = vrot.lane.b32.xlu0 %v179, 16
      %v204 = vpop.permute.xlu0 %203
      %205 = vrot.lane.b32.xlu0 %v181, 16
      %v206 = vpop.permute.xlu0 %205
      %vm209 = vcmask 130048
      %v210 = vsel %vm209, %v196, %v204
      %v211 = vsel %vm209, %v198, %v206
      %v212 = vmul.f32 %v210, %v174
      %v213 = vmul.f32 %v211, %v175
      %v214 = vadd.f32 %v189, %v212
      %v215 = vadd.f32 %v190, %v213
      %v216 = vpack.c.bf16 %v215, %v214
      %v217 = vpack.c.bf16 %v181, %v179
      %v218 = vmul.f32 %v178, %v172
      %v219 = vmul.f32 %v180, %v173
      %v220 = vsub.f32 0.0, %v178
      %v221 = vsub.f32 0.0, %v180
      %224 = vrot.lane.b32.xlu0 %v220, 112
      %v225 = vpop.permute.xlu0 %224
      %226 = vrot.lane.b32.xlu0 %v221, 112
      %v227 = vpop.permute.xlu0 %226
      %232 = vrot.lane.b32.xlu0 %v178, 16
      %v233 = vpop.permute.xlu0 %232
      %234 = vrot.lane.b32.xlu0 %v180, 16
      %v235 = vpop.permute.xlu0 %234
      %v238 = vsel %vm209, %v225, %v233
      %v239 = vsel %vm209, %v227, %v235
      %v240 = vmul.f32 %v238, %v174
      %v241 = vmul.f32 %v239, %v175
      %v242 = vadd.f32 %v218, %v240
      %v243 = vadd.f32 %v219, %v241
      %v244 = vpack.c.bf16 %v243, %v242
      %vm245 = vcmask 261120
      %v247 = vsel %vm245, %v244, 0
      %v250 = vsel %vm245, %v216, 0
      %252 = vmatprep.subr.bf16.mxu0 0
      %253 = vmatpush1.bf16.xpose.msra.mxu0 %v250
      %254 = vmatprep.subr.bf16.mxu0 0
      %255 = vmatpush1.bf16.xpose.msra.mxu0 0
      %256 = vmatprep.subr.bf16.mxu0 0
      %257 = vmatpush1.bf16.xpose.msra.mxu0 0
      %258 = vmatprep.subr.bf16.mxu0 0
      %259 = vmatpush1.bf16.xpose.msra.mxu0 0
      %260 = vmatprep.subr.bf16.mxu0 0
      %261 = vmatpush1.bf16.xpose.msra.mxu0 0
      %262 = vmatprep.subr.bf16.mxu0 0
      %263 = vmatpush1.bf16.xpose.msra.mxu0 0
      %264 = vmatprep.subr.bf16.mxu0 0
      %265 = vmatpush1.bf16.xpose.msra.mxu0 0
      %266 = vmatprep.subr.bf16.mxu0 0
      %267 = vmatpush1.bf16.xpose.msra.mxu0 0
      %268 = vmatprep.subr.bf16.mxu0 0
      %269 = vmatpush1.bf16.xpose.msra.mxu0 0
      %270 = vmatprep.subr.bf16.mxu0 0
      %271 = vmatpush1.bf16.xpose.msra.mxu0 0
      %272 = vmatprep.subr.bf16.mxu0 0
      %273 = vmatpush1.bf16.xpose.msra.mxu0 0
      %274 = vmatprep.subr.bf16.mxu0 0
      %275 = vmatpush1.bf16.xpose.msra.mxu0 0
      %276 = vmatprep.subr.bf16.mxu0 0
      %277 = vmatpush1.bf16.xpose.msra.mxu0 0
      %278 = vmatprep.subr.bf16.mxu0 0
      %279 = vmatpush1.bf16.xpose.msra.mxu0 0
      %280 = vmatprep.subr.bf16.mxu0 0
      %281 = vmatpush1.bf16.xpose.msra.mxu0 0
      %282 = vmatprep.subr.bf16.mxu0 0
      %283 = vmatpush1.bf16.xpose.msra.mxu0 0
      %284 = vmatprep.mubr.bf16.mxu0 0
      %285 = vmatmul.mubr.bf16.gmra.mrb[0].mxu0 %v247
      %v286 = vpop.f32.mrb[0].mxu0
      %v287 = vadd.f32 0.0, %v286
      %v288 = vpop.f32.mrb[0].mxu0
      %v289 = vpop.f32.mrb[0].mxu0
      %v290 = vadd.f32 0.0, %v289
      %v291 = vpop.f32.mrb[0].mxu0
      %292 = vdwg.mxu0
      %v293 = vmul.f32 %v287, 0.17677669
      %v294 = vmul.f32 %v290, 0.17677669
      %v295 = vsel %vm187, %v293, -1e+30
      %v296 = vsel %vm188, %v294, -1e+30
      %v297 = vsel %vm209, %v295, -inf
      %298 = vmax.xlane.f32.xlu0 %v297
      %v299 = vpop.xlane.xlu0 %298
      %v300 = vsel %vm209, %v296, -inf
      %301 = vmax.xlane.f32.xlu0 %v300
      %v302 = vpop.xlane.xlu0 %301
      %v303 = vsub.f32 %v295, %v299
      %v304 = vsub.f32 %v296, %v302
      %v305 = vmul.f32 %v303, 1.442695
      %v306 = vpow.pop %v305
      %v307 = vmul.f32 %v304, 1.442695
      %v308 = vpow.pop %v307
      %v309 = vsel %vm209, %v306, 0.0
      %310 = vadd.xlane.f32.xlu0 %v309
      %v311 = vpop.xlane.xlu0 %310
      %v312 = vsel %vm209, %v308, 0.0
      %313 = vadd.xlane.f32.xlu0 %v312
      %v314 = vpop.xlane.xlu0 %313
      %v315 = vpack.c.bf16 %v308, %v306
      %317 = vrot.lane.b32.xlu0 %v217, 64
      %v318 = vpop.permute.xlu0 %317
      %v321 = vsel %vm209, %v315, 0
      %323 = vmatprep.subr.bf16.mxu0 0
      %324 = vmatpush1.bf16.msra.mxu0 %v318
      %325 = vmatprep.subr.bf16.mxu0 0
      %326 = vmatpush1.bf16.msra.mxu0 0
      %327 = vmatprep.subr.bf16.mxu0 0
      %328 = vmatpush1.bf16.msra.mxu0 0
      %329 = vmatprep.subr.bf16.mxu0 0
      %330 = vmatpush1.bf16.msra.mxu0 0
      %331 = vmatprep.subr.bf16.mxu0 0
      %332 = vmatpush1.bf16.msra.mxu0 0
      %333 = vmatprep.subr.bf16.mxu0 0
      %334 = vmatpush1.bf16.msra.mxu0 0
      %335 = vmatprep.subr.bf16.mxu0 0
      %336 = vmatpush1.bf16.msra.mxu0 0
      %337 = vmatprep.subr.bf16.mxu0 0
      %338 = vmatpush1.bf16.msra.mxu0 0
      %339 = vmatprep.subr.bf16.mxu0 0
      %340 = vmatpush1.bf16.msra.mxu0 0
      %341 = vmatprep.subr.bf16.mxu0 0
      %342 = vmatpush1.bf16.msra.mxu0 0
      %343 = vmatprep.subr.bf16.mxu0 0
      %344 = vmatpush1.bf16.msra.mxu0 0
      %345 = vmatprep.subr.bf16.mxu0 0
      %346 = vmatpush1.bf16.msra.mxu0 0
      %347 = vmatprep.subr.bf16.mxu0 0
      %348 = vmatpush1.bf16.msra.mxu0 0
      %349 = vmatprep.subr.bf16.mxu0 0
      %350 = vmatpush1.bf16.msra.mxu0 0
      %351 = vmatprep.subr.bf16.mxu0 0
      %352 = vmatpush1.bf16.msra.mxu0 0
      %353 = vmatprep.subr.bf16.mxu0 0
      %354 = vmatpush1.bf16.msra.mxu0 0
      %355 = vmatprep.mubr.bf16.mxu0 0
      %356 = vmatmul.mubr.bf16.gmra.mrb[0].mxu0 %v321
      %v357 = vpop.f32.mrb[0].mxu0
      %v358 = vadd.f32 0.0, %v357
      %v359 = vpop.f32.mrb[0].mxu0
      %v360 = vpop.f32.mrb[0].mxu0
      %v361 = vadd.f32 0.0, %v360
      %v362 = vpop.f32.mrb[0].mxu0
      %363 = vdwg.mxu0
      %v364 = vrcp.pop %v311
      %v365 = vrcp.pop %v314
      %v366 = vmul.f32 %v358, %v364
      %v367 = vmul.f32 %v361, %v365
      %370 = vrot.lane.b32.xlu0 %v172, 32
      %v371 = vpop.permute.xlu0 %370
      %372 = vrot.lane.b32.xlu0 %v173, 32
      %v373 = vpop.permute.xlu0 %372
      %v376 = vmul.f32 %v178, %v371
      %v377 = vmul.f32 %v180, %v373
      %378 = vrot.lane.b32.xlu0 %v220, 80
      %v379 = vpop.permute.xlu0 %378
      %380 = vrot.lane.b32.xlu0 %v221, 80
      %v381 = vpop.permute.xlu0 %380
      %384 = vrot.lane.b32.xlu0 %v178, 112
      %v385 = vpop.permute.xlu0 %384
      %386 = vrot.lane.b32.xlu0 %v180, 112
      %v387 = vpop.permute.xlu0 %386
      %v390 = vsel %vm209, %v379, %v385
      %v391 = vsel %vm209, %v381, %v387
      %v392 = vmul.f32 %v390, %v174
      %v393 = vmul.f32 %v391, %v175
      %396 = vrot.lane.b32.xlu0 %v392, 32
      %v397 = vpop.permute.xlu0 %396
      %398 = vrot.lane.b32.xlu0 %v393, 32
      %v399 = vpop.permute.xlu0 %398
      %v402 = vadd.f32 %v376, %v397
      %v403 = vadd.f32 %v377, %v399
      %v404 = vpack.c.bf16 %v403, %v402
      %406 = vrot.lane.b32.xlu0 %v404, 96
      %v407 = vpop.permute.xlu0 %406
      %v409 = vsel %vm245, %v407, 0
      %411 = vmatprep.subr.bf16.mxu0 0
      %412 = vmatpush1.bf16.xpose.msra.mxu0 %v250
      %413 = vmatprep.subr.bf16.mxu0 0
      %414 = vmatpush1.bf16.xpose.msra.mxu0 0
      %415 = vmatprep.subr.bf16.mxu0 0
      %416 = vmatpush1.bf16.xpose.msra.mxu0 0
      %417 = vmatprep.subr.bf16.mxu0 0
      %418 = vmatpush1.bf16.xpose.msra.mxu0 0
      %419 = vmatprep.subr.bf16.mxu0 0
      %420 = vmatpush1.bf16.xpose.msra.mxu0 0
      %421 = vmatprep.subr.bf16.mxu0 0
      %422 = vmatpush1.bf16.xpose.msra.mxu0 0
      %423 = vmatprep.subr.bf16.mxu0 0
      %424 = vmatpush1.bf16.xpose.msra.mxu0 0
      %425 = vmatprep.subr.bf16.mxu0 0
      %426 = vmatpush1.bf16.xpose.msra.mxu0 0
      %427 = vmatprep.subr.bf16.mxu0 0
      %428 = vmatpush1.bf16.xpose.msra.mxu0 0
      %429 = vmatprep.subr.bf16.mxu0 0
      %430 = vmatpush1.bf16.xpose.msra.mxu0 0
      %431 = vmatprep.subr.bf16.mxu0 0
      %432 = vmatpush1.bf16.xpose.msra.mxu0 0
      %433 = vmatprep.subr.bf16.mxu0 0
      %434 = vmatpush1.bf16.xpose.msra.mxu0 0
      %435 = vmatprep.subr.bf16.mxu0 0
      %436 = vmatpush1.bf16.xpose.msra.mxu0 0
      %437 = vmatprep.subr.bf16.mxu0 0
      %438 = vmatpush1.bf16.xpose.msra.mxu0 0
      %439 = vmatprep.subr.bf16.mxu0 0
      %440 = vmatpush1.bf16.xpose.msra.mxu0 0
      %441 = vmatprep.subr.bf16.mxu0 0
      %442 = vmatpush1.bf16.xpose.msra.mxu0 0
      %443 = vmatprep.mubr.bf16.mxu0 0
      %444 = vmatmul.mubr.bf16.gmra.mrb[0].mxu0 %v409
      %v445 = vpop.f32.mrb[0].mxu0
      %v446 = vadd.f32 0.0, %v445
      %v447 = vpop.f32.mrb[0].mxu0
      %v448 = vpop.f32.mrb[0].mxu0
      %v449 = vadd.f32 0.0, %v448
      %v450 = vpop.f32.mrb[0].mxu0
      %451 = vdwg.mxu0
      %v452 = vmul.f32 %v446, 0.17677669
      %v453 = vmul.f32 %v449, 0.17677669
      %v454 = vsel %vm187, %v452, -1e+30
      %v455 = vsel %vm188, %v453, -1e+30
      %v456 = vsel %vm209, %v454, -inf
      %457 = vmax.xlane.f32.xlu0 %v456
      %v458 = vpop.xlane.xlu0 %457
      %v459 = vsel %vm209, %v455, -inf
      %460 = vmax.xlane.f32.xlu0 %v459
      %v461 = vpop.xlane.xlu0 %460
      %v462 = vsub.f32 %v454, %v458
      %v463 = vsub.f32 %v455, %v461
      %v464 = vmul.f32 %v462, 1.442695
      %v465 = vpow.pop %v464
      %v466 = vmul.f32 %v463, 1.442695
      %v467 = vpow.pop %v466
      %v468 = vsel %vm209, %v465, 0.0
      %469 = vadd.xlane.f32.xlu0 %v468
      %v470 = vpop.xlane.xlu0 %469
      %v471 = vsel %vm209, %v467, 0.0
      %472 = vadd.xlane.f32.xlu0 %v471
      %v473 = vpop.xlane.xlu0 %472
      %v474 = vpack.c.bf16 %v467, %v465
      %v476 = vsel %vm209, %v474, 0
      %478 = vmatprep.subr.bf16.mxu0 0
      %479 = vmatpush1.bf16.msra.mxu0 %v318
      %480 = vmatprep.subr.bf16.mxu0 0
      %481 = vmatpush1.bf16.msra.mxu0 0
      %482 = vmatprep.subr.bf16.mxu0 0
      %483 = vmatpush1.bf16.msra.mxu0 0
      %484 = vmatprep.subr.bf16.mxu0 0
      %485 = vmatpush1.bf16.msra.mxu0 0
      %486 = vmatprep.subr.bf16.mxu0 0
      %487 = vmatpush1.bf16.msra.mxu0 0
      %488 = vmatprep.subr.bf16.mxu0 0
      %489 = vmatpush1.bf16.msra.mxu0 0
      %490 = vmatprep.subr.bf16.mxu0 0
      %491 = vmatpush1.bf16.msra.mxu0 0
      %492 = vmatprep.subr.bf16.mxu0 0
      %493 = vmatpush1.bf16.msra.mxu0 0
      %494 = vmatprep.subr.bf16.mxu0 0
      %495 = vmatpush1.bf16.msra.mxu0 0
      %496 = vmatprep.subr.bf16.mxu0 0
      %497 = vmatpush1.bf16.msra.mxu0 0
      %498 = vmatprep.subr.bf16.mxu0 0
      %499 = vmatpush1.bf16.msra.mxu0 0
      %500 = vmatprep.subr.bf16.mxu0 0
      %501 = vmatpush1.bf16.msra.mxu0 0
      %502 = vmatprep.subr.bf16.mxu0 0
      %503 = vmatpush1.bf16.msra.mxu0 0
      %504 = vmatprep.subr.bf16.mxu0 0
      %505 = vmatpush1.bf16.msra.mxu0 0
      %506 = vmatprep.subr.bf16.mxu0 0
      %507 = vmatpush1.bf16.msra.mxu0 0
      %508 = vmatprep.subr.bf16.mxu0 0
      %509 = vmatpush1.bf16.msra.mxu0 0
      %510 = vmatprep.mubr.bf16.mxu0 0
      %511 = vmatmul.mubr.bf16.gmra.mrb[0].mxu0 %v476
      %v512 = vpop.f32.mrb[0].mxu0
      %v513 = vadd.f32 0.0, %v512
      %v514 = vpop.f32.mrb[0].mxu0
      %v515 = vpop.f32.mrb[0].mxu0
      %v516 = vadd.f32 0.0, %v515
      %v517 = vpop.f32.mrb[0].mxu0
      %518 = vdwg.mxu0
      %v519 = vrcp.pop %v470
      %v520 = vrcp.pop %v473
      %v521 = vmul.f32 %v513, %v519
      %v522 = vmul.f32 %v516, %v520
      %v523 = vmul.f32 %v179, %v371
      %v524 = vmul.f32 %v181, %v373
      %525 = vrot.lane.b32.xlu0 %v191, 80
      %v526 = vpop.permute.xlu0 %525
      %527 = vrot.lane.b32.xlu0 %v192, 80
      %v528 = vpop.permute.xlu0 %527
      %531 = vrot.lane.b32.xlu0 %v179, 112
      %v532 = vpop.permute.xlu0 %531
      %533 = vrot.lane.b32.xlu0 %v181, 112
      %v534 = vpop.permute.xlu0 %533
      %v537 = vsel %vm209, %v526, %v532
      %v538 = vsel %vm209, %v528, %v534
      %v539 = vmul.f32 %v537, %v174
      %v540 = vmul.f32 %v538, %v175
      %543 = vrot.lane.b32.xlu0 %v539, 32
      %v544 = vpop.permute.xlu0 %543
      %545 = vrot.lane.b32.xlu0 %v540, 32
      %v546 = vpop.permute.xlu0 %545
      %v549 = vadd.f32 %v523, %v544
      %v550 = vadd.f32 %v524, %v546
      %v551 = vpack.c.bf16 %v550, %v549
      %552 = vrot.lane.b32.xlu0 %v172, 64
      %v553 = vpop.permute.xlu0 %552
      %554 = vrot.lane.b32.xlu0 %v173, 64
      %v555 = vpop.permute.xlu0 %554
      %v558 = vmul.f32 %v178, %v553
      %v559 = vmul.f32 %v180, %v555
      %560 = vrot.lane.b32.xlu0 %v220, 48
      %v561 = vpop.permute.xlu0 %560
      %562 = vrot.lane.b32.xlu0 %v221, 48
      %v563 = vpop.permute.xlu0 %562
      %566 = vrot.lane.b32.xlu0 %v178, 80
      %v567 = vpop.permute.xlu0 %566
      %568 = vrot.lane.b32.xlu0 %v180, 80
      %v569 = vpop.permute.xlu0 %568
      %v572 = vsel %vm209, %v561, %v567
      %v573 = vsel %vm209, %v563, %v569
      %v574 = vmul.f32 %v572, %v174
      %v575 = vmul.f32 %v573, %v175
      %578 = vrot.lane.b32.xlu0 %v574, 64
      %v579 = vpop.permute.xlu0 %578
      %580 = vrot.lane.b32.xlu0 %v575, 64
      %v581 = vpop.permute.xlu0 %580
      %v584 = vadd.f32 %v558, %v579
      %v585 = vadd.f32 %v559, %v581
      %v586 = vpack.c.bf16 %v585, %v584
      %588 = vrot.lane.b32.xlu0 %v586, 64
      %v589 = vpop.permute.xlu0 %588
      %591 = vrot.lane.b32.xlu0 %v551, 96
      %v592 = vpop.permute.xlu0 %591
      %v594 = vsel %vm245, %v589, 0
      %v597 = vsel %vm245, %v592, 0
      %599 = vmatprep.subr.bf16.mxu0 0
      %600 = vmatpush1.bf16.xpose.msra.mxu0 %v597
      %601 = vmatprep.subr.bf16.mxu0 0
      %602 = vmatpush1.bf16.xpose.msra.mxu0 0
      %603 = vmatprep.subr.bf16.mxu0 0
      %604 = vmatpush1.bf16.xpose.msra.mxu0 0
      %605 = vmatprep.subr.bf16.mxu0 0
      %606 = vmatpush1.bf16.xpose.msra.mxu0 0
      %607 = vmatprep.subr.bf16.mxu0 0
      %608 = vmatpush1.bf16.xpose.msra.mxu0 0
      %609 = vmatprep.subr.bf16.mxu0 0
      %610 = vmatpush1.bf16.xpose.msra.mxu0 0
      %611 = vmatprep.subr.bf16.mxu0 0
      %612 = vmatpush1.bf16.xpose.msra.mxu0 0
      %613 = vmatprep.subr.bf16.mxu0 0
      %614 = vmatpush1.bf16.xpose.msra.mxu0 0
      %615 = vmatprep.subr.bf16.mxu0 0
      %616 = vmatpush1.bf16.xpose.msra.mxu0 0
      %617 = vmatprep.subr.bf16.mxu0 0
      %618 = vmatpush1.bf16.xpose.msra.mxu0 0
      %619 = vmatprep.subr.bf16.mxu0 0
      %620 = vmatpush1.bf16.xpose.msra.mxu0 0
      %621 = vmatprep.subr.bf16.mxu0 0
      %622 = vmatpush1.bf16.xpose.msra.mxu0 0
      %623 = vmatprep.subr.bf16.mxu0 0
      %624 = vmatpush1.bf16.xpose.msra.mxu0 0
      %625 = vmatprep.subr.bf16.mxu0 0
      %626 = vmatpush1.bf16.xpose.msra.mxu0 0
      %627 = vmatprep.subr.bf16.mxu0 0
      %628 = vmatpush1.bf16.xpose.msra.mxu0 0
      %629 = vmatprep.subr.bf16.mxu0 0
      %630 = vmatpush1.bf16.xpose.msra.mxu0 0
      %631 = vmatprep.mubr.bf16.mxu0 0
      %632 = vmatmul.mubr.bf16.gmra.mrb[0].mxu0 %v594
      %v633 = vpop.f32.mrb[0].mxu0
      %v634 = vadd.f32 0.0, %v633
      %v635 = vpop.f32.mrb[0].mxu0
      %v636 = vpop.f32.mrb[0].mxu0
      %v637 = vadd.f32 0.0, %v636
      %v638 = vpop.f32.mrb[0].mxu0
      %639 = vdwg.mxu0
      %v640 = vmul.f32 %v634, 0.17677669
      %v641 = vmul.f32 %v637, 0.17677669
      %v642 = vsel %vm187, %v640, -1e+30
      %v643 = vsel %vm188, %v641, -1e+30
      %v644 = vsel %vm209, %v642, -inf
      %645 = vmax.xlane.f32.xlu0 %v644
      %v646 = vpop.xlane.xlu0 %645
      %v647 = vsel %vm209, %v643, -inf
      %648 = vmax.xlane.f32.xlu0 %v647
      %v649 = vpop.xlane.xlu0 %648
      %v650 = vsub.f32 %v642, %v646
      %v651 = vsub.f32 %v643, %v649
      %v652 = vmul.f32 %v650, 1.442695
      %v653 = vpow.pop %v652
      %v654 = vmul.f32 %v651, 1.442695
      %v655 = vpow.pop %v654
      %v656 = vsel %vm209, %v653, 0.0
      %657 = vadd.xlane.f32.xlu0 %v656
      %v658 = vpop.xlane.xlu0 %657
      %v659 = vsel %vm209, %v655, 0.0
      %660 = vadd.xlane.f32.xlu0 %v659
      %v661 = vpop.xlane.xlu0 %660
      %v662 = vpack.c.bf16 %v655, %v653
      %663 = vrot.lane.b32.xlu0 %v217, 32
      %v664 = vpop.permute.xlu0 %663
      %v667 = vsel %vm209, %v662, 0
      %669 = vmatprep.subr.bf16.mxu0 0
      %670 = vmatpush1.bf16.msra.mxu0 %v664
      %671 = vmatprep.subr.bf16.mxu0 0
      %672 = vmatpush1.bf16.msra.mxu0 0
      %673 = vmatprep.subr.bf16.mxu0 0
      %674 = vmatpush1.bf16.msra.mxu0 0
      %675 = vmatprep.subr.bf16.mxu0 0
      %676 = vmatpush1.bf16.msra.mxu0 0
      %677 = vmatprep.subr.bf16.mxu0 0
      %678 = vmatpush1.bf16.msra.mxu0 0
      %679 = vmatprep.subr.bf16.mxu0 0
      %680 = vmatpush1.bf16.msra.mxu0 0
      %681 = vmatprep.subr.bf16.mxu0 0
      %682 = vmatpush1.bf16.msra.mxu0 0
      %683 = vmatprep.subr.bf16.mxu0 0
      %684 = vmatpush1.bf16.msra.mxu0 0
      %685 = vmatprep.subr.bf16.mxu0 0
      %686 = vmatpush1.bf16.msra.mxu0 0
      %687 = vmatprep.subr.bf16.mxu0 0
      %688 = vmatpush1.bf16.msra.mxu0 0
      %689 = vmatprep.subr.bf16.mxu0 0
      %690 = vmatpush1.bf16.msra.mxu0 0
      %691 = vmatprep.subr.bf16.mxu0 0
      %692 = vmatpush1.bf16.msra.mxu0 0
      %693 = vmatprep.subr.bf16.mxu0 0
      %694 = vmatpush1.bf16.msra.mxu0 0
      %695 = vmatprep.subr.bf16.mxu0 0
      %696 = vmatpush1.bf16.msra.mxu0 0
      %697 = vmatprep.subr.bf16.mxu0 0
      %698 = vmatpush1.bf16.msra.mxu0 0
      %699 = vmatprep.subr.bf16.mxu0 0
      %700 = vmatpush1.bf16.msra.mxu0 0
      %701 = vmatprep.mubr.bf16.mxu0 0
      %702 = vmatmul.mubr.bf16.gmra.mrb[0].mxu0 %v667
      %v703 = vpop.f32.mrb[0].mxu0
      %v704 = vadd.f32 0.0, %v703
      %v705 = vpop.f32.mrb[0].mxu0
      %v706 = vpop.f32.mrb[0].mxu0
      %v707 = vadd.f32 0.0, %v706
      %v708 = vpop.f32.mrb[0].mxu0
      %709 = vdwg.mxu0
      %v710 = vrcp.pop %v658
      %v711 = vrcp.pop %v661
      %v712 = vmul.f32 %v704, %v710
      %v713 = vmul.f32 %v707, %v711
      %714 = vrot.lane.b32.xlu0 %v172, 96
      %v715 = vpop.permute.xlu0 %714
      %716 = vrot.lane.b32.xlu0 %v173, 96
      %v717 = vpop.permute.xlu0 %716
      %v720 = vmul.f32 %v178, %v715
      %v721 = vmul.f32 %v180, %v717
      %722 = vrot.lane.b32.xlu0 %v220, 16
      %v723 = vpop.permute.xlu0 %722
      %724 = vrot.lane.b32.xlu0 %v221, 16
      %v725 = vpop.permute.xlu0 %724
      %728 = vrot.lane.b32.xlu0 %v178, 48
      %v729 = vpop.permute.xlu0 %728
      %730 = vrot.lane.b32.xlu0 %v180, 48
      %v731 = vpop.permute.xlu0 %730
      %v734 = vsel %vm209, %v723, %v729
      %v735 = vsel %vm209, %v725, %v731
      %v736 = vmul.f32 %v734, %v174
      %v737 = vmul.f32 %v735, %v175
      %740 = vrot.lane.b32.xlu0 %v736, 96
      %v741 = vpop.permute.xlu0 %740
      %742 = vrot.lane.b32.xlu0 %v737, 96
      %v743 = vpop.permute.xlu0 %742
      %v746 = vadd.f32 %v720, %v741
      %v747 = vadd.f32 %v721, %v743
      %v748 = vpack.c.bf16 %v747, %v746
      %750 = vrot.lane.b32.xlu0 %v748, 32
      %v751 = vpop.permute.xlu0 %750
      %v753 = vsel %vm245, %v751, 0
      %755 = vmatprep.subr.bf16.mxu0 0
      %756 = vmatpush1.bf16.xpose.msra.mxu0 %v597
      %757 = vmatprep.subr.bf16.mxu0 0
      %758 = vmatpush1.bf16.xpose.msra.mxu0 0
      %759 = vmatprep.subr.bf16.mxu0 0
      %760 = vmatpush1.bf16.xpose.msra.mxu0 0
      %761 = vmatprep.subr.bf16.mxu0 0
      %762 = vmatpush1.bf16.xpose.msra.mxu0 0
      %763 = vmatprep.subr.bf16.mxu0 0
      %764 = vmatpush1.bf16.xpose.msra.mxu0 0
      %765 = vmatprep.subr.bf16.mxu0 0
      %766 = vmatpush1.bf16.xpose.msra.mxu0 0
      %767 = vmatprep.subr.bf16.mxu0 0
      %768 = vmatpush1.bf16.xpose.msra.mxu0 0
      %769 = vmatprep.subr.bf16.mxu0 0
      %770 = vmatpush1.bf16.xpose.msra.mxu0 0
      %771 = vmatprep.subr.bf16.mxu0 0
      %772 = vmatpush1.bf16.xpose.msra.mxu0 0
      %773 = vmatprep.subr.bf16.mxu0 0
      %774 = vmatpush1.bf16.xpose.msra.mxu0 0
      %775 = vmatprep.subr.bf16.mxu0 0
      %776 = vmatpush1.bf16.xpose.msra.mxu0 0
      %777 = vmatprep.subr.bf16.mxu0 0
      %778 = vmatpush1.bf16.xpose.msra.mxu0 0
      %779 = vmatprep.subr.bf16.mxu0 0
      %780 = vmatpush1.bf16.xpose.msra.mxu0 0
      %781 = vmatprep.subr.bf16.mxu0 0
      %782 = vmatpush1.bf16.xpose.msra.mxu0 0
      %783 = vmatprep.subr.bf16.mxu0 0
      %784 = vmatpush1.bf16.xpose.msra.mxu0 0
      %785 = vmatprep.subr.bf16.mxu0 0
      %786 = vmatpush1.bf16.xpose.msra.mxu0 0
      %787 = vmatprep.mubr.bf16.mxu0 0
      %788 = vmatmul.mubr.bf16.gmra.mrb[0].mxu0 %v753
      %v789 = vpop.f32.mrb[0].mxu0
      %v790 = vadd.f32 0.0, %v789
      %v791 = vpop.f32.mrb[0].mxu0
      %v792 = vpop.f32.mrb[0].mxu0
      %v793 = vadd.f32 0.0, %v792
      %v794 = vpop.f32.mrb[0].mxu0
      %795 = vdwg.mxu0
      %v796 = vmul.f32 %v790, 0.17677669
      %v797 = vmul.f32 %v793, 0.17677669
      %v798 = vsel %vm187, %v796, -1e+30
      %v799 = vsel %vm188, %v797, -1e+30
      %v800 = vsel %vm209, %v798, -inf
      %801 = vmax.xlane.f32.xlu0 %v800
      %v802 = vpop.xlane.xlu0 %801
      %v803 = vsel %vm209, %v799, -inf
      %804 = vmax.xlane.f32.xlu0 %v803
      %v805 = vpop.xlane.xlu0 %804
      %v806 = vsub.f32 %v798, %v802
      %v807 = vsub.f32 %v799, %v805
      %v808 = vmul.f32 %v806, 1.442695
      %v809 = vpow.pop %v808
      %v810 = vmul.f32 %v807, 1.442695
      %v811 = vpow.pop %v810
      %v812 = vsel %vm209, %v809, 0.0
      %813 = vadd.xlane.f32.xlu0 %v812
      %v814 = vpop.xlane.xlu0 %813
      %v815 = vsel %vm209, %v811, 0.0
      %816 = vadd.xlane.f32.xlu0 %v815
      %v817 = vpop.xlane.xlu0 %816
      %v818 = vpack.c.bf16 %v811, %v809
      %v820 = vsel %vm209, %v818, 0
      %822 = vmatprep.subr.bf16.mxu0 0
      %823 = vmatpush1.bf16.msra.mxu0 %v664
      %824 = vmatprep.subr.bf16.mxu0 0
      %825 = vmatpush1.bf16.msra.mxu0 0
      %826 = vmatprep.subr.bf16.mxu0 0
      %827 = vmatpush1.bf16.msra.mxu0 0
      %828 = vmatprep.subr.bf16.mxu0 0
      %829 = vmatpush1.bf16.msra.mxu0 0
      %830 = vmatprep.subr.bf16.mxu0 0
      %831 = vmatpush1.bf16.msra.mxu0 0
      %832 = vmatprep.subr.bf16.mxu0 0
      %833 = vmatpush1.bf16.msra.mxu0 0
      %834 = vmatprep.subr.bf16.mxu0 0
      %835 = vmatpush1.bf16.msra.mxu0 0
      %836 = vmatprep.subr.bf16.mxu0 0
      %837 = vmatpush1.bf16.msra.mxu0 0
      %838 = vmatprep.subr.bf16.mxu0 0
      %839 = vmatpush1.bf16.msra.mxu0 0
      %840 = vmatprep.subr.bf16.mxu0 0
      %841 = vmatpush1.bf16.msra.mxu0 0
      %842 = vmatprep.subr.bf16.mxu0 0
      %843 = vmatpush1.bf16.msra.mxu0 0
      %844 = vmatprep.subr.bf16.mxu0 0
      %845 = vmatpush1.bf16.msra.mxu0 0
      %846 = vmatprep.subr.bf16.mxu0 0
      %847 = vmatpush1.bf16.msra.mxu0 0
      %848 = vmatprep.subr.bf16.mxu0 0
      %849 = vmatpush1.bf16.msra.mxu0 0
      %850 = vmatprep.subr.bf16.mxu0 0
      %851 = vmatpush1.bf16.msra.mxu0 0
      %852 = vmatprep.subr.bf16.mxu0 0
      %853 = vmatpush1.bf16.msra.mxu0 0
      %854 = vmatprep.mubr.bf16.mxu0 0
      %855 = vmatmul.mubr.bf16.gmra.mrb[0].mxu0 %v820
      %v856 = vpop.f32.mrb[0].mxu0
      %v857 = vadd.f32 0.0, %v856
      %v858 = vpop.f32.mrb[0].mxu0
      %v859 = vpop.f32.mrb[0].mxu0
      %v860 = vadd.f32 0.0, %v859
      %v861 = vpop.f32.mrb[0].mxu0
      %862 = vdwg.mxu0
      %v863 = vrcp.pop %v814
      %v864 = vrcp.pop %v817
      %v865 = vmul.f32 %v857, %v863
      %v866 = vmul.f32 %v860, %v864
      %869 = vrot.lane.b32.xlu0 %v521, 32
      %v870 = vpop.permute.xlu0 %869
      %871 = vrot.lane.b32.xlu0 %v522, 32
      %v872 = vpop.permute.xlu0 %871
      %877 = vrot.lane.b32.xlu0 %v712, 64
      %v878 = vpop.permute.xlu0 %877
      %879 = vrot.lane.b32.xlu0 %v713, 64
      %v880 = vpop.permute.xlu0 %879
      %885 = vrot.lane.b32.xlu0 %v865, 96
      %v886 = vpop.permute.xlu0 %885
      %887 = vrot.lane.b32.xlu0 %v866, 96
      %v888 = vpop.permute.xlu0 %887
      %v891 = vsel %vm245, %v366, %v870
      %v892 = vsel %vm245, %v367, %v872
      %vm893 = vcmask 523264
      %v894 = vsel %vm893, %v891, %v878
      %v895 = vsel %vm893, %v892, %v880
      %vm896 = vcmask 785408
      %v897 = vsel %vm896, %v894, %v886
      %v898 = vsel %vm896, %v895, %v888
      %v899 = vpack.c.bf16 %v898, %v897
      %v901 = vunpack.c.l.b16 %v899
      %v902 = vunpack.c.h.b16 %v899
      %v903 = vpack.c.b16 %v901, %v901
      %v904 = vpack.c.b16 %v902, %v902
      %907 = vst [vmem:[%s170] sm:$0xf] %v903
      %908 = vst [vmem:[%s170 + $0x4] sm:$0xf] %v904
      %p909 = scmp.lt.s32.totalorder %s14, 1
      %s910 = scalar_select %p909, %s14, 1
      %s911 = smul.addr %s910, 2
      %s912 = smul.addr %s911, 4
      %s913 = scalar_lea.vmem %s3, %s912
      // Predicated region
      $region33: #{internlm2_forward.10} parent=31 // pred_check
        %p914 = pneg %p100
      $region34: #{internlm2_forward.10} parent=31 // pred_check_branch
        %916 = sbr.rel (%p914) target = $region36
      $region35: #{internlm2_forward.10} parent=31 // pred_region
        _
      $region36: #{internlm2_forward.10} parent=31 // pred_fallthru
        _
    $region32: #{internlm2_forward.10} parent=5 // pred_fallthru
      _
    %p917 = scmp.le.s32.totalorder 2, %s9
    // Predicated region
    $region37: #{internlm2_forward.10} parent=5 // pred_check
      %p918 = pneg %p917
    $region38: #{internlm2_forward.10} parent=5 // pred_check_branch
      %920 = sbr.rel (%p918) target = $region40
    $region39: #{internlm2_forward.10} parent=5 // pred_region
      %s921 = ssub.s32 %s9, 2
      // Predicated region
      $region41: #{internlm2_forward.10} parent=39 // pred_check
        %p922 = pneg %p106
      $region42: #{internlm2_forward.10} parent=39 // pred_check_branch
        %924 = sbr.rel (%p922) target = $region44
      $region43: #{internlm2_forward.10} parent=39 // pred_region
        %p925 = scmp.lt.s32.totalorder %s15, 1
        %s926 = scalar_select %p925, %s15, 1
        %s927 = smul.addr %s926, 2
        %s928 = smul.addr %s927, 4
        %s929 = scalar_lea.vmem %s3, %s928
      $region44: #{internlm2_forward.10} parent=39 // pred_fallthru
        _
    $region40: #{internlm2_forward.10} parent=5 // pred_fallthru
      _
  $region6: #{internlm2_forward.10} parent=0 // loop_footer
    %s13 = sadd.s32 1, %s9
  $region7: #{internlm2_forward.10} parent=0 // loop_footer_branch
    %8 = sbr.rel target = $region3
  $region8: #{internlm2_forward.10} parent=0 // loop_exit
    _

// kernel: internlm2_forward.11
$region0: #{internlm2_forward.11}
  #allocation0 [shape = 'u32[]', space=smem, size = 0x4, offset = 0x4, fixed_abs, tag = 'smem constant byte address 0x4 - core index']
  #allocation1 [shape = 'u32[144,128]{1,0:T(1,128)}', space=vmem, size = 0x12000, scoped, tag = 'internal scratch']
  #allocation2 [shape = 'f32[32,128]{1,0:T(8,128)}', space=vmem, size = 0x4000, scoped, tag = 'scratch operand']
  %s0 = inlined_call_operand.vmem [shape: bf16[32,128], index: 0, kind: input, shape index: {}]
  %s1 = inlined_call_operand.vmem [shape: bf16[128,128], index: 1, kind: input, shape index: {}]
  %s2 = inlined_call_operand.vmem [shape: bf16[32,128], index: 2, kind: input, shape index: {}]
  %s3 = inlined_call_operand.vmem [shape: bf16[32,128], index: 3, kind: output, shape index: {}]
  %s4 = sld [smem:[#allocation0]]
  $region30: #{internlm2_forward.11} parent=0
    _
  %s6 = ssub.s32 1, %s4
  %s7 = scalar_select 0, %s6, %s4
  // Predicated region
  $region2: #{internlm2_forward.11} parent=0 // pred_check
    _
  $region3: #{internlm2_forward.11} parent=0 // pred_check_branch
    %9 = sbr.rel (0) target = $region5
  $region4: #{internlm2_forward.11} parent=0 // pred_region
    _
  $region5: #{internlm2_forward.11} parent=0 // pred_fallthru
    _
  // Predicated region
  $region6: #{internlm2_forward.11} parent=0 // pred_check
    _
  $region7: #{internlm2_forward.11} parent=0 // pred_check_branch
    %11 = sbr.rel (0) target = $region9
  $region8: #{internlm2_forward.11} parent=0 // pred_region
    _
  $region9: #{internlm2_forward.11} parent=0 // pred_fallthru
    _
  // Predicated region
  $region10: #{internlm2_forward.11} parent=0 // pred_check
    _
  $region11: #{internlm2_forward.11} parent=0 // pred_check_branch
    %13 = sbr.rel (0) target = $region13
  $region12: #{internlm2_forward.11} parent=0 // pred_region
    _
  $region13: #{internlm2_forward.11} parent=0 // pred_fallthru
    _
  %p15 = scmp.eq.s32.totalorder 0, 0
  // Predicated region
  $region14: #{internlm2_forward.11} parent=0 // pred_check
    %p16 = pneg %p15
  $region15: #{internlm2_forward.11} parent=0 // pred_check_branch
    %18 = sbr.rel (%p16) target = $region17
  $region16: #{internlm2_forward.11} parent=0 // pred_region
    %19 = vst [vmem:[#allocation2] sm:$0xff] 0.0
    %20 = vst [vmem:[#allocation2 + $0x8] sm:$0xff] 0.0
    %21 = vst [vmem:[#allocation2 + $0x10] sm:$0xff] 0.0
    %22 = vst [vmem:[#allocation2 + $0x18] sm:$0xff] 0.0
  $region17: #{internlm2_forward.11} parent=0 // pred_fallthru
    _
  %v23 = vld [vmem:[#allocation2] sm:$0xff]
  %v24 = vld [vmem:[#allocation2 + $0x8] sm:$0xff]
  %v25 = vld [vmem:[#allocation2 + $0x10] sm:$0xff]
  %v26 = vld [vmem:[#allocation2 + $0x18] sm:$0xff]
  %v27 = vld [vmem:[%s0] sm:$0xf]
  %v28 = vld [vmem:[%s0 + $0x4] sm:$0xf]
  %v29 = vld [vmem:[%s0 + $0x8] sm:$0xf]
  %v30 = vld [vmem:[%s0 + $0xc] sm:$0xf]
  %v31 = vld [vmem:[%s1] sm:$0xf]
  %v32 = vld [vmem:[%s1 + $0x4] sm:$0xf]
  %v33 = vld [vmem:[%s1 + $0x8] sm:$0xf]
  %v34 = vld [vmem:[%s1 + $0xc] sm:$0xf]
  %v35 = vld [vmem:[%s1 + $0x10] sm:$0xf]
  %v36 = vld [vmem:[%s1 + $0x14] sm:$0xf]
  %v37 = vld [vmem:[%s1 + $0x18] sm:$0xf]
  %v38 = vld [vmem:[%s1 + $0x1c] sm:$0xf]
  %v39 = vld [vmem:[%s1 + $0x20] sm:$0xf]
  %v40 = vld [vmem:[%s1 + $0x24] sm:$0xf]
  %v41 = vld [vmem:[%s1 + $0x28] sm:$0xf]
  %v42 = vld [vmem:[%s1 + $0x2c] sm:$0xf]
  %v43 = vld [vmem:[%s1 + $0x30] sm:$0xf]
  %v44 = vld [vmem:[%s1 + $0x34] sm:$0xf]
  %v45 = vld [vmem:[%s1 + $0x38] sm:$0xf]
  %v46 = vld [vmem:[%s1 + $0x3c] sm:$0xf]
  %v51 = vunpack.c.l.b16 %v27
  %v52 = vunpack.c.l.b16 %v28
  %v53 = vunpack.c.l.b16 %v29
  %v54 = vunpack.c.l.b16 %v30
  %v55 = vpack.c.b16 %v52, %v51
  %v56 = vpack.c.b16 %v54, %v53
  %v75 = vunpack.c.l.b16 %v31
  %v76 = vunpack.c.l.b16 %v32
  %v77 = vunpack.c.l.b16 %v33
  %v78 = vunpack.c.l.b16 %v34
  %v79 = vunpack.c.l.b16 %v35
  %v80 = vunpack.c.l.b16 %v36
  %v81 = vunpack.c.l.b16 %v37
  %v82 = vunpack.c.l.b16 %v38
  %v83 = vunpack.c.l.b16 %v39
  %v84 = vunpack.c.l.b16 %v40
  %v85 = vunpack.c.l.b16 %v41
  %v86 = vunpack.c.l.b16 %v42
  %v87 = vunpack.c.l.b16 %v43
  %v88 = vunpack.c.l.b16 %v44
  %v89 = vunpack.c.l.b16 %v45
  %v90 = vunpack.c.l.b16 %v46
  %v91 = vpack.c.b16 %v76, %v75
  %v92 = vpack.c.b16 %v78, %v77
  %v93 = vpack.c.b16 %v80, %v79
  %v94 = vpack.c.b16 %v82, %v81
  %v95 = vpack.c.b16 %v84, %v83
  %v96 = vpack.c.b16 %v86, %v85
  %v97 = vpack.c.b16 %v88, %v87
  %v98 = vpack.c.b16 %v90, %v89
  %107 = vmatprep.subr.bf16.mxu0 0
  %108 = vmatpush1.bf16.msra.mxu0 %v91
  %109 = vmatprep.subr.bf16.mxu0 0
  %110 = vmatpush1.bf16.msra.mxu0 %v92
  %111 = vmatprep.subr.bf16.mxu0 0
  %112 = vmatpush1.bf16.msra.mxu0 %v93
  %113 = vmatprep.subr.bf16.mxu0 0
  %114 = vmatpush1.bf16.msra.mxu0 %v94
  %115 = vmatprep.subr.bf16.mxu0 0
  %116 = vmatpush1.bf16.msra.mxu0 %v95
  %117 = vmatprep.subr.bf16.mxu0 0
  %118 = vmatpush1.bf16.msra.mxu0 %v96
  %119 = vmatprep.subr.bf16.mxu0 0
  %120 = vmatpush1.bf16.msra.mxu0 %v97
  %121 = vmatprep.subr.bf16.mxu0 0
  %122 = vmatpush1.bf16.msra.mxu0 %v98
  %123 = vmatprep.subr.bf16.mxu0 0
  %124 = vmatpush1.bf16.msra.mxu0 0
  %125 = vmatprep.subr.bf16.mxu0 0
  %126 = vmatpush1.bf16.msra.mxu0 0
  %127 = vmatprep.subr.bf16.mxu0 0
  %128 = vmatpush1.bf16.msra.mxu0 0
  %129 = vmatprep.subr.bf16.mxu0 0
  %130 = vmatpush1.bf16.msra.mxu0 0
  %131 = vmatprep.subr.bf16.mxu0 0
  %132 = vmatpush1.bf16.msra.mxu0 0
  %133 = vmatprep.subr.bf16.mxu0 0
  %134 = vmatpush1.bf16.msra.mxu0 0
  %135 = vmatprep.subr.bf16.mxu0 0
  %136 = vmatpush1.bf16.msra.mxu0 0
  %137 = vmatprep.subr.bf16.mxu0 0
  %138 = vmatpush1.bf16.msra.mxu0 0
  %139 = vmatprep.mubr.bf16.mxu0 0
  %140 = vmatmul.mubr.bf16.gmra.mrb[0].mxu0 %v55
  %v141 = vpop.f32.mrb[0].mxu0
  %v142 = vadd.f32 0.0, %v141
  %v143 = vpop.f32.mrb[0].mxu0
  %v144 = vpop.f32.mrb[0].mxu0
  %v145 = vadd.f32 0.0, %v144
  %v146 = vpop.f32.mrb[0].mxu0
  %147 = vmatprep.mubr.bf16.mxu0 0
  %148 = vmatmul.mubr.bf16.gmra.mrb[0].mxu0 %v56
  %v149 = vpop.f32.mrb[0].mxu0
  %v150 = vadd.f32 0.0, %v149
  %v151 = vpop.f32.mrb[0].mxu0
  %v152 = vpop.f32.mrb[0].mxu0
  %v153 = vadd.f32 0.0, %v152
  %v154 = vpop.f32.mrb[0].mxu0
  %155 = vdwg.mxu0
  %v156 = vadd.f32 %v23, %v142
  %v157 = vadd.f32 %v24, %v145
  %v158 = vadd.f32 %v25, %v150
  %v159 = vadd.f32 %v26, %v153
  %160 = vst [vmem:[#allocation2] sm:$0xff] %v156
  %161 = vst [vmem:[#allocation2 + $0x8] sm:$0xff] %v157
  %162 = vst [vmem:[#allocation2 + $0x10] sm:$0xff] %v158
  %163 = vst [vmem:[#allocation2 + $0x18] sm:$0xff] %v159
  // Predicated region
  $region18: #{internlm2_forward.11} parent=0 // pred_check
    %p164 = pneg %p15
  $region19: #{internlm2_forward.11} parent=0 // pred_check_branch
    %166 = sbr.rel (%p164) target = $region21
  $region20: #{internlm2_forward.11} parent=0 // pred_region
    %v167 = vld [vmem:[#allocation2] sm:$0xff]
    %v168 = vld [vmem:[#allocation2 + $0x8] sm:$0xff]
    %v169 = vld [vmem:[#allocation2 + $0x10] sm:$0xff]
    %v170 = vld [vmem:[#allocation2 + $0x18] sm:$0xff]
    %v171 = vld [vmem:[%s2] sm:$0xf]
    %v172 = vld [vmem:[%s2 + $0x4] sm:$0xf]
    %v173 = vld [vmem:[%s2 + $0x8] sm:$0xf]
    %v174 = vld [vmem:[%s2 + $0xc] sm:$0xf]
    %v175 = vunpack.c.l.bf16 %v171
    %v176 = vunpack.c.l.bf16 %v172
    %v177 = vunpack.c.l.bf16 %v173
    %v178 = vunpack.c.l.bf16 %v174
    %v179 = vadd.f32 %v167, %v175
    %v180 = vadd.f32 %v168, %v176
    %v181 = vadd.f32 %v169, %v177
    %v182 = vadd.f32 %v170, %v178
    %v183 = vpack.c.bf16 %v180, %v179
    %v184 = vpack.c.bf16 %v182, %v181
    %v187 = vunpack.c.l.b16 %v183
    %v188 = vunpack.c.h.b16 %v183
    %v189 = vunpack.c.l.b16 %v184
    %v190 = vunpack.c.h.b16 %v184
    %v191 = vpack.c.b16 %v187, %v187
    %v192 = vpack.c.b16 %v188, %v188
    %v193 = vpack.c.b16 %v189, %v189
    %v194 = vpack.c.b16 %v190, %v190
    %199 = vst [vmem:[%s3] sm:$0xf] %v191
    %200 = vst [vmem:[%s3 + $0x4] sm:$0xf] %v192
    %201 = vst [vmem:[%s3 + $0x8] sm:$0xf] %v193
    %202 = vst [vmem:[%s3 + $0xc] sm:$0xf] %v194
  $region21: #{internlm2_forward.11} parent=0 // pred_fallthru
    _
  // Predicated region
  $region22: #{internlm2_forward.11} parent=0 // pred_check
    _
  $region23: #{internlm2_forward.11} parent=0 // pred_check_branch
    %204 = sbr.rel (0) target = $region25
  $region24: #{internlm2_forward.11} parent=0 // pred_region
    _
  $region25: #{internlm2_forward.11} parent=0 // pred_fallthru
    _
  // Predicated region
  $region26: #{internlm2_forward.11} parent=0 // pred_check
    _
  $region27: #{internlm2_forward.11} parent=0 // pred_check_branch
    %206 = sbr.rel (0) target = $region29
  $region28: #{internlm2_forward.11} parent=0 // pred_region
    _
  $region29: #{internlm2_forward.11} parent=0 // pred_fallthru
    _

// kernel: internlm2_forward.12
$region0: #{internlm2_forward.12}
  #allocation0 [shape = 'u32[]', space=smem, size = 0x4, offset = 0x4, fixed_abs, tag = 'smem constant byte address 0x4 - core index']
  #allocation1 [shape = 'u32[144,128]{1,0:T(1,128)}', space=vmem, size = 0x12000, scoped, tag = 'internal scratch']
  #allocation2 [shape = 'f32[32,128]{1,0:T(8,128)}', space=vmem, size = 0x4000, scoped, tag = 'scratch operand']
  %s0 = inlined_call_operand.vmem [shape: bf16[32,128], index: 0, kind: input, shape index: {}]
  %s1 = inlined_call_operand.vmem [shape: f32[1,128], index: 1, kind: input, shape index: {}]
  %s2 = inlined_call_operand.vmem [shape: bf16[128,256], index: 2, kind: input, shape index: {}]
  %s3 = inlined_call_operand.vmem [shape: bf16[128,256], index: 3, kind: input, shape index: {}]
  %s4 = inlined_call_operand.vmem [shape: bf16[256,128], index: 4, kind: input, shape index: {}]
  %s5 = inlined_call_operand.vmem [shape: bf16[32,128], index: 5, kind: output, shape index: {}]
  %s6 = sld [smem:[#allocation0]]
  $region143: #{internlm2_forward.12} parent=0
    _
  %s8 = ssub.s32 1, %s6
  %s9 = scalar_select 0, %s8, %s6
  $region1: #{internlm2_forward.12} parent=0
    #allocation3 [shape = 'u8[65536]{0}', space=vmem, size = 0x10000, scoped, tag = 'input window, operand 2']
    #allocation4 [shape = 'u8[65536]{0}', space=vmem, size = 0x10000, scoped, tag = 'input window, operand 3']
    loop: start=0, step=1, limit=4
    $region2: #{internlm2_forward.12} parent=1 // loop_pre_header
      _
    $region3: #{internlm2_forward.12} parent=1 // loop_header
      %s11 = sphi 0, %s15
      %p12 = scmp.ge.s32.totalorder %s11, 4
      %s18 = sphi 0, %s30
      %s19 = sphi 0, %s26
      %s20 = sphi 0, %s18
      %s21 = sphi 0, %s19
      %s22 = sphi 0, %s20
      %s23 = sphi 0, %s21
      %s33 = sphi 0, %s35
      %s36 = sphi 0, %s33
      %s37 = sphi 0, %s36
      %s53 = sphi 0, %s37
      %s57 = sphi 0, %s57
      %s59 = sphi 0, %s57
      %s60 = sphi 0, %s59
      %s74 = sphi 0, %s60
      %s80 = sphi 0, %s82
      %s83 = sphi 0, %s80
      %s84 = sphi 0, %s83
      %s100 = sphi 0, %s84
      %s106 = sphi 0, %s108
      %s109 = sphi 0, %s106
      %s110 = sphi 0, %s109
      %s126 = sphi 0, %s110
      %s132 = sphi 0, %s134
      %s135 = sphi 0, %s132
      %s136 = sphi 0, %s135
      %s152 = sphi 0, %s136
      %s158 = sphi 0, %s160
      %s161 = sphi 0, %s158
      %s162 = sphi 0, %s161
      %s178 = sphi 0, %s162
    $region4: #{internlm2_forward.12} parent=1 // loop_header_branch
      %14 = sbr.rel (%p12) target = $region8
    $region5: #{internlm2_forward.12} parent=1 // loop_body
      %s16 = ssub.s32 %s11, 1
      %s17 = ssub.s32 %s11, 2
      %s24 = sadd.s32 1, %s19
      %p25 = scmp.ge.s32.totalorder %s24, 2
      %s26 = scalar_select %p25, 0, %s24
      %s27 = sadd.s32 1, %s18
      %s28 = scalar_select %p25, %s27, %s18
      %p29 = scmp.ge.s32.totalorder %s28, 1
      %s30 = scalar_select %p29, 0, %s28
      %s31 = ssub.s32 %s18, %s30
      %p32 = scmp.eq.s32.totalorder %s31, 0
      %s34 = sadd.s32 %s33, 1
      %s35 = scalar_select %p32, %s33, %s34
      %p38 = pneg %p32
      %p39 = scmp.eq.s32.totalorder %s11, 1
      %p40 = por %p38, %p39
      %p41 = scmp.ne.s32.totalorder %s33, %s36
      %p42 = scmp.eq.s32.totalorder %s11, 0
      %p43 = por %p41, %p42
      %p44 = scmp.ne.s32.totalorder %s33, %s36
      %p45 = scmp.eq.s32.totalorder %s16, 1
      %p46 = por %p44, %p45
      %p47 = scmp.ne.s32.totalorder %s36, %s37
      %p48 = scmp.eq.s32.totalorder %s16, 0
      %p49 = por %p47, %p48
      %p50 = scmp.ne.s32.totalorder %s36, %s37
      %p51 = scmp.eq.s32.totalorder %s17, 1
      %p52 = por %p50, %p51
      %p54 = scmp.ne.s32.totalorder %s37, %s53
      %p55 = scmp.eq.s32.totalorder %s17, 0
      %p56 = por %p54, %p55
      %s58 = sadd.s32 %s57, 1
      %p61 = scmp.eq.s32.totalorder %s11, 1
      %p62 = scmp.ne.s32.totalorder %s57, %s59
      %p63 = scmp.eq.s32.totalorder %s11, 0
      %p64 = por %p62, %p63
      %p65 = scmp.ne.s32.totalorder %s57, %s59
      %p66 = scmp.eq.s32.totalorder %s16, 1
      %p67 = por %p65, %p66
      %p68 = scmp.ne.s32.totalorder %s59, %s60
      %p69 = scmp.eq.s32.totalorder %s16, 0
      %p70 = por %p68, %p69
      %p71 = scmp.ne.s32.totalorder %s59, %s60
      %p72 = scmp.eq.s32.totalorder %s17, 1
      %p73 = por %p71, %p72
      %p75 = scmp.ne.s32.totalorder %s60, %s74
      %p76 = scmp.eq.s32.totalorder %s17, 0
      %p77 = por %p75, %p76
      %s78 = ssub.s32 %s19, %s26
      %p79 = scmp.eq.s32.totalorder %s78, 0
      %s81 = sadd.s32 %s80, 1
      %s82 = scalar_select %p79, %s80, %s81
      %p85 = pneg %p79
      %p86 = scmp.eq.s32.totalorder %s11, 1
      %p87 = por %p85, %p86
      %p88 = scmp.ne.s32.totalorder %s80, %s83
      %p89 = scmp.eq.s32.totalorder %s11, 0
      %p90 = por %p88, %p89
      %p91 = scmp.ne.s32.totalorder %s80, %s83
      %p92 = scmp.eq.s32.totalorder %s16, 1
      %p93 = por %p91, %p92
      %p94 = scmp.ne.s32.totalorder %s83, %s84
      %p95 = scmp.eq.s32.totalorder %s16, 0
      %p96 = por %p94, %p95
      %p97 = scmp.ne.s32.totalorder %s83, %s84
      %p98 = scmp.eq.s32.totalorder %s17, 1
      %p99 = por %p97, %p98
      %p101 = scmp.ne.s32.totalorder %s84, %s100
      %p102 = scmp.eq.s32.totalorder %s17, 0
      %p103 = por %p101, %p102
      %s104 = ssub.s32 %s19, %s26
      %p105 = scmp.eq.s32.totalorder %s104, 0
      %s107 = sadd.s32 %s106, 1
      %s108 = scalar_select %p105, %s106, %s107
      %p111 = pneg %p105
      %p112 = scmp.eq.s32.totalorder %s11, 1
      %p113 = por %p111, %p112
      %p114 = scmp.ne.s32.totalorder %s106, %s109
      %p115 = scmp.eq.s32.totalorder %s11, 0
      %p116 = por %p114, %p115
      %p117 = scmp.ne.s32.totalorder %s106, %s109
      %p118 = scmp.eq.s32.totalorder %s16, 1
      %p119 = por %p117, %p118
      %p120 = scmp.ne.s32.totalorder %s109, %s110
      %p121 = scmp.eq.s32.totalorder %s16, 0
      %p122 = por %p120, %p121
      %p123 = scmp.ne.s32.totalorder %s109, %s110
      %p124 = scmp.eq.s32.totalorder %s17, 1
      %p125 = por %p123, %p124
      %p127 = scmp.ne.s32.totalorder %s110, %s126
      %p128 = scmp.eq.s32.totalorder %s17, 0
      %p129 = por %p127, %p128
      %s130 = ssub.s32 %s19, %s26
      %p131 = scmp.eq.s32.totalorder %s130, 0
      %s133 = sadd.s32 %s132, 1
      %s134 = scalar_select %p131, %s132, %s133
      %p137 = pneg %p131
      %p138 = scmp.eq.s32.totalorder %s11, 1
      %p139 = por %p137, %p138
      %p140 = scmp.ne.s32.totalorder %s132, %s135
      %p141 = scmp.eq.s32.totalorder %s11, 0
      %p142 = por %p140, %p141
      %p143 = scmp.ne.s32.totalorder %s132, %s135
      %p144 = scmp.eq.s32.totalorder %s16, 1
      %p145 = por %p143, %p144
      %p146 = scmp.ne.s32.totalorder %s135, %s136
      %p147 = scmp.eq.s32.totalorder %s16, 0
      %p148 = por %p146, %p147
      %p149 = scmp.ne.s32.totalorder %s135, %s136
      %p150 = scmp.eq.s32.totalorder %s17, 1
      %p151 = por %p149, %p150
      %p153 = scmp.ne.s32.totalorder %s136, %s152
      %p154 = scmp.eq.s32.totalorder %s17, 0
      %p155 = por %p153, %p154
      %s156 = ssub.s32 %s18, %s30
      %p157 = scmp.eq.s32.totalorder %s156, 0
      %s159 = sadd.s32 %s158, 1
      %s160 = scalar_select %p157, %s158, %s159
      %p163 = pneg %p157
      %p164 = scmp.eq.s32.totalorder %s11, 1
      %p165 = por %p163, %p164
      %p166 = scmp.ne.s32.totalorder %s158, %s161
      %p167 = scmp.eq.s32.totalorder %s11, 0
      %p168 = por %p166, %p167
      %p169 = scmp.ne.s32.totalorder %s158, %s161
      %p170 = scmp.eq.s32.totalorder %s16, 1
      %p171 = por %p169, %p170
      %p172 = scmp.ne.s32.totalorder %s161, %s162
      %p173 = scmp.eq.s32.totalorder %s16, 0
      %p174 = por %p172, %p173
      %p175 = scmp.ne.s32.totalorder %s161, %s162
      %p176 = scmp.eq.s32.totalorder %s17, 1
      %p177 = por %p175, %p176
      %p179 = scmp.ne.s32.totalorder %s162, %s178
      %p180 = scmp.eq.s32.totalorder %s17, 0
      %p181 = por %p179, %p180
      %p182 = scmp.le.s32.totalorder 1, %s11
      %p183 = scmp.lt.s32.totalorder %s11, 3
      %p184 = pnand %p182, %p183
      %p185 = pneg %p184
      // Predicated region
      $region9: #{internlm2_forward.12} parent=5 // pred_check
        _
      $region10: #{internlm2_forward.12} parent=5 // pred_check_branch
        %187 = sbr.rel (%p184) target = $region12
      $region11: #{internlm2_forward.12} parent=5 // pred_region
        %s188 = ssub.s32 %s11, 1
        // Predicated region
        $region13: #{internlm2_forward.12} parent=11 // pred_check
          %p189 = pneg %p49
        $region14: #{internlm2_forward.12} parent=11 // pred_check_branch
          %191 = sbr.rel (%p189) target = $region16
        $region15: #{internlm2_forward.12} parent=11 // pred_region
          %s192 = smul.u32 4, %s20
          %p193 = scmp.lt.s32.totalorder %s192, 3
          %s194 = scalar_select %p193, %s192, 3
          %s195 = smul.addr %s194, 4
          %s196 = scalar_lea.vmem %s0, %s195
          %s197 = smul.u32 4, %s20
        $region16: #{internlm2_forward.12} parent=11 // pred_fallthru
          _
        // Predicated region
        $region17: #{internlm2_forward.12} parent=11 // pred_check
          %p198 = pneg %p70
        $region18: #{internlm2_forward.12} parent=11 // pred_check_branch
          %200 = sbr.rel (%p198) target = $region20
        $region19: #{internlm2_forward.12} parent=11 // pred_region
          _
        $region20: #{internlm2_forward.12} parent=11 // pred_fallthru
          _
      $region12: #{internlm2_forward.12} parent=5 // pred_fallthru
        _
      %p201 = scmp.lt.s32.totalorder %s11, 2
      // Predicated region
      $region21: #{internlm2_forward.12} parent=5 // pred_check
        %p202 = pneg %p201
      $region22: #{internlm2_forward.12} parent=5 // pred_check_branch
        %204 = sbr.rel (%p202) target = $region24
      $region23: #{internlm2_forward.12} parent=5 // pred_region
        // Predicated region
        $region25: #{internlm2_forward.12} parent=23 // pred_check
          %p205 = pneg %p90
        $region26: #{internlm2_forward.12} parent=23 // pred_check_branch
          %207 = sbr.rel (%p205) target = $region28
        $region27: #{internlm2_forward.12} parent=23 // pred_region
          %s208 = sand.u32 %s80, 1
          %s209 = sand.u32 %s80, 1
          %s210 = smul.addr %s209, 64
          %s211 = scalar_lea.vmem [#allocation3], %s210
          %s212 = smul.addr %s19, 4
          %s213 = scalar_lea.vmem %s2, %s212
          // Predicated region
          $region29: #{internlm2_forward.12} parent=27 // pred_check
            _
          $region30: #{internlm2_forward.12} parent=27 // pred_check_branch
            %215 = sbr.rel (0) target = $region32
          $region31: #{internlm2_forward.12} parent=27 // pred_region
            // Predicated region
            $region33: #{internlm2_forward.12} parent=31 // pred_check
              _
            $region34: #{internlm2_forward.12} parent=31 // pred_check_branch
              %217 = sbr.rel target = $region36
            $region35: #{internlm2_forward.12} parent=31 // pred_region
              // Predicated region
              $region48: #{internlm2_forward.12} parent=35 // pred_check
                _
              $region49: #{internlm2_forward.12} parent=35 // pred_check_branch
                %262 = sbr.rel (0) target = $region51
              $region50: #{internlm2_forward.12} parent=35 // pred_region
                loop: start=0, step=1, limit=1
                $region52: #{internlm2_forward.12} parent=50 // loop_pre_header
                  _
                $region53: #{internlm2_forward.12} parent=50 // loop_header
                  %s264 = sphi 0, %s268
                  %p265 = scmp.ge.s32.totalorder %s264, 1
                  %s269 = sphi %s213, %s213
                  %s270 = sphi %s211, %s211
                $region54: #{internlm2_forward.12} parent=50 // loop_header_branch
                  %267 = sbr.rel (%p265) target = $region58
                $region55: #{internlm2_forward.12} parent=50 // loop_body
                  _
                $region56: #{internlm2_forward.12} parent=50 // loop_footer
                  %s268 = sadd.s32 1, %s264
                $region57: #{internlm2_forward.12} parent=50 // loop_footer_branch
                  %263 = sbr.rel target = $region53
                $region58: #{internlm2_forward.12} parent=50 // loop_exit
                  _
                loop: start=0, step=1, limit=1
                $region59: #{internlm2_forward.12} parent=50 // loop_pre_header
                  _
                $region60: #{internlm2_forward.12} parent=50 // loop_header
                  %s273 = sphi 0, %s277
                  %p274 = scmp.ge.s32.totalorder %s273, 1
                  %s278 = sphi %s213, %s213
                  %s279 = sphi %s211, %s211
                $region61: #{internlm2_forward.12} parent=50 // loop_header_branch
                  %276 = sbr.rel (%p274) target = $region65
                $region62: #{internlm2_forward.12} parent=50 // loop_body
                  %v280 = vld [vmem:[%s278] sm:$0xf]
                  %281 = vst [vmem:[%s279] sm:$0xf] %v280
                  %v282 = vld [vmem:[%s278 + $0x8] sm:$0xf]
                  %283 = vst [vmem:[%s279 + $0x4] sm:$0xf] %v282
                  %v284 = vld [vmem:[%s278 + $0x10] sm:$0xf]
                  %285 = vst [vmem:[%s279 + $0x8] sm:$0xf] %v284
                  %v286 = vld [vmem:[%s278 + $0x18] sm:$0xf]
                  %287 = vst [vmem:[%s279 + $0xc] sm:$0xf] %v286
                  %v288 = vld [vmem:[%s278 + $0x20] sm:$0xf]
                  %289 = vst [vmem:[%s279 + $0x10] sm:$0xf] %v288
                  %v290 = vld [vmem:[%s278 + $0x28] sm:$0xf]
                  %291 = vst [vmem:[%s279 + $0x14] sm:$0xf] %v290
                  %v292 = vld [vmem:[%s278 + $0x30] sm:$0xf]
                  %293 = vst [vmem:[%s279 + $0x18] sm:$0xf] %v292
                  %v294 = vld [vmem:[%s278 + $0x38] sm:$0xf]
                  %295 = vst [vmem:[%s279 + $0x1c] sm:$0xf] %v294
                  %v296 = vld [vmem:[%s278 + $0x40] sm:$0xf]
                  %297 = vst [vmem:[%s279 + $0x20] sm:$0xf] %v296
                  %v298 = vld [vmem:[%s278 + $0x48] sm:$0xf]
                  %299 = vst [vmem:[%s279 + $0x24] sm:$0xf] %v298
                  %v300 = vld [vmem:[%s278 + $0x50] sm:$0xf]
                  %301 = vst [vmem:[%s279 + $0x28] sm:$0xf] %v300
                  %v302 = vld [vmem:[%s278 + $0x58] sm:$0xf]
                  %303 = vst [vmem:[%s279 + $0x2c] sm:$0xf] %v302
                  %v304 = vld [vmem:[%s278 + $0x60] sm:$0xf]
                  %305 = vst [vmem:[%s279 + $0x30] sm:$0xf] %v304
                  %v306 = vld [vmem:[%s278 + $0x68] sm:$0xf]
                  %307 = vst [vmem:[%s279 + $0x34] sm:$0xf] %v306
                  %v308 = vld [vmem:[%s278 + $0x70] sm:$0xf]
                  %309 = vst [vmem:[%s279 + $0x38] sm:$0xf] %v308
                  %v310 = vld [vmem:[%s278 + $0x78] sm:$0xf]
                  %311 = vst [vmem:[%s279 + $0x3c] sm:$0xf] %v310
                $region63: #{internlm2_forward.12} parent=50 // loop_footer
                  %s277 = sadd.s32 1, %s273
                $region64: #{internlm2_forward.12} parent=50 // loop_footer_branch
                  %272 = sbr.rel target = $region60
                $region65: #{internlm2_forward.12} parent=50 // loop_exit
                  _
              $region51: #{internlm2_forward.12} parent=35 // pred_fallthru
                _
            $region36: #{internlm2_forward.12} parent=31 // pred_fallthru
              _
            // Predicated region
            $region37: #{internlm2_forward.12} parent=31 // pred_check
              _
            $region38: #{internlm2_forward.12} parent=31 // pred_check_branch
              %219 = sbr.rel (0) target = $region40
            $region39: #{internlm2_forward.12} parent=31 // pred_region
              loop: start=0, step=1, limit=1
              $region41: #{internlm2_forward.12} parent=39 // loop_pre_header
                _
              $region42: #{internlm2_forward.12} parent=39 // loop_header
                %s222 = sphi 0, %s226
                %p223 = scmp.ge.s32.totalorder %s222, 1
                %s227 = sphi %s213, %s213
                %s228 = sphi %s211, %s211
              $region43: #{internlm2_forward.12} parent=39 // loop_header_branch
                %225 = sbr.rel (%p223) target = $region47
              $region44: #{internlm2_forward.12} parent=39 // loop_body
                %v229 = vld [vmem:[%s227] sm:$0xf]
                %230 = vst [vmem:[%s228] sm:$0xf] %v229
                %v231 = vld [vmem:[%s227 + $0x8] sm:$0xf]
                %232 = vst [vmem:[%s228 + $0x4] sm:$0xf] %v231
                %v233 = vld [vmem:[%s227 + $0x10] sm:$0xf]
                %234 = vst [vmem:[%s228 + $0x8] sm:$0xf] %v233
                %v235 = vld [vmem:[%s227 + $0x18] sm:$0xf]
                %236 = vst [vmem:[%s228 + $0xc] sm:$0xf] %v235
                %v237 = vld [vmem:[%s227 + $0x20] sm:$0xf]
                %238 = vst [vmem:[%s228 + $0x10] sm:$0xf] %v237
                %v239 = vld [vmem:[%s227 + $0x28] sm:$0xf]
                %240 = vst [vmem:[%s228 + $0x14] sm:$0xf] %v239
                %v241 = vld [vmem:[%s227 + $0x30] sm:$0xf]
                %242 = vst [vmem:[%s228 + $0x18] sm:$0xf] %v241
                %v243 = vld [vmem:[%s227 + $0x38] sm:$0xf]
                %244 = vst [vmem:[%s228 + $0x1c] sm:$0xf] %v243
                %v245 = vld [vmem:[%s227 + $0x40] sm:$0xf]
                %246 = vst [vmem:[%s228 + $0x20] sm:$0xf] %v245
                %v247 = vld [vmem:[%s227 + $0x48] sm:$0xf]
                %248 = vst [vmem:[%s228 + $0x24] sm:$0xf] %v247
                %v249 = vld [vmem:[%s227 + $0x50] sm:$0xf]
                %250 = vst [vmem:[%s228 + $0x28] sm:$0xf] %v249
                %v251 = vld [vmem:[%s227 + $0x58] sm:$0xf]
                %252 = vst [vmem:[%s228 + $0x2c] sm:$0xf] %v251
                %v253 = vld [vmem:[%s227 + $0x60] sm:$0xf]
                %254 = vst [vmem:[%s228 + $0x30] sm:$0xf] %v253
                %v255 = vld [vmem:[%s227 + $0x68] sm:$0xf]
                %256 = vst [vmem:[%s228 + $0x34] sm:$0xf] %v255
                %v257 = vld [vmem:[%s227 + $0x70] sm:$0xf]
                %258 = vst [vmem:[%s228 + $0x38] sm:$0xf] %v257
                %v259 = vld [vmem:[%s227 + $0x78] sm:$0xf]
                %260 = vst [vmem:[%s228 + $0x3c] sm:$0xf] %v259
              $region45: #{internlm2_forward.12} parent=39 // loop_footer
                %s226 = sadd.s32 1, %s222
              $region46: #{internlm2_forward.12} parent=39 // loop_footer_branch
                %221 = sbr.rel target = $region42
              $region47: #{internlm2_forward.12} parent=39 // loop_exit
                _
            $region40: #{internlm2_forward.12} parent=31 // pred_fallthru
              _
          $region32: #{internlm2_forward.12} parent=27 // pred_fallthru
            _
          %312 = vnop
        $region28: #{internlm2_forward.12} parent=23 // pred_fallthru
          _
        // Predicated region
        $region66: #{internlm2_forward.12} parent=23 // pred_check
          %p313 = pneg %p116
        $region67: #{internlm2_forward.12} parent=23 // pred_check_branch
          %315 = sbr.rel (%p313) target = $region69
        $region68: #{internlm2_forward.12} parent=23 // pred_region
          %s316 = sand.u32 %s106, 1
          %s317 = sand.u32 %s106, 1
          %s318 = smul.addr %s317, 64
          %s319 = scalar_lea.vmem [#allocation4], %s318
          %s320 = smul.addr %s19, 4
          %s321 = scalar_lea.vmem %s3, %s320
          // Predicated region
          $region70: #{internlm2_forward.12} parent=68 // pred_check
            _
          $region71: #{internlm2_forward.12} parent=68 // pred_check_branch
            %323 = sbr.rel (0) target = $region73
          $region72: #{internlm2_forward.12} parent=68 // pred_region
            // Predicated region
            $region74: #{internlm2_forward.12} parent=72 // pred_check
              _
            $region75: #{internlm2_forward.12} parent=72 // pred_check_branch
              %325 = sbr.rel target = $region77
            $region76: #{internlm2_forward.12} parent=72 // pred_region
              // Predicated region
              $region89: #{internlm2_forward.12} parent=76 // pred_check
                _
              $region90: #{internlm2_forward.12} parent=76 // pred_check_branch
                %370 = sbr.rel (0) target = $region92
              $region91: #{internlm2_forward.12} parent=76 // pred_region
                loop: start=0, step=1, limit=1
                $region93: #{internlm2_forward.12} parent=91 // loop_pre_header
                  _
                $region94: #{internlm2_forward.12} parent=91 // loop_header
                  %s372 = sphi 0, %s376
                  %p373 = scmp.ge.s32.totalorder %s372, 1
                  %s377 = sphi %s321, %s321
                  %s378 = sphi %s319, %s319
                $region95: #{internlm2_forward.12} parent=91 // loop_header_branch
                  %375 = sbr.rel (%p373) target = $region99
                $region96: #{internlm2_forward.12} parent=91 // loop_body
                  _
                $region97: #{internlm2_forward.12} parent=91 // loop_footer
                  %s376 = sadd.s32 1, %s372
                $region98: #{internlm2_forward.12} parent=91 // loop_footer_branch
                  %371 = sbr.rel target = $region94
                $region99: #{internlm2_forward.12} parent=91 // loop_exit
                  _
                loop: start=0, step=1, limit=1
                $region100: #{internlm2_forward.12} parent=91 // loop_pre_header
                  _
                $region101: #{internlm2_forward.12} parent=91 // loop_header
                  %s381 = sphi 0, %s385
                  %p382 = scmp.ge.s32.totalorder %s381, 1
                  %s386 = sphi %s321, %s321
                  %s387 = sphi %s319, %s319
                $region102: #{internlm2_forward.12} parent=91 // loop_header_branch
                  %384 = sbr.rel (%p382) target = $region106
                $region103: #{internlm2_forward.12} parent=91 // loop_body
                  %v388 = vld [vmem:[%s386] sm:$0xf]
                  %389 = vst [vmem:[%s387] sm:$0xf] %v388
                  %v390 = vld [vmem:[%s386 + $0x8] sm:$0xf]
                  %391 = vst [vmem:[%s387 + $0x4] sm:$0xf] %v390
                  %v392 = vld [vmem:[%s386 + $0x10] sm:$0xf]
                  %393 = vst [vmem:[%s387 + $0x8] sm:$0xf] %v392
                  %v394 = vld [vmem:[%s386 + $0x18] sm:$0xf]
                  %395 = vst [vmem:[%s387 + $0xc] sm:$0xf] %v394
                  %v396 = vld [vmem:[%s386 + $0x20] sm:$0xf]
                  %397 = vst [vmem:[%s387 + $0x10] sm:$0xf] %v396
                  %v398 = vld [vmem:[%s386 + $0x28] sm:$0xf]
                  %399 = vst [vmem:[%s387 + $0x14] sm:$0xf] %v398
                  %v400 = vld [vmem:[%s386 + $0x30] sm:$0xf]
                  %401 = vst [vmem:[%s387 + $0x18] sm:$0xf] %v400
                  %v402 = vld [vmem:[%s386 + $0x38] sm:$0xf]
                  %403 = vst [vmem:[%s387 + $0x1c] sm:$0xf] %v402
                  %v404 = vld [vmem:[%s386 + $0x40] sm:$0xf]
                  %405 = vst [vmem:[%s387 + $0x20] sm:$0xf] %v404
                  %v406 = vld [vmem:[%s386 + $0x48] sm:$0xf]
                  %407 = vst [vmem:[%s387 + $0x24] sm:$0xf] %v406
                  %v408 = vld [vmem:[%s386 + $0x50] sm:$0xf]
                  %409 = vst [vmem:[%s387 + $0x28] sm:$0xf] %v408
                  %v410 = vld [vmem:[%s386 + $0x58] sm:$0xf]
                  %411 = vst [vmem:[%s387 + $0x2c] sm:$0xf] %v410
                  %v412 = vld [vmem:[%s386 + $0x60] sm:$0xf]
                  %413 = vst [vmem:[%s387 + $0x30] sm:$0xf] %v412
                  %v414 = vld [vmem:[%s386 + $0x68] sm:$0xf]
                  %415 = vst [vmem:[%s387 + $0x34] sm:$0xf] %v414
                  %v416 = vld [vmem:[%s386 + $0x70] sm:$0xf]
                  %417 = vst [vmem:[%s387 + $0x38] sm:$0xf] %v416
                  %v418 = vld [vmem:[%s386 + $0x78] sm:$0xf]
                  %419 = vst [vmem:[%s387 + $0x3c] sm:$0xf] %v418
                $region104: #{internlm2_forward.12} parent=91 // loop_footer
                  %s385 = sadd.s32 1, %s381
                $region105: #{internlm2_forward.12} parent=91 // loop_footer_branch
                  %380 = sbr.rel target = $region101
                $region106: #{internlm2_forward.12} parent=91 // loop_exit
                  _
              $region92: #{internlm2_forward.12} parent=76 // pred_fallthru
                _
            $region77: #{internlm2_forward.12} parent=72 // pred_fallthru
              _
            // Predicated region
            $region78: #{internlm2_forward.12} parent=72 // pred_check
              _
            $region79: #{internlm2_forward.12} parent=72 // pred_check_branch
              %327 = sbr.rel (0) target = $region81
            $region80: #{internlm2_forward.12} parent=72 // pred_region
              loop: start=0, step=1, limit=1
              $region82: #{internlm2_forward.12} parent=80 // loop_pre_header
                _
              $region83: #{internlm2_forward.12} parent=80 // loop_header
                %s330 = sphi 0, %s334
                %p331 = scmp.ge.s32.totalorder %s330, 1
                %s335 = sphi %s321, %s321
                %s336 = sphi %s319, %s319
              $region84: #{internlm2_forward.12} parent=80 // loop_header_branch
                %333 = sbr.rel (%p331) target = $region88
              $region85: #{internlm2_forward.12} parent=80 // loop_body
                %v337 = vld [vmem:[%s335] sm:$0xf]
                %338 = vst [vmem:[%s336] sm:$0xf] %v337
                %v339 = vld [vmem:[%s335 + $0x8] sm:$0xf]
                %340 = vst [vmem:[%s336 + $0x4] sm:$0xf] %v339
                %v341 = vld [vmem:[%s335 + $0x10] sm:$0xf]
                %342 = vst [vmem:[%s336 + $0x8] sm:$0xf] %v341
                %v343 = vld [vmem:[%s335 + $0x18] sm:$0xf]
                %344 = vst [vmem:[%s336 + $0xc] sm:$0xf] %v343
                %v345 = vld [vmem:[%s335 + $0x20] sm:$0xf]
                %346 = vst [vmem:[%s336 + $0x10] sm:$0xf] %v345
                %v347 = vld [vmem:[%s335 + $0x28] sm:$0xf]
                %348 = vst [vmem:[%s336 + $0x14] sm:$0xf] %v347
                %v349 = vld [vmem:[%s335 + $0x30] sm:$0xf]
                %350 = vst [vmem:[%s336 + $0x18] sm:$0xf] %v349
                %v351 = vld [vmem:[%s335 + $0x38] sm:$0xf]
                %352 = vst [vmem:[%s336 + $0x1c] sm:$0xf] %v351
                %v353 = vld [vmem:[%s335 + $0x40] sm:$0xf]
                %354 = vst [vmem:[%s336 + $0x20] sm:$0xf] %v353
                %v355 = vld [vmem:[%s335 + $0x48] sm:$0xf]
                %356 = vst [vmem:[%s336 + $0x24] sm:$0xf] %v355
                %v357 = vld [vmem:[%s335 + $0x50] sm:$0xf]
                %358 = vst [vmem:[%s336 + $0x28] sm:$0xf] %v357
                %v359 = vld [vmem:[%s335 + $0x58] sm:$0xf]
                %360 = vst [vmem:[%s336 + $0x2c] sm:$0xf] %v359
                %v361 = vld [vmem:[%s335 + $0x60] sm:$0xf]
                %362 = vst [vmem:[%s336 + $0x30] sm:$0xf] %v361
                %v363 = vld [vmem:[%s335 + $0x68] sm:$0xf]
                %364 = vst [vmem:[%s336 + $0x34] sm:$0xf] %v363
                %v365 = vld [vmem:[%s335 + $0x70] sm:$0xf]
                %366 = vst [vmem:[%s336 + $0x38] sm:$0xf] %v365
                %v367 = vld [vmem:[%s335 + $0x78] sm:$0xf]
                %368 = vst [vmem:[%s336 + $0x3c] sm:$0xf] %v367
              $region86: #{internlm2_forward.12} parent=80 // loop_footer
                %s334 = sadd.s32 1, %s330
              $region87: #{internlm2_forward.12} parent=80 // loop_footer_branch
                %329 = sbr.rel target = $region83
              $region88: #{internlm2_forward.12} parent=80 // loop_exit
                _
            $region81: #{internlm2_forward.12} parent=72 // pred_fallthru
              _
          $region73: #{internlm2_forward.12} parent=68 // pred_fallthru
            _
          %420 = vnop
        $region69: #{internlm2_forward.12} parent=23 // pred_fallthru
          _
        // Predicated region
        $region107: #{internlm2_forward.12} parent=23 // pred_check
          %p421 = pneg %p142
        $region108: #{internlm2_forward.12} parent=23 // pred_check_branch
          %423 = sbr.rel (%p421) target = $region110
        $region109: #{internlm2_forward.12} parent=23 // pred_region
          %s424 = smul.u32 16, %s19
          %p425 = scmp.lt.s32.totalorder %s424, 31
          %s426 = scalar_select %p425, %s424, 31
          %s427 = smul.addr %s426, 4
          %s428 = scalar_lea.vmem %s4, %s427
          %s429 = smul.u32 16, %s19
        $region110: #{internlm2_forward.12} parent=23 // pred_fallthru
          _
      $region24: #{internlm2_forward.12} parent=5 // pred_fallthru
        _
      %p430 = scmp.le.s32.totalorder 1, %s11
      %p431 = scmp.lt.s32.totalorder %s11, 3
      %p432 = pnand %p430, %p431
      %p433 = pneg %p432
      // Predicated region
      $region111: #{internlm2_forward.12} parent=5 // pred_check
        _
      $region112: #{internlm2_forward.12} parent=5 // pred_check_branch
        %435 = sbr.rel (%p432) target = $region114
      $region113: #{internlm2_forward.12} parent=5 // pred_region
        %s436 = ssub.s32 %s11, 1
        %s437 = sand.u32 %s83, 1
        %s438 = sand.u32 %s83, 1
        %s439 = smul.addr %s438, 64
        %s440 = scalar_lea.vmem [#allocation3], %s439
        // Predicated region
        $region115: #{internlm2_forward.12} parent=113 // pred_check
          %p441 = pneg %p96
        $region116: #{internlm2_forward.12} parent=113 // pred_check_branch
          %443 = sbr.rel (%p441) target = $region118
        $region117: #{internlm2_forward.12} parent=113 // pred_region
          _
        $region118: #{internlm2_forward.12} parent=113 // pred_fallthru
          _
        %s444 = sand.u32 %s109, 1
        %s445 = sand.u32 %s109, 1
        %s446 = smul.addr %s445, 64
        %s447 = scalar_lea.vmem [#allocation4], %s446
        // Predicated region
        $region119: #{internlm2_forward.12} parent=113 // pred_check
          %p448 = pneg %p122
        $region120: #{internlm2_forward.12} parent=113 // pred_check_branch
          %450 = sbr.rel (%p448) target = $region122
        $region121: #{internlm2_forward.12} parent=113 // pred_region
          _
        $region122: #{internlm2_forward.12} parent=113 // pred_fallthru
          _
        %s451 = smul.u32 4, %s20
        %p452 = scmp.lt.s32.totalorder %s451, 3
        %s453 = scalar_select %p452, %s451, 3
        %s454 = smul.addr %s453, 4
        %s455 = scalar_lea.vmem %s0, %s454
        %p456 = pneg %p49
        %p457 = pneg %p46
        %p458 = pneg %p70
        %p459 = pneg %p67
        %s460 = sand.u32 %s83, 1
        %s461 = sand.u32 %s83, 1
        %s462 = smul.addr %s461, 64
        %s463 = scalar_lea.vmem [#allocation3], %s462
        %p464 = pneg %p96
        %p465 = pneg %p93
        %s466 = sand.u32 %s109, 1
        %s467 = sand.u32 %s109, 1
        %s468 = smul.addr %s467, 64
        %s469 = scalar_lea.vmem [#allocation4], %s468
        %p470 = pneg %p122
        %p471 = pneg %p119
        %s472 = smul.u32 16, %s21
        %p473 = scmp.lt.s32.totalorder %s472, 31
        %s474 = scalar_select %p473, %s472, 31
        %s475 = smul.addr %s474, 4
        %s476 = scalar_lea.vmem %s4, %s475
        %p477 = pneg %p148
        %p478 = pneg %p145
        %p479 = pneg %p174
        %p480 = pneg %p171
        %s481 = smul.u32 4, %s20
        %p482 = scmp.lt.s32.totalorder %s481, 3
        %s483 = scalar_select %p482, %s481, 3
        %s484 = smul.addr %s483, 4
        %s485 = scalar_lea.vmem %s5, %s484
        %s486 = smul.u32 4, %s20
        %p487 = scmp.lt.s32.totalorder %s486, 3
        %s488 = scalar_select %p487, %s486, 3
        %s489 = smul.addr %s488, 4
        %s490 = scalar_lea.vmem %s0, %s489
        %s491 = smul.u32 4, %s20
        %s492 = smul.u32 16, %s21
        %p493 = scmp.lt.s32.totalorder %s492, 31
        %s494 = scalar_select %p493, %s492, 31
        %s495 = smul.addr %s494, 4
        %s496 = scalar_lea.vmem %s4, %s495
        %s497 = smul.u32 16, %s21
        %s498 = smul.u32 4, %s20
        %p499 = scmp.lt.s32.totalorder %s498, 3
        %s500 = scalar_select %p499, %s498, 3
        %s501 = smul.addr %s500, 4
        %s502 = scalar_lea.vmem %s5, %s501
        %s503 = smul.u32 4, %s20
        %p505 = scmp.eq.s32.totalorder %s21, 0
        // Predicated region
        $region123: #{internlm2_forward.12} parent=113 // pred_check
          %p506 = pneg %p505
        $region124: #{internlm2_forward.12} parent=113 // pred_check_branch
          %508 = sbr.rel (%p506) target = $region126
        $region125: #{internlm2_forward.12} parent=113 // pred_region
          %509 = vst [vmem:[#allocation2] sm:$0xff] 0.0
          %510 = vst [vmem:[#allocation2 + $0x8] sm:$0xff] 0.0
          %511 = vst [vmem:[#allocation2 + $0x10] sm:$0xff] 0.0
          %512 = vst [vmem:[#allocation2 + $0x18] sm:$0xff] 0.0
        $region126: #{internlm2_forward.12} parent=113 // pred_fallthru
          _
        %v513 = vld [vmem:[%s490] sm:$0xf]
        %v514 = vld [vmem:[%s490 + $0x4] sm:$0xf]
        %v515 = vld [vmem:[%s490 + $0x8] sm:$0xf]
        %v516 = vld [vmem:[%s490 + $0xc] sm:$0xf]
        %v517 = vunpack.c.l.bf16 %v513
        %v518 = vunpack.c.l.bf16 %v514
        %v519 = vunpack.c.l.bf16 %v515
        %v520 = vunpack.c.l.bf16 %v516
        %v521 = vmul.f32 %v517, %v517
        %v522 = vmul.f32 %v518, %v518
        %v523 = vmul.f32 %v519, %v519
        %v524 = vmul.f32 %v520, %v520
        %525 = vadd.xlane.f32.xlu0 %v521
        %v526 = vpop.xlane.xlu0 %525
        %527 = vadd.xlane.f32.xlu0 %v522
        %v528 = vpop.xlane.xlu0 %527
        %529 = vadd.xlane.f32.xlu0 %v523
        %v530 = vpop.xlane.xlu0 %529
        %531 = vadd.xlane.f32.xlu0 %v524
        %v532 = vpop.xlane.xlu0 %531
        %v533 = vrcp.pop 128.0
        %v534 = vmul.f32 %v526, %v533
        %v535 = vmul.f32 %v528, %v533
        %v536 = vmul.f32 %v530, %v533
        %v537 = vmul.f32 %v532, %v533
        %v538 = vadd.f32 %v534, 1e-06
        %v539 = vadd.f32 %v535, 1e-06
        %v540 = vadd.f32 %v536, 1e-06
        %v541 = vadd.f32 %v537, 1e-06
        %v542 = vrsqrt.pop %v538
        %v543 = vrsqrt.pop %v539
        %v544 = vrsqrt.pop %v540
        %v545 = vrsqrt.pop %v541
        %v546 = vmul.f32 %v517, %v542
        %v547 = vmul.f32 %v518, %v543
        %v548 = vmul.f32 %v519, %v544
        %v549 = vmul.f32 %v520, %v545
        %v550 = vld [vmem:[%s1] sm:$0x1]
        %v552 = vlaneseq
        %v553 = vshrl.u32 %v552, 7
        %v554 = vsub.s32 0, %v553
        %v555 = vrot.slane %v550, %v554
        %v557 = vmul.f32 %v546, %v555
        %v558 = vmul.f32 %v547, %v555
        %v559 = vmul.f32 %v548, %v555
        %v560 = vmul.f32 %v549, %v555
        %v561 = vpack.c.bf16 %v558, %v557
        %v562 = vpack.c.bf16 %v560, %v559
        %v563 = vld [vmem:[%s440] sm:$0xf]
        %v564 = vld [vmem:[%s440 + $0x4] sm:$0xf]
        %v565 = vld [vmem:[%s440 + $0x8] sm:$0xf]
        %v566 = vld [vmem:[%s440 + $0xc] sm:$0xf]
        %v567 = vld [vmem:[%s440 + $0x10] sm:$0xf]
        %v568 = vld [vmem:[%s440 + $0x14] sm:$0xf]
        %v569 = vld [vmem:[%s440 + $0x18] sm:$0xf]
        %v570 = vld [vmem:[%s440 + $0x1c] sm:$0xf]
        %v571 = vld [vmem:[%s440 + $0x20] sm:$0xf]
        %v572 = vld [vmem:[%s440 + $0x24] sm:$0xf]
        %v573 = vld [vmem:[%s440 + $0x28] sm:$0xf]
        %v574 = vld [vmem:[%s440 + $0x2c] sm:$0xf]
        %v575 = vld [vmem:[%s440 + $0x30] sm:$0xf]
        %v576 = vld [vmem:[%s440 + $0x34] sm:$0xf]
        %v577 = vld [vmem:[%s440 + $0x38] sm:$0xf]
        %v578 = vld [vmem:[%s440 + $0x3c] sm:$0xf]
        %v595 = vunpack.c.l.b16 %v563
        %v596 = vunpack.c.l.b16 %v564
        %v597 = vunpack.c.l.b16 %v565
        %v598 = vunpack.c.l.b16 %v566
        %v599 = vunpack.c.l.b16 %v567
        %v600 = vunpack.c.l.b16 %v568
        %v601 = vunpack.c.l.b16 %v569
        %v602 = vunpack.c.l.b16 %v570
        %v603 = vunpack.c.l.b16 %v571
        %v604 = vunpack.c.l.b16 %v572
        %v605 = vunpack.c.l.b16 %v573
        %v606 = vunpack.c.l.b16 %v574
        %v607 = vunpack.c.l.b16 %v575
        %v608 = vunpack.c.l.b16 %v576
        %v609 = vunpack.c.l.b16 %v577
        %v610 = vunpack.c.l.b16 %v578
        %v611 = vpack.c.b16 %v596, %v595
        %v612 = vpack.c.b16 %v598, %v597
        %v613 = vpack.c.b16 %v600, %v599
        %v614 = vpack.c.b16 %v602, %v601
        %v615 = vpack.c.b16 %v604, %v603
        %v616 = vpack.c.b16 %v606, %v605
        %v617 = vpack.c.b16 %v608, %v607
        %v618 = vpack.c.b16 %v610, %v609
        %627 = vmatprep.subr.bf16.mxu0 0
        %628 = vmatpush1.bf16.msra.mxu0 %v611
        %629 = vmatprep.subr.bf16.mxu0 0
        %630 = vmatpush1.bf16.msra.mxu0 %v612
        %631 = vmatprep.subr.bf16.mxu0 0
        %632 = vmatpush1.bf16.msra.mxu0 %v613
        %633 = vmatprep.subr.bf16.mxu0 0
        %634 = vmatpush1.bf16.msra.mxu0 %v614
        %635 = vmatprep.subr.bf16.mxu0 0
        %636 = vmatpush1.bf16.msra.mxu0 %v615
        %637 = vmatprep.subr.bf16.mxu0 0
        %638 = vmatpush1.bf16.msra.mxu0 %v616
        %639 = vmatprep.subr.bf16.mxu0 0
        %640 = vmatpush1.bf16.msra.mxu0 %v617
        %641 = vmatprep.subr.bf16.mxu0 0
        %642 = vmatpush1.bf16.msra.mxu0 %v618
        %643 = vmatprep.subr.bf16.mxu0 0
        %644 = vmatpush1.bf16.msra.mxu0 0
        %645 = vmatprep.subr.bf16.mxu0 0
        %646 = vmatpush1.bf16.msra.mxu0 0
        %647 = vmatprep.subr.bf16.mxu0 0
        %648 = vmatpush1.bf16.msra.mxu0 0
        %649 = vmatprep.subr.bf16.mxu0 0
        %650 = vmatpush1.bf16.msra.mxu0 0
        %651 = vmatprep.subr.bf16.mxu0 0
        %652 = vmatpush1.bf16.msra.mxu0 0
        %653 = vmatprep.subr.bf16.mxu0 0
        %654 = vmatpush1.bf16.msra.mxu0 0
        %655 = vmatprep.subr.bf16.mxu0 0
        %656 = vmatpush1.bf16.msra.mxu0 0
        %657 = vmatprep.subr.bf16.mxu0 0
        %658 = vmatpush1.bf16.msra.mxu0 0
        %659 = vmatprep.mubr.bf16.mxu0 0
        %660 = vmatmul.mubr.bf16.gmra.mrb[0].mxu0 %v561
        %v661 = vpop.f32.mrb[0].mxu0
        %v662 = vadd.f32 0.0, %v661
        %v663 = vpop.f32.mrb[0].mxu0
        %v664 = vpop.f32.mrb[0].mxu0
        %v665 = vadd.f32 0.0, %v664
        %v666 = vpop.f32.mrb[0].mxu0
        %667 = vmatprep.mubr.bf16.mxu0 0
        %668 = vmatmul.mubr.bf16.gmra.mrb[0].mxu0 %v562
        %v669 = vpop.f32.mrb[0].mxu0
        %v670 = vadd.f32 0.0, %v669
        %v671 = vpop.f32.mrb[0].mxu0
        %v672 = vpop.f32.mrb[0].mxu0
        %v673 = vadd.f32 0.0, %v672
        %v674 = vpop.f32.mrb[0].mxu0
        %675 = vdwg.mxu0
        %v676 = vld [vmem:[%s447] sm:$0xf]
        %v677 = vld [vmem:[%s447 + $0x4] sm:$0xf]
        %v678 = vld [vmem:[%s447 + $0x8] sm:$0xf]
        %v679 = vld [vmem:[%s447 + $0xc] sm:$0xf]
        %v680 = vld [vmem:[%s447 + $0x10] sm:$0xf]
        %v681 = vld [vmem:[%s447 + $0x14] sm:$0xf]
        %v682 = vld [vmem:[%s447 + $0x18] sm:$0xf]
        %v683 = vld [vmem:[%s447 + $0x1c] sm:$0xf]
        %v684 = vld [vmem:[%s447 + $0x20] sm:$0xf]
        %v685 = vld [vmem:[%s447 + $0x24] sm:$0xf]
        %v686 = vld [vmem:[%s447 + $0x28] sm:$0xf]
        %v687 = vld [vmem:[%s447 + $0x2c] sm:$0xf]
        %v688 = vld [vmem:[%s447 + $0x30] sm:$0xf]
        %v689 = vld [vmem:[%s447 + $0x34] sm:$0xf]
        %v690 = vld [vmem:[%s447 + $0x38] sm:$0xf]
        %v691 = vld [vmem:[%s447 + $0x3c] sm:$0xf]
        %v708 = vunpack.c.l.b16 %v676
        %v709 = vunpack.c.l.b16 %v677
        %v710 = vunpack.c.l.b16 %v678
        %v711 = vunpack.c.l.b16 %v679
        %v712 = vunpack.c.l.b16 %v680
        %v713 = vunpack.c.l.b16 %v681
        %v714 = vunpack.c.l.b16 %v682
        %v715 = vunpack.c.l.b16 %v683
        %v716 = vunpack.c.l.b16 %v684
        %v717 = vunpack.c.l.b16 %v685
        %v718 = vunpack.c.l.b16 %v686
        %v719 = vunpack.c.l.b16 %v687
        %v720 = vunpack.c.l.b16 %v688
        %v721 = vunpack.c.l.b16 %v689
        %v722 = vunpack.c.l.b16 %v690
        %v723 = vunpack.c.l.b16 %v691
        %v724 = vpack.c.b16 %v709, %v708
        %v725 = vpack.c.b16 %v711, %v710
        %v726 = vpack.c.b16 %v713, %v712
        %v727 = vpack.c.b16 %v715, %v714
        %v728 = vpack.c.b16 %v717, %v716
        %v729 = vpack.c.b16 %v719, %v718
        %v730 = vpack.c.b16 %v721, %v720
        %v731 = vpack.c.b16 %v723, %v722
        %740 = vmatprep.subr.bf16.mxu0 0
        %741 = vmatpush1.bf16.msra.mxu0 %v724
        %742 = vmatprep.subr.bf16.mxu0 0
        %743 = vmatpush1.bf16.msra.mxu0 %v725
        %744 = vmatprep.subr.bf16.mxu0 0
        %745 = vmatpush1.bf16.msra.mxu0 %v726
        %746 = vmatprep.subr.bf16.mxu0 0
        %747 = vmatpush1.bf16.msra.mxu0 %v727
        %748 = vmatprep.subr.bf16.mxu0 0
        %749 = vmatpush1.bf16.msra.mxu0 %v728
        %750 = vmatprep.subr.bf16.mxu0 0
        %751 = vmatpush1.bf16.msra.mxu0 %v729
        %752 = vmatprep.subr.bf16.mxu0 0
        %753 = vmatpush1.bf16.msra.mxu0 %v730
        %754 = vmatprep.subr.bf16.mxu0 0
        %755 = vmatpush1.bf16.msra.mxu0 %v731
        %756 = vmatprep.subr.bf16.mxu0 0
        %757 = vmatpush1.bf16.msra.mxu0 0
        %758 = vmatprep.subr.bf16.mxu0 0
        %759 = vmatpush1.bf16.msra.mxu0 0
        %760 = vmatprep.subr.bf16.mxu0 0
        %761 = vmatpush1.bf16.msra.mxu0 0
        %762 = vmatprep.subr.bf16.mxu0 0
        %763 = vmatpush1.bf16.msra.mxu0 0
        %764 = vmatprep.subr.bf16.mxu0 0
        %765 = vmatpush1.bf16.msra.mxu0 0
        %766 = vmatprep.subr.bf16.mxu0 0
        %767 = vmatpush1.bf16.msra.mxu0 0
        %768 = vmatprep.subr.bf16.mxu0 0
        %769 = vmatpush1.bf16.msra.mxu0 0
        %770 = vmatprep.subr.bf16.mxu0 0
        %771 = vmatpush1.bf16.msra.mxu0 0
        %772 = vmatprep.mubr.bf16.mxu0 0
        %773 = vmatmul.mubr.bf16.gmra.mrb[0].mxu0 %v561
        %v774 = vpop.f32.mrb[0].mxu0
        %v775 = vadd.f32 0.0, %v774
        %v776 = vpop.f32.mrb[0].mxu0
        %v777 = vpop.f32.mrb[0].mxu0
        %v778 = vadd.f32 0.0, %v777
        %v779 = vpop.f32.mrb[0].mxu0
        %780 = vmatprep.mubr.bf16.mxu0 0
        %781 = vmatmul.mubr.bf16.gmra.mrb[0].mxu0 %v562
        %v782 = vpop.f32.mrb[0].mxu0
        %v783 = vadd.f32 0.0, %v782
        %v784 = vpop.f32.mrb[0].mxu0
        %v785 = vpop.f32.mrb[0].mxu0
        %v786 = vadd.f32 0.0, %v785
        %v787 = vpop.f32.mrb[0].mxu0
        %788 = vdwg.mxu0
        %v789 = vxor.u32 %v662, 2147483648
        %v790 = vxor.u32 %v665, 2147483648
        %v791 = vxor.u32 %v670, 2147483648
        %v792 = vxor.u32 %v673, 2147483648
        %v793 = vmul.f32 %v789, 1.442695
        %v794 = vpow.pop %v793
        %v795 = vmul.f32 %v790, 1.442695
        %v796 = vpow.pop %v795
        %v797 = vmul.f32 %v791, 1.442695
        %v798 = vpow.pop %v797
        %v799 = vmul.f32 %v792, 1.442695
        %v800 = vpow.pop %v799
        %v801 = vadd.f32 %v794, 1.0
        %v802 = vadd.f32 %v796, 1.0
        %v803 = vadd.f32 %v798, 1.0
        %v804 = vadd.f32 %v800, 1.0
        %v805 = vrcp.pop %v801
        %v806 = vmul.f32 1.0, %v805
        %v807 = vrcp.pop %v802
        %v808 = vmul.f32 1.0, %v807
        %v809 = vrcp.pop %v803
        %v810 = vmul.f32 1.0, %v809
        %v811 = vrcp.pop %v804
        %v812 = vmul.f32 1.0, %v811
        %v813 = vmul.f32 %v662, %v806
        %v814 = vmul.f32 %v665, %v808
        %v815 = vmul.f32 %v670, %v810
        %v816 = vmul.f32 %v673, %v812
        %v817 = vmul.f32 %v813, %v775
        %v818 = vmul.f32 %v814, %v778
        %v819 = vmul.f32 %v815, %v783
        %v820 = vmul.f32 %v816, %v786
        %v821 = vpack.c.bf16 %v818, %v817
        %v822 = vpack.c.bf16 %v820, %v819
        %v823 = vld [vmem:[#allocation2] sm:$0xff]
        %v824 = vld [vmem:[#allocation2 + $0x8] sm:$0xff]
        %v825 = vld [vmem:[#allocation2 + $0x10] sm:$0xff]
        %v826 = vld [vmem:[#allocation2 + $0x18] sm:$0xff]
        %v827 = vld [vmem:[%s496] sm:$0xf]
        %v828 = vld [vmem:[%s496 + $0x4] sm:$0xf]
        %v829 = vld [vmem:[%s496 + $0x8] sm:$0xf]
        %v830 = vld [vmem:[%s496 + $0xc] sm:$0xf]
        %v831 = vld [vmem:[%s496 + $0x10] sm:$0xf]
        %v832 = vld [vmem:[%s496 + $0x14] sm:$0xf]
        %v833 = vld [vmem:[%s496 + $0x18] sm:$0xf]
        %v834 = vld [vmem:[%s496 + $0x1c] sm:$0xf]
        %v835 = vld [vmem:[%s496 + $0x20] sm:$0xf]
        %v836 = vld [vmem:[%s496 + $0x24] sm:$0xf]
        %v837 = vld [vmem:[%s496 + $0x28] sm:$0xf]
        %v838 = vld [vmem:[%s496 + $0x2c] sm:$0xf]
        %v839 = vld [vmem:[%s496 + $0x30] sm:$0xf]
        %v840 = vld [vmem:[%s496 + $0x34] sm:$0xf]
        %v841 = vld [vmem:[%s496 + $0x38] sm:$0xf]
        %v842 = vld [vmem:[%s496 + $0x3c] sm:$0xf]
        %v859 = vunpack.c.l.b16 %v827
        %v860 = vunpack.c.l.b16 %v828
        %v861 = vunpack.c.l.b16 %v829
        %v862 = vunpack.c.l.b16 %v830
        %v863 = vunpack.c.l.b16 %v831
        %v864 = vunpack.c.l.b16 %v832
        %v865 = vunpack.c.l.b16 %v833
        %v866 = vunpack.c.l.b16 %v834
        %v867 = vunpack.c.l.b16 %v835
        %v868 = vunpack.c.l.b16 %v836
        %v869 = vunpack.c.l.b16 %v837
        %v870 = vunpack.c.l.b16 %v838
        %v871 = vunpack.c.l.b16 %v839
        %v872 = vunpack.c.l.b16 %v840
        %v873 = vunpack.c.l.b16 %v841
        %v874 = vunpack.c.l.b16 %v842
        %v875 = vpack.c.b16 %v860, %v859
        %v876 = vpack.c.b16 %v862, %v861
        %v877 = vpack.c.b16 %v864, %v863
        %v878 = vpack.c.b16 %v866, %v865
        %v879 = vpack.c.b16 %v868, %v867
        %v880 = vpack.c.b16 %v870, %v869
        %v881 = vpack.c.b16 %v872, %v871
        %v882 = vpack.c.b16 %v874, %v873
        %891 = vmatprep.subr.bf16.mxu0 0
        %892 = vmatpush1.bf16.msra.mxu0 %v875
        %893 = vmatprep.subr.bf16.mxu0 0
        %894 = vmatpush1.bf16.msra.mxu0 %v876
        %895 = vmatprep.subr.bf16.mxu0 0
        %896 = vmatpush1.bf16.msra.mxu0 %v877
        %897 = vmatprep.subr.bf16.mxu0 0
        %898 = vmatpush1.bf16.msra.mxu0 %v878
        %899 = vmatprep.subr.bf16.mxu0 0
        %900 = vmatpush1.bf16.msra.mxu0 %v879
        %901 = vmatprep.subr.bf16.mxu0 0
        %902 = vmatpush1.bf16.msra.mxu0 %v880
        %903 = vmatprep.subr.bf16.mxu0 0
        %904 = vmatpush1.bf16.msra.mxu0 %v881
        %905 = vmatprep.subr.bf16.mxu0 0
        %906 = vmatpush1.bf16.msra.mxu0 %v882
        %907 = vmatprep.subr.bf16.mxu0 0
        %908 = vmatpush1.bf16.msra.mxu0 0
        %909 = vmatprep.subr.bf16.mxu0 0
        %910 = vmatpush1.bf16.msra.mxu0 0
        %911 = vmatprep.subr.bf16.mxu0 0
        %912 = vmatpush1.bf16.msra.mxu0 0
        %913 = vmatprep.subr.bf16.mxu0 0
        %914 = vmatpush1.bf16.msra.mxu0 0
        %915 = vmatprep.subr.bf16.mxu0 0
        %916 = vmatpush1.bf16.msra.mxu0 0
        %917 = vmatprep.subr.bf16.mxu0 0
        %918 = vmatpush1.bf16.msra.mxu0 0
        %919 = vmatprep.subr.bf16.mxu0 0
        %920 = vmatpush1.bf16.msra.mxu0 0
        %921 = vmatprep.subr.bf16.mxu0 0
        %922 = vmatpush1.bf16.msra.mxu0 0
        %923 = vmatprep.mubr.bf16.mxu0 0
        %924 = vmatmul.mubr.bf16.gmra.mrb[0].mxu0 %v821
        %v925 = vpop.f32.mrb[0].mxu0
        %v926 = vadd.f32 0.0, %v925
        %v927 = vpop.f32.mrb[0].mxu0
        %v928 = vpop.f32.mrb[0].mxu0
        %v929 = vadd.f32 0.0, %v928
        %v930 = vpop.f32.mrb[0].mxu0
        %931 = vmatprep.mubr.bf16.mxu0 0
        %932 = vmatmul.mubr.bf16.gmra.mrb[0].mxu0 %v822
        %v933 = vpop.f32.mrb[0].mxu0
        %v934 = vadd.f32 0.0, %v933
        %v935 = vpop.f32.mrb[0].mxu0
        %v936 = vpop.f32.mrb[0].mxu0
        %v937 = vadd.f32 0.0, %v936
        %v938 = vpop.f32.mrb[0].mxu0
        %939 = vdwg.mxu0
        %v940 = vadd.f32 %v823, %v926
        %v941 = vadd.f32 %v824, %v929
        %v942 = vadd.f32 %v825, %v934
        %v943 = vadd.f32 %v826, %v937
        %944 = vst [vmem:[#allocation2] sm:$0xff] %v940
        %945 = vst [vmem:[#allocation2 + $0x8] sm:$0xff] %v941
        %946 = vst [vmem:[#allocation2 + $0x10] sm:$0xff] %v942
        %947 = vst [vmem:[#allocation2 + $0x18] sm:$0xff] %v943
        %p948 = scmp.eq.s32.totalorder %s21, 1
        // Predicated region
        $region127: #{internlm2_forward.12} parent=113 // pred_check
          %p949 = pneg %p948
        $region128: #{internlm2_forward.12} parent=113 // pred_check_branch
          %951 = sbr.rel (%p949) target = $region130
        $region129: #{internlm2_forward.12} parent=113 // pred_region
          %v952 = vld [vmem:[#allocation2] sm:$0xff]
          %v953 = vld [vmem:[#allocation2 + $0x8] sm:$0xff]
          %v954 = vld [vmem:[#allocation2 + $0x10] sm:$0xff]
          %v955 = vld [vmem:[#allocation2 + $0x18] sm:$0xff]
          %v956 = vadd.f32 %v952, %v517
          %v957 = vadd.f32 %v953, %v518
          %v958 = vadd.f32 %v954, %v519
          %v959 = vadd.f32 %v955, %v520
          %v960 = vpack.c.bf16 %v957, %v956
          %v961 = vpack.c.bf16 %v959, %v958
          %v964 = vunpack.c.l.b16 %v960
          %v965 = vunpack.c.h.b16 %v960
          %v966 = vunpack.c.l.b16 %v961
          %v967 = vunpack.c.h.b16 %v961
          %v968 = vpack.c.b16 %v964, %v964
          %v969 = vpack.c.b16 %v965, %v965
          %v970 = vpack.c.b16 %v966, %v966
          %v971 = vpack.c.b16 %v967, %v967
          %976 = vst [vmem:[%s502] sm:$0xf] %v968
          %977 = vst [vmem:[%s502 + $0x4] sm:$0xf] %v969
          %978 = vst [vmem:[%s502 + $0x8] sm:$0xf] %v970
          %979 = vst [vmem:[%s502 + $0xc] sm:$0xf] %v971
        $region130: #{internlm2_forward.12} parent=113 // pred_fallthru
          _
        %s980 = smul.u32 4, %s20
        %p981 = scmp.lt.s32.totalorder %s980, 3
        %s982 = scalar_select %p981, %s980, 3
        %s983 = smul.addr %s982, 4
        %s984 = scalar_lea.vmem %s5, %s983
        // Predicated region
        $region131: #{internlm2_forward.12} parent=113 // pred_check
          %p985 = pneg %p171
        $region132: #{internlm2_forward.12} parent=113 // pred_check_branch
          %987 = sbr.rel (%p985) target = $region134
        $region133: #{internlm2_forward.12} parent=113 // pred_region
          %s988 = smul.u32 4, %s20
        $region134: #{internlm2_forward.12} parent=113 // pred_fallthru
          _
        // Predicated region
        $region135: #{internlm2_forward.12} parent=113 // pred_check
          %p989 = pneg %p171
        $region136: #{internlm2_forward.12} parent=113 // pred_check_branch
          %991 = sbr.rel (%p989) target = $region138
        $region137: #{internlm2_forward.12} parent=113 // pred_region
          %s992 = smul.u32 4, %s20
          %p993 = scmp.lt.s32.totalorder %s992, 3
          %s994 = scalar_select %p993, %s992, 3
          %s995 = smul.addr %s994, 4
          %s996 = scalar_lea.vmem %s5, %s995
        $region138: #{internlm2_forward.12} parent=113 // pred_fallthru
          _
      $region114: #{internlm2_forward.12} parent=5 // pred_fallthru
        _
      %p997 = scmp.le.s32.totalorder 2, %s11
      // Predicated region
      $region139: #{internlm2_forward.12} parent=5 // pred_check
        %p998 = pneg %p997
      $region140: #{internlm2_forward.12} parent=5 // pred_check_branch
        %1000 = sbr.rel (%p998) target = $region142
      $region141: #{internlm2_forward.12} parent=5 // pred_region
        %s1001 = ssub.s32 %s11, 2
      $region142: #{internlm2_forward.12} parent=5 // pred_fallthru
        _
    $region6: #{internlm2_forward.12} parent=1 // loop_footer
      %s15 = sadd.s32 1, %s11
    $region7: #{internlm2_forward.12} parent=1 // loop_footer_branch
      %10 = sbr.rel target = $region3
    $region8: #{internlm2_forward.12} parent=1 // loop_exit
      _

// kernel: internlm2_forward.17
$region0: #{internlm2_forward.17}
  #allocation0 [shape = 'u32[]', space=smem, size = 0x4, offset = 0x4, fixed_abs, tag = 'smem constant byte address 0x4 - core index']
  #allocation1 [shape = 'u32[144,128]{1,0:T(1,128)}', space=vmem, size = 0x12000, scoped, tag = 'internal scratch']
  %s0 = inlined_call_operand.vmem [shape: bf16[32,128], index: 0, kind: input, shape index: {}]
  %s1 = inlined_call_operand.vmem [shape: f32[1,128], index: 1, kind: input, shape index: {}]
  %s2 = inlined_call_operand.hbm [shape: bf16[32,128], index: 2, kind: output, shape index: {}]
  %s3 = sld [smem:[#allocation0]]
  $region18: #{internlm2_forward.17} parent=0
    _
  %s5 = ssub.s32 1, %s3
  %s6 = scalar_select 0, %s5, %s3
  $region1: #{internlm2_forward.17} parent=0
    #allocation2 [shape = 'u8[8192]{0}', space=vmem, size = 0x2000, scoped, tag = 'output window, operand 0, single buffered']
    #allocation3 [shape = 's32[1]{0}', space=sflag, size = 0x4, scoped, tag = 'scoped memory for internlm2_forward.17']
    %7 = vsyncpa [#allocation3], 0
    // Predicated region
    $region2: #{internlm2_forward.17} parent=1 // pred_check
      _
    $region3: #{internlm2_forward.17} parent=1 // pred_check_branch
      %9 = sbr.rel (0) target = $region5
    $region4: #{internlm2_forward.17} parent=1 // pred_region
      _
    $region5: #{internlm2_forward.17} parent=1 // pred_fallthru
      _
    // Predicated region
    $region6: #{internlm2_forward.17} parent=1 // pred_check
      _
    $region7: #{internlm2_forward.17} parent=1 // pred_check_branch
      %11 = sbr.rel (0) target = $region9
    $region8: #{internlm2_forward.17} parent=1 // pred_region
      _
    $region9: #{internlm2_forward.17} parent=1 // pred_fallthru
      _
    %v12 = vld [vmem:[%s0] sm:$0xf]
    %v13 = vld [vmem:[%s0 + $0x4] sm:$0xf]
    %v14 = vld [vmem:[%s0 + $0x8] sm:$0xf]
    %v15 = vld [vmem:[%s0 + $0xc] sm:$0xf]
    %v16 = vunpack.c.l.bf16 %v12
    %v17 = vunpack.c.l.bf16 %v13
    %v18 = vunpack.c.l.bf16 %v14
    %v19 = vunpack.c.l.bf16 %v15
    %v20 = vmul.f32 %v16, %v16
    %v21 = vmul.f32 %v17, %v17
    %v22 = vmul.f32 %v18, %v18
    %v23 = vmul.f32 %v19, %v19
    %24 = vadd.xlane.f32.xlu0 %v20
    %v25 = vpop.xlane.xlu0 %24
    %26 = vadd.xlane.f32.xlu0 %v21
    %v27 = vpop.xlane.xlu0 %26
    %28 = vadd.xlane.f32.xlu0 %v22
    %v29 = vpop.xlane.xlu0 %28
    %30 = vadd.xlane.f32.xlu0 %v23
    %v31 = vpop.xlane.xlu0 %30
    %v32 = vrcp.pop 128.0
    %v33 = vmul.f32 %v25, %v32
    %v34 = vmul.f32 %v27, %v32
    %v35 = vmul.f32 %v29, %v32
    %v36 = vmul.f32 %v31, %v32
    %v37 = vadd.f32 %v33, 1e-06
    %v38 = vadd.f32 %v34, 1e-06
    %v39 = vadd.f32 %v35, 1e-06
    %v40 = vadd.f32 %v36, 1e-06
    %v41 = vrsqrt.pop %v37
    %v42 = vrsqrt.pop %v38
    %v43 = vrsqrt.pop %v39
    %v44 = vrsqrt.pop %v40
    %v45 = vmul.f32 %v16, %v41
    %v46 = vmul.f32 %v17, %v42
    %v47 = vmul.f32 %v18, %v43
    %v48 = vmul.f32 %v19, %v44
    %v49 = vld [vmem:[%s1] sm:$0x1]
    %v51 = vlaneseq
    %v52 = vshrl.u32 %v51, 7
    %v53 = vsub.s32 0, %v52
    %v54 = vrot.slane %v49, %v53
    %v56 = vmul.f32 %v45, %v54
    %v57 = vmul.f32 %v46, %v54
    %v58 = vmul.f32 %v47, %v54
    %v59 = vmul.f32 %v48, %v54
    %v60 = vpack.c.bf16 %v57, %v56
    %v61 = vpack.c.bf16 %v59, %v58
    %v64 = vunpack.c.l.b16 %v60
    %v65 = vunpack.c.h.b16 %v60
    %v66 = vunpack.c.l.b16 %v61
    %v67 = vunpack.c.h.b16 %v61
    %v68 = vpack.c.b16 %v64, %v64
    %v69 = vpack.c.b16 %v65, %v65
    %v70 = vpack.c.b16 %v66, %v66
    %v71 = vpack.c.b16 %v67, %v67
    %76 = vst [vmem:[#allocation2] sm:$0xf] %v68
    %77 = vst [vmem:[#allocation2 + $0x4] sm:$0xf] %v69
    %78 = vst [vmem:[#allocation2 + $0x8] sm:$0xf] %v70
    %79 = vst [vmem:[#allocation2 + $0xc] sm:$0xf] %v71
    // Predicated region
    $region10: #{internlm2_forward.17} parent=1 // pred_check
      _
    $region11: #{internlm2_forward.17} parent=1 // pred_check_branch
      %81 = sbr.rel (0) target = $region13
    $region12: #{internlm2_forward.17} parent=1 // pred_region
      %s83 = ssub.s32 256, 256
      %84 = vsyncadd [#allocation3], %s83
      %s85 = sshll.u32 [#allocation2], 4
      %s86 = int_to_ptr.vmem [resolvable:$true] %s85
      %91 = dma.vmem_to_hbm [thread:$0]  %s86, 256, %s2, [#allocation3], 64, 64, 4
    $region13: #{internlm2_forward.17} parent=1 // pred_fallthru
      _
    // Predicated region
    $region14: #{internlm2_forward.17} parent=1 // pred_check
      _
    $region15: #{internlm2_forward.17} parent=1 // pred_check_branch
      %93 = sbr.rel (0) target = $region17
    $region16: #{internlm2_forward.17} parent=1 // pred_region
      %94 = dma.done [#allocation3], 256
    $region17: #{internlm2_forward.17} parent=1 // pred_fallthru
      _
    %95 = vsyncpa [#allocation3], 1

</llo_original>
